<compile_context>
chip_gen: v7x
topology: tpu7x:2x2x1
jax: 0.10.0
libtpu: 0.0.40
codegen_flags: <defaults>
</compile_context>

<pallas_src>
import jax
import jax.numpy as jnp
from jax import random
from jax.experimental import pallas as pl
from jax.experimental.pallas import tpu as pltpu

# Small, module-consistent shapes.
INPUT_DIM = 128
D_MODEL = 256          # input_dim != d_model -> feature_projection is a Linear
NHEAD = 8              # head split/concat is mathematically a no-op at seq_len==1
NUM_LAYERS = 2
DIM_FF = 512
NUM_CLASSES = 16
D_HALF = D_MODEL // 2
BATCH = 16
TILE_B = 8             # batch tile per grid step
OUT_PAD = 128          # lane-dense padded output width (>= NUM_CLASSES)
VEC_W = max(DIM_FF, D_MODEL)   # width of the packed bias/LN slab
LN_EPS = 1e-5          # PyTorch nn.LayerNorm default


def _layernorm(x, gamma, beta):
    # One-pass variance: E[x^2] - mu^2 (halves the cross-lane reductions).
    mu = jnp.mean(x, axis=-1, keepdims=True)
    ms = jnp.mean(x * x, axis=-1, keepdims=True)
    var = ms - mu * mu
    return (x - mu) * jax.lax.rsqrt(var + LN_EPS) * gamma + beta


def transformer_kernel(x_ref, wa_ref, wb_ref, wp_ref, wc2_ref, vec_ref, out_ref):
    f32, bf16 = jnp.float32, jnp.bfloat16

    def vrow(r, n):
        # One packed f32 bias / LN-param row, shape (1, n); broadcasts over batch.
        return vec_ref[r:r + 1, 0:n]

    x = x_ref[...]                                                   # (TB, 128) f32

    # feature_projection (Linear, since input_dim != d_model)
    h = jnp.dot(x.astype(bf16), wp_ref[...],
                preferred_element_type=f32) + vrow(0, D_MODEL)       # (TB, D) f32

    for l in range(NUM_LAYERS):
        base = 1 + 7 * l
        aoff = l * (D_MODEL + DIM_FF)
        w_attn = wa_ref[:, aoff:aoff + D_MODEL]                      # (D, D)   bf16
        w1 = wa_ref[:, aoff + D_MODEL:aoff + D_MODEL + DIM_FF]       # (D, FF)  bf16
        w2 = wb_ref[:, l * D_MODEL:(l + 1) * D_MODEL]                # (FF, D)  bf16

        # --- self-attention block, folded (seq_len==1 => softmax weights == 1) ---
        attn = jnp.dot(h.astype(bf16), w_attn,
                       preferred_element_type=f32) + vrow(base, D_MODEL)
        h = _layernorm(h + attn, vrow(base + 3, D_MODEL), vrow(base + 4, D_MODEL))

        # --- feed-forward block ---
        ff = jnp.maximum(jnp.dot(h.astype(bf16), w1,
                                 preferred_element_type=f32) + vrow(base + 1, DIM_FF),
                         0.0)
        ff = jnp.dot(ff.astype(bf16), w2,
                     preferred_element_type=f32) + vrow(base + 2, D_MODEL)
        h = _layernorm(h + ff, vrow(base + 5, D_MODEL), vrow(base + 6, D_MODEL))

    # x.mean(dim=1) over length-1 sequence is identity.
    # classifier: Linear -> ReLU -> Dropout(identity) -> Linear (padded to 128 lanes)
    c1_off = NUM_LAYERS * (D_MODEL + DIM_FF)
    wc1 = wa_ref[:, c1_off:c1_off + D_HALF]                          # (D, D/2) bf16
    c = jnp.maximum(jnp.dot(h.astype(bf16), wc1,
                            preferred_element_type=f32) + vrow(1 + 7 * NUM_LAYERS, D_HALF),
                    0.0)
    out_ref[...] = (jnp.dot(c.astype(bf16), wc2_ref[...],
                            preferred_element_type=f32)
                    + vrow(2 + 7 * NUM_LAYERS, OUT_PAD))             # (TB, 128)


def pretrained_feature_transformer(x, packed):
    wa, wb, wp, wc2p, vec = packed
    b = x.shape[0]
    assert b % TILE_B == 0, (b, TILE_B)

    def full(a):
        return pl.BlockSpec(a.shape, lambda i: (0, 0))  # weights resident across grid

    out = pl.pallas_call(
        transformer_kernel,
        out_shape=jax.ShapeDtypeStruct((b, OUT_PAD), jnp.float32),
        grid=(b // TILE_B,),
        in_specs=[pl.BlockSpec((TILE_B, INPUT_DIM), lambda i: (i, 0)),
                  full(wa), full(wb), full(wp), full(wc2p), full(vec)],
        out_specs=pl.BlockSpec((TILE_B, OUT_PAD), lambda i: (i, 0)),
        compiler_params=pltpu.CompilerParams(
            dimension_semantics=("parallel",)),   # v7x: shard batch tiles over both TCs
    )(x, wa, wb, wp, wc2p, vec)
    return out[:, :NUM_CLASSES]


def init_params(key):
    """Deterministic synthetic parameters (shapes follow the PyTorch __init__)."""
    ks = random.split(key, 16)

    def w(k, shape, scale=0.02):
        return (scale * random.normal(k, shape)).astype(jnp.float32)

    wp = w(ks[0], (INPUT_DIM, D_MODEL))            # feature_projection
    bp = w(ks[1], (D_MODEL,))
    # Per-layer MHA params. wv is the V slice (rows [2d:3d]) of in_proj_weight,
    # transposed; Q/K slices are mathematically unused at seq_len == 1.
    wv = w(ks[2], (NUM_LAYERS, D_MODEL, D_MODEL))
    bv = w(ks[3], (NUM_LAYERS, D_MODEL))
    wo = w(ks[4], (NUM_LAYERS, D_MODEL, D_MODEL))  # out_proj
    bo = w(ks[5], (NUM_LAYERS, D_MODEL))
    w1 = w(ks[6], (NUM_LAYERS, D_MODEL, DIM_FF))   # feed-forward
    b1 = w(ks[7], (NUM_LAYERS, DIM_FF))
    w2 = w(ks[8], (NUM_LAYERS, DIM_FF, D_MODEL))
    b2 = w(ks[9], (NUM_LAYERS, D_MODEL))
    g1 = jnp.ones((NUM_LAYERS, D_MODEL), jnp.float32)   # LayerNorm defaults
    be1 = jnp.zeros((NUM_LAYERS, D_MODEL), jnp.float32)
    g2 = jnp.ones((NUM_LAYERS, D_MODEL), jnp.float32)
    be2 = jnp.zeros((NUM_LAYERS, D_MODEL), jnp.float32)
    wc1 = w(ks[10], (D_MODEL, D_HALF))             # classifier
    bc1 = w(ks[11], (D_HALF,))
    wc2 = w(ks[12], (D_HALF, NUM_CLASSES))
    bc2 = w(ks[13], (NUM_CLASSES,))
    return (wp, bp, wv, bv, wo, bo, w1, b1, w2, b2,
            g1, be1, g2, be2, wc1, bc1, wc2, bc2)


def pack_params(raw):
    """Fold the attention GEMMs and pack 19 tensors into 5 DMA-friendly slabs."""
    (wp, bp, wv, bv, wo, bo, w1, b1, w2, b2,
     g1, be1, g2, be2, wc1, bc1, wc2, bc2) = raw
    bf16 = jnp.bfloat16

    # seq_len == 1: attention block == h @ (Wv @ Wo) + (bv @ Wo + bo)
    w_attn = jnp.einsum('lij,ljk->lik', wv, wo)                # (L, D, D) f32
    b_attn = jnp.einsum('lj,ljk->lk', bv, wo) + bo             # (L, D)    f32

    # Slab A: all 256-row weights, concatenated along lanes (128-aligned offsets).
    cols = []
    for l in range(NUM_LAYERS):
        cols += [w_attn[l], w1[l]]
    cols.append(wc1)
    wa = jnp.concatenate(cols, axis=1).astype(bf16)            # (256, L*768 + 128)

    # Slab B: all 512-row weights.
    wb = jnp.concatenate([w2[l] for l in range(NUM_LAYERS)], axis=1).astype(bf16)

    # Feature projection and lane-padded classifier head.
    wp_b = wp.astype(bf16)                                     # (128, 256)
    wc2p = (jnp.zeros((D_HALF, OUT_PAD), jnp.float32)
            .at[:, :NUM_CLASSES].set(wc2)).astype(bf16)        # (128, 128)

    # Slab of all biases / LayerNorm params, one row each (f32, lane-padded).
    def row(v):
        return jnp.zeros((VEC_W,), jnp.float32).at[:v.shape[0]].set(v)

    rows = [row(bp)]
    for l in range(NUM_LAYERS):
        rows += [row(b_attn[l]), row(b1[l]), row(b2[l]),
                 row(g1[l]), row(be1[l]), row(g2[l]), row(be2[l])]
    rows.append(row(bc1))
    rows.append(row(jnp.zeros((OUT_PAD,), jnp.float32).at[:NUM_CLASSES].set(bc2)))
    rows += [jnp.zeros((VEC_W,), jnp.float32)] * ((-len(rows)) % 8)
    vec = jnp.stack(rows)                                      # (24, 512) f32
    return wa, wb, wp_b, wc2p, vec


def reference_forward_f32(x, raw):
    """Pure-JAX f32 reference of the PyTorch forward (eval mode, seq_len == 1)."""
    (wp, bp, wv, bv, wo, bo, w1, b1, w2, b2,
     g1, be1, g2, be2, wc1, bc1, wc2, bc2) = raw
    h = x @ wp + bp
    for l in range(NUM_LAYERS):
        attn = (h @ wv[l] + bv[l]) @ wo[l] + bo[l]
        h = _layernorm(h + attn, g1[l], be1[l])
        ff = jnp.maximum(h @ w1[l] + b1[l], 0.0) @ w2[l] + b2[l]
        h = _layernorm(h + ff, g2[l], be2[l])
    c = jnp.maximum(h @ wc1 + bc1, 0.0)
    return c @ wc2 + bc2


def reference_forward_bf16(x, raw):
    """Pure-JAX reference mirroring the kernel's numerics (folded attn, bf16 dots)."""
    (wp, bp, wv, bv, wo, bo, w1, b1, w2, b2,
     g1, be1, g2, be2, wc1, bc1, wc2, bc2) = raw
    bf16, f32 = jnp.bfloat16, jnp.float32
    w_attn = jnp.einsum('lij,ljk->lik', wv, wo)
    b_attn = jnp.einsum('lj,ljk->lk', bv, wo) + bo

    def dot(a, b):
        return jnp.dot(a.astype(bf16), b.astype(bf16), preferred_element_type=f32)

    h = dot(x, wp) + bp
    for l in range(NUM_LAYERS):
        attn = dot(h, w_attn[l]) + b_attn[l]
        h = _layernorm(h + attn, g1[l], be1[l])
        ff = jnp.maximum(dot(h, w1[l]) + b1[l], 0.0)
        ff = dot(ff, w2[l]) + b2[l]
        h = _layernorm(h + ff, g2[l], be2[l])
    c = jnp.maximum(dot(h, wc1) + bc1, 0.0)
    return dot(c, wc2) + bc2


if __name__ == "__main__":
    x = random.normal(random.PRNGKey(0), (BATCH, INPUT_DIM), dtype=jnp.float32)
    raw = init_params(random.PRNGKey(42))
    packed = pack_params(raw)

    out = pretrained_feature_transformer(x, packed)
    out = jax.block_until_ready(out)
    assert out.shape == (BATCH, NUM_CLASSES), out.shape

    # Exact-numerics check (same bf16/f32-accum math as the kernel).
    ref_match = reference_forward_bf16(x, raw)
    assert jnp.allclose(out, ref_match, atol=1e-3, rtol=1e-3), \
        float(jnp.max(jnp.abs(out - ref_match)))

    # Module-fidelity check against the full-f32 PyTorch-equivalent forward
    # (bf16 matmul operands introduce small, bounded rounding differences).
    ref_f32 = reference_forward_f32(x, raw)
    assert jnp.allclose(out, ref_f32, atol=2e-2, rtol=2e-2), \
        float(jnp.max(jnp.abs(out - ref_f32)))

    print("KERNEL_OK")
</pallas_src>

<mosaic_0001>
module attributes {stable_mosaic.version = 11 : i64} {
  func.func @transformer_kernel(%arg0: i32, %arg1: memref<8x128xf32, #tpu.memory_space<vmem>>, %arg2: memref<256x1664xbf16, #tpu.memory_space<vmem>>, %arg3: memref<512x512xbf16, #tpu.memory_space<vmem>>, %arg4: memref<128x256xbf16, #tpu.memory_space<vmem>>, %arg5: memref<128x128xbf16, #tpu.memory_space<vmem>>, %arg6: memref<24x512xf32, #tpu.memory_space<vmem>>, %arg7: memref<8x128xf32, #tpu.memory_space<vmem>>) attributes {dimension_semantics = [#tpu.dimension_semantics<parallel>], iteration_bounds = array<i64: 2>, scalar_prefetch = 0 : i64, scratch_operands = 0 : i64, tpu.core_type = #tpu.core_type<tc>, window_params = [{transform_indices = @transform_0, window_bounds = array<i64: 8, 128>}, {pipeline_mode = #tpu.pipeline_mode<synchronous>, transform_indices = @transform_1, window_bounds = array<i64: 256, 1664>}, {pipeline_mode = #tpu.pipeline_mode<synchronous>, transform_indices = @transform_2, window_bounds = array<i64: 512, 512>}, {pipeline_mode = #tpu.pipeline_mode<synchronous>, transform_indices = @transform_3, window_bounds = array<i64: 128, 256>}, {pipeline_mode = #tpu.pipeline_mode<synchronous>, transform_indices = @transform_4, window_bounds = array<i64: 128, 128>}, {pipeline_mode = #tpu.pipeline_mode<synchronous>, transform_indices = @transform_5, window_bounds = array<i64: 24, 512>}, {transform_indices = @transform_6, window_bounds = array<i64: 8, 128>}]} {
    %c0 = arith.constant 0 : index
    %c0_0 = arith.constant 0 : index
    %0 = vector.load %arg1[%c0, %c0_0] : memref<8x128xf32, #tpu.memory_space<vmem>>, vector<8x128xf32>
    %1 = arith.truncf %0 : vector<8x128xf32> to vector<8x128xbf16>
    %c0_1 = arith.constant 0 : index
    %c0_2 = arith.constant 0 : index
    %2 = vector.load %arg4[%c0_1, %c0_2] : memref<128x256xbf16, #tpu.memory_space<vmem>>, vector<128x256xbf16>
    %cst = arith.constant dense<0.000000e+00> : vector<8x256xf32>
    %3 = tpu.matmul %1, %2, %cst {dimension_numbers = #tpu.dot_dimension_numbers<[1], [0], [0], [1], [0, 0, 1, 1], [], []>} : vector<8x128xbf16>, vector<128x256xbf16>, vector<8x256xf32> -> vector<8x256xf32>
    %c0_3 = arith.constant 0 : index
    %c0_4 = arith.constant 0 : index
    %4 = vector.load %arg6[%c0_3, %c0_4] : memref<24x512xf32, #tpu.memory_space<vmem>>, vector<1x256xf32>
    %5 = vector.broadcast %4 : vector<1x256xf32> to vector<8x256xf32>
    %6 = arith.addf %3, %5 : vector<8x256xf32>
    %c0_5 = arith.constant 0 : index
    %c0_6 = arith.constant 0 : index
    %7 = vector.load %arg2[%c0_5, %c0_6] : memref<256x1664xbf16, #tpu.memory_space<vmem>>, vector<256x256xbf16>
    %c0_7 = arith.constant 0 : index
    %c256 = arith.constant 256 : index
    %8 = vector.load %arg2[%c0_7, %c256] : memref<256x1664xbf16, #tpu.memory_space<vmem>>, vector<256x512xbf16>
    %c0_8 = arith.constant 0 : index
    %c0_9 = arith.constant 0 : index
    %9 = vector.load %arg3[%c0_8, %c0_9] : memref<512x512xbf16, #tpu.memory_space<vmem>>, vector<512x256xbf16>
    %10 = arith.truncf %6 : vector<8x256xf32> to vector<8x256xbf16>
    %cst_10 = arith.constant dense<0.000000e+00> : vector<8x256xf32>
    %11 = tpu.matmul %10, %7, %cst_10 {dimension_numbers = #tpu.dot_dimension_numbers<[1], [0], [0], [1], [0, 0, 1, 1], [], []>} : vector<8x256xbf16>, vector<256x256xbf16>, vector<8x256xf32> -> vector<8x256xf32>
    %c1 = arith.constant 1 : index
    %c0_11 = arith.constant 0 : index
    %12 = vector.load %arg6[%c1, %c0_11] : memref<24x512xf32, #tpu.memory_space<vmem>>, vector<1x256xf32>
    %13 = vector.broadcast %12 : vector<1x256xf32> to vector<8x256xf32>
    %14 = arith.addf %11, %13 : vector<8x256xf32>
    %15 = arith.addf %6, %14 : vector<8x256xf32>
    %c4 = arith.constant 4 : index
    %c0_12 = arith.constant 0 : index
    %16 = vector.load %arg6[%c4, %c0_12] : memref<24x512xf32, #tpu.memory_space<vmem>>, vector<1x256xf32>
    %c5 = arith.constant 5 : index
    %c0_13 = arith.constant 0 : index
    %17 = vector.load %arg6[%c5, %c0_13] : memref<24x512xf32, #tpu.memory_space<vmem>>, vector<1x256xf32>
    %cst_14 = arith.constant dense<0.000000e+00> : vector<8xf32>
    %18 = vector.multi_reduction <add>, %15, %cst_14 [1] : vector<8x256xf32> to vector<8xf32>
    %19 = vector.shape_cast %18 : vector<8xf32> to vector<8x1xf32>
    %cst_15 = arith.constant 2.560000e+02 : f32
    %20 = vector.broadcast %cst_15 : f32 to vector<8x1xf32>
    %21 = arith.divf %19, %20 : vector<8x1xf32>
    %22 = arith.mulf %15, %15 : vector<8x256xf32>
    %cst_16 = arith.constant dense<0.000000e+00> : vector<8xf32>
    %23 = vector.multi_reduction <add>, %22, %cst_16 [1] : vector<8x256xf32> to vector<8xf32>
    %24 = vector.shape_cast %23 : vector<8xf32> to vector<8x1xf32>
    %cst_17 = arith.constant 2.560000e+02 : f32
    %25 = vector.broadcast %cst_17 : f32 to vector<8x1xf32>
    %26 = arith.divf %24, %25 : vector<8x1xf32>
    %27 = arith.mulf %21, %21 : vector<8x1xf32>
    %28 = arith.subf %26, %27 : vector<8x1xf32>
    %29 = vector.broadcast %21 : vector<8x1xf32> to vector<8x256xf32>
    %30 = arith.subf %15, %29 : vector<8x256xf32>
    %cst_18 = arith.constant 9.99999974E-6 : f32
    %31 = vector.broadcast %cst_18 : f32 to vector<8x1xf32>
    %32 = arith.addf %28, %31 : vector<8x1xf32>
    %33 = math.rsqrt %32 : vector<8x1xf32>
    %34 = vector.broadcast %33 : vector<8x1xf32> to vector<8x256xf32>
    %35 = arith.mulf %30, %34 : vector<8x256xf32>
    %36 = vector.broadcast %16 : vector<1x256xf32> to vector<8x256xf32>
    %37 = arith.mulf %35, %36 : vector<8x256xf32>
    %38 = vector.broadcast %17 : vector<1x256xf32> to vector<8x256xf32>
    %39 = arith.addf %37, %38 : vector<8x256xf32>
    %40 = arith.truncf %39 : vector<8x256xf32> to vector<8x256xbf16>
    %cst_19 = arith.constant dense<0.000000e+00> : vector<8x512xf32>
    %41 = tpu.matmul %40, %8, %cst_19 {dimension_numbers = #tpu.dot_dimension_numbers<[1], [0], [0], [1], [0, 0, 1, 1], [], []>} : vector<8x256xbf16>, vector<256x512xbf16>, vector<8x512xf32> -> vector<8x512xf32>
    %c2 = arith.constant 2 : index
    %c0_20 = arith.constant 0 : index
    %42 = vector.load %arg6[%c2, %c0_20] : memref<24x512xf32, #tpu.memory_space<vmem>>, vector<1x512xf32>
    %43 = vector.broadcast %42 : vector<1x512xf32> to vector<8x512xf32>
    %44 = arith.addf %41, %43 : vector<8x512xf32>
    %cst_21 = arith.constant 0.000000e+00 : f32
    %45 = vector.broadcast %cst_21 : f32 to vector<8x512xf32>
    %46 = arith.maximumf %44, %45 : vector<8x512xf32>
    %47 = arith.truncf %46 : vector<8x512xf32> to vector<8x512xbf16>
    %cst_22 = arith.constant dense<0.000000e+00> : vector<8x256xf32>
    %48 = tpu.matmul %47, %9, %cst_22 {dimension_numbers = #tpu.dot_dimension_numbers<[1], [0], [0], [1], [0, 0, 1, 1], [], []>} : vector<8x512xbf16>, vector<512x256xbf16>, vector<8x256xf32> -> vector<8x256xf32>
    %c3 = arith.constant 3 : index
    %c0_23 = arith.constant 0 : index
    %49 = vector.load %arg6[%c3, %c0_23] : memref<24x512xf32, #tpu.memory_space<vmem>>, vector<1x256xf32>
    %50 = vector.broadcast %49 : vector<1x256xf32> to vector<8x256xf32>
    %51 = arith.addf %48, %50 : vector<8x256xf32>
    %52 = arith.addf %39, %51 : vector<8x256xf32>
    %c6 = arith.constant 6 : index
    %c0_24 = arith.constant 0 : index
    %53 = vector.load %arg6[%c6, %c0_24] : memref<24x512xf32, #tpu.memory_space<vmem>>, vector<1x256xf32>
    %c7 = arith.constant 7 : index
    %c0_25 = arith.constant 0 : index
    %54 = vector.load %arg6[%c7, %c0_25] : memref<24x512xf32, #tpu.memory_space<vmem>>, vector<1x256xf32>
    %cst_26 = arith.constant dense<0.000000e+00> : vector<8xf32>
    %55 = vector.multi_reduction <add>, %52, %cst_26 [1] : vector<8x256xf32> to vector<8xf32>
    %56 = vector.shape_cast %55 : vector<8xf32> to vector<8x1xf32>
    %cst_27 = arith.constant 2.560000e+02 : f32
    %57 = vector.broadcast %cst_27 : f32 to vector<8x1xf32>
    %58 = arith.divf %56, %57 : vector<8x1xf32>
    %59 = arith.mulf %52, %52 : vector<8x256xf32>
    %cst_28 = arith.constant dense<0.000000e+00> : vector<8xf32>
    %60 = vector.multi_reduction <add>, %59, %cst_28 [1] : vector<8x256xf32> to vector<8xf32>
    %61 = vector.shape_cast %60 : vector<8xf32> to vector<8x1xf32>
    %cst_29 = arith.constant 2.560000e+02 : f32
    %62 = vector.broadcast %cst_29 : f32 to vector<8x1xf32>
    %63 = arith.divf %61, %62 : vector<8x1xf32>
    %64 = arith.mulf %58, %58 : vector<8x1xf32>
    %65 = arith.subf %63, %64 : vector<8x1xf32>
    %66 = vector.broadcast %58 : vector<8x1xf32> to vector<8x256xf32>
    %67 = arith.subf %52, %66 : vector<8x256xf32>
    %cst_30 = arith.constant 9.99999974E-6 : f32
    %68 = vector.broadcast %cst_30 : f32 to vector<8x1xf32>
    %69 = arith.addf %65, %68 : vector<8x1xf32>
    %70 = math.rsqrt %69 : vector<8x1xf32>
    %71 = vector.broadcast %70 : vector<8x1xf32> to vector<8x256xf32>
    %72 = arith.mulf %67, %71 : vector<8x256xf32>
    %73 = vector.broadcast %53 : vector<1x256xf32> to vector<8x256xf32>
    %74 = arith.mulf %72, %73 : vector<8x256xf32>
    %75 = vector.broadcast %54 : vector<1x256xf32> to vector<8x256xf32>
    %76 = arith.addf %74, %75 : vector<8x256xf32>
    %c0_31 = arith.constant 0 : index
    %c768 = arith.constant 768 : index
    %77 = vector.load %arg2[%c0_31, %c768] : memref<256x1664xbf16, #tpu.memory_space<vmem>>, vector<256x256xbf16>
    %c0_32 = arith.constant 0 : index
    %c1024 = arith.constant 1024 : index
    %78 = vector.load %arg2[%c0_32, %c1024] : memref<256x1664xbf16, #tpu.memory_space<vmem>>, vector<256x512xbf16>
    %c0_33 = arith.constant 0 : index
    %c256_34 = arith.constant 256 : index
    %79 = vector.load %arg3[%c0_33, %c256_34] : memref<512x512xbf16, #tpu.memory_space<vmem>>, vector<512x256xbf16>
    %80 = arith.truncf %76 : vector<8x256xf32> to vector<8x256xbf16>
    %cst_35 = arith.constant dense<0.000000e+00> : vector<8x256xf32>
    %81 = tpu.matmul %80, %77, %cst_35 {dimension_numbers = #tpu.dot_dimension_numbers<[1], [0], [0], [1], [0, 0, 1, 1], [], []>} : vector<8x256xbf16>, vector<256x256xbf16>, vector<8x256xf32> -> vector<8x256xf32>
    %c8 = arith.constant 8 : index
    %c0_36 = arith.constant 0 : index
    %82 = vector.load %arg6[%c8, %c0_36] : memref<24x512xf32, #tpu.memory_space<vmem>>, vector<1x256xf32>
    %83 = vector.broadcast %82 : vector<1x256xf32> to vector<8x256xf32>
    %84 = arith.addf %81, %83 : vector<8x256xf32>
    %85 = arith.addf %76, %84 : vector<8x256xf32>
    %c11 = arith.constant 11 : index
    %c0_37 = arith.constant 0 : index
    %86 = vector.load %arg6[%c11, %c0_37] : memref<24x512xf32, #tpu.memory_space<vmem>>, vector<1x256xf32>
    %c12 = arith.constant 12 : index
    %c0_38 = arith.constant 0 : index
    %87 = vector.load %arg6[%c12, %c0_38] : memref<24x512xf32, #tpu.memory_space<vmem>>, vector<1x256xf32>
    %cst_39 = arith.constant dense<0.000000e+00> : vector<8xf32>
    %88 = vector.multi_reduction <add>, %85, %cst_39 [1] : vector<8x256xf32> to vector<8xf32>
    %89 = vector.shape_cast %88 : vector<8xf32> to vector<8x1xf32>
    %cst_40 = arith.constant 2.560000e+02 : f32
    %90 = vector.broadcast %cst_40 : f32 to vector<8x1xf32>
    %91 = arith.divf %89, %90 : vector<8x1xf32>
    %92 = arith.mulf %85, %85 : vector<8x256xf32>
    %cst_41 = arith.constant dense<0.000000e+00> : vector<8xf32>
    %93 = vector.multi_reduction <add>, %92, %cst_41 [1] : vector<8x256xf32> to vector<8xf32>
    %94 = vector.shape_cast %93 : vector<8xf32> to vector<8x1xf32>
    %cst_42 = arith.constant 2.560000e+02 : f32
    %95 = vector.broadcast %cst_42 : f32 to vector<8x1xf32>
    %96 = arith.divf %94, %95 : vector<8x1xf32>
    %97 = arith.mulf %91, %91 : vector<8x1xf32>
    %98 = arith.subf %96, %97 : vector<8x1xf32>
    %99 = vector.broadcast %91 : vector<8x1xf32> to vector<8x256xf32>
    %100 = arith.subf %85, %99 : vector<8x256xf32>
    %cst_43 = arith.constant 9.99999974E-6 : f32
    %101 = vector.broadcast %cst_43 : f32 to vector<8x1xf32>
    %102 = arith.addf %98, %101 : vector<8x1xf32>
    %103 = math.rsqrt %102 : vector<8x1xf32>
    %104 = vector.broadcast %103 : vector<8x1xf32> to vector<8x256xf32>
    %105 = arith.mulf %100, %104 : vector<8x256xf32>
    %106 = vector.broadcast %86 : vector<1x256xf32> to vector<8x256xf32>
    %107 = arith.mulf %105, %106 : vector<8x256xf32>
    %108 = vector.broadcast %87 : vector<1x256xf32> to vector<8x256xf32>
    %109 = arith.addf %107, %108 : vector<8x256xf32>
    %110 = arith.truncf %109 : vector<8x256xf32> to vector<8x256xbf16>
    %cst_44 = arith.constant dense<0.000000e+00> : vector<8x512xf32>
    %111 = tpu.matmul %110, %78, %cst_44 {dimension_numbers = #tpu.dot_dimension_numbers<[1], [0], [0], [1], [0, 0, 1, 1], [], []>} : vector<8x256xbf16>, vector<256x512xbf16>, vector<8x512xf32> -> vector<8x512xf32>
    %c9 = arith.constant 9 : index
    %c0_45 = arith.constant 0 : index
    %112 = vector.load %arg6[%c9, %c0_45] : memref<24x512xf32, #tpu.memory_space<vmem>>, vector<1x512xf32>
    %113 = vector.broadcast %112 : vector<1x512xf32> to vector<8x512xf32>
    %114 = arith.addf %111, %113 : vector<8x512xf32>
    %cst_46 = arith.constant 0.000000e+00 : f32
    %115 = vector.broadcast %cst_46 : f32 to vector<8x512xf32>
    %116 = arith.maximumf %114, %115 : vector<8x512xf32>
    %117 = arith.truncf %116 : vector<8x512xf32> to vector<8x512xbf16>
    %cst_47 = arith.constant dense<0.000000e+00> : vector<8x256xf32>
    %118 = tpu.matmul %117, %79, %cst_47 {dimension_numbers = #tpu.dot_dimension_numbers<[1], [0], [0], [1], [0, 0, 1, 1], [], []>} : vector<8x512xbf16>, vector<512x256xbf16>, vector<8x256xf32> -> vector<8x256xf32>
    %c10 = arith.constant 10 : index
    %c0_48 = arith.constant 0 : index
    %119 = vector.load %arg6[%c10, %c0_48] : memref<24x512xf32, #tpu.memory_space<vmem>>, vector<1x256xf32>
    %120 = vector.broadcast %119 : vector<1x256xf32> to vector<8x256xf32>
    %121 = arith.addf %118, %120 : vector<8x256xf32>
    %122 = arith.addf %109, %121 : vector<8x256xf32>
    %c13 = arith.constant 13 : index
    %c0_49 = arith.constant 0 : index
    %123 = vector.load %arg6[%c13, %c0_49] : memref<24x512xf32, #tpu.memory_space<vmem>>, vector<1x256xf32>
    %c14 = arith.constant 14 : index
    %c0_50 = arith.constant 0 : index
    %124 = vector.load %arg6[%c14, %c0_50] : memref<24x512xf32, #tpu.memory_space<vmem>>, vector<1x256xf32>
    %cst_51 = arith.constant dense<0.000000e+00> : vector<8xf32>
    %125 = vector.multi_reduction <add>, %122, %cst_51 [1] : vector<8x256xf32> to vector<8xf32>
    %126 = vector.shape_cast %125 : vector<8xf32> to vector<8x1xf32>
    %cst_52 = arith.constant 2.560000e+02 : f32
    %127 = vector.broadcast %cst_52 : f32 to vector<8x1xf32>
    %128 = arith.divf %126, %127 : vector<8x1xf32>
    %129 = arith.mulf %122, %122 : vector<8x256xf32>
    %cst_53 = arith.constant dense<0.000000e+00> : vector<8xf32>
    %130 = vector.multi_reduction <add>, %129, %cst_53 [1] : vector<8x256xf32> to vector<8xf32>
    %131 = vector.shape_cast %130 : vector<8xf32> to vector<8x1xf32>
    %cst_54 = arith.constant 2.560000e+02 : f32
    %132 = vector.broadcast %cst_54 : f32 to vector<8x1xf32>
    %133 = arith.divf %131, %132 : vector<8x1xf32>
    %134 = arith.mulf %128, %128 : vector<8x1xf32>
    %135 = arith.subf %133, %134 : vector<8x1xf32>
    %136 = vector.broadcast %128 : vector<8x1xf32> to vector<8x256xf32>
    %137 = arith.subf %122, %136 : vector<8x256xf32>
    %cst_55 = arith.constant 9.99999974E-6 : f32
    %138 = vector.broadcast %cst_55 : f32 to vector<8x1xf32>
    %139 = arith.addf %135, %138 : vector<8x1xf32>
    %140 = math.rsqrt %139 : vector<8x1xf32>
    %141 = vector.broadcast %140 : vector<8x1xf32> to vector<8x256xf32>
    %142 = arith.mulf %137, %141 : vector<8x256xf32>
    %143 = vector.broadcast %123 : vector<1x256xf32> to vector<8x256xf32>
    %144 = arith.mulf %142, %143 : vector<8x256xf32>
    %145 = vector.broadcast %124 : vector<1x256xf32> to vector<8x256xf32>
    %146 = arith.addf %144, %145 : vector<8x256xf32>
    %c0_56 = arith.constant 0 : index
    %c1536 = arith.constant 1536 : index
    %147 = vector.load %arg2[%c0_56, %c1536] : memref<256x1664xbf16, #tpu.memory_space<vmem>>, vector<256x128xbf16>
    %148 = arith.truncf %146 : vector<8x256xf32> to vector<8x256xbf16>
    %cst_57 = arith.constant dense<0.000000e+00> : vector<8x128xf32>
    %149 = tpu.matmul %148, %147, %cst_57 {dimension_numbers = #tpu.dot_dimension_numbers<[1], [0], [0], [1], [0, 0, 1, 1], [], []>} : vector<8x256xbf16>, vector<256x128xbf16>, vector<8x128xf32> -> vector<8x128xf32>
    %c15 = arith.constant 15 : index
    %c0_58 = arith.constant 0 : index
    %150 = vector.load %arg6[%c15, %c0_58] : memref<24x512xf32, #tpu.memory_space<vmem>>, vector<1x128xf32>
    %151 = vector.broadcast %150 : vector<1x128xf32> to vector<8x128xf32>
    %152 = arith.addf %149, %151 : vector<8x128xf32>
    %cst_59 = arith.constant 0.000000e+00 : f32
    %153 = vector.broadcast %cst_59 : f32 to vector<8x128xf32>
    %154 = arith.maximumf %152, %153 : vector<8x128xf32>
    %155 = arith.truncf %154 : vector<8x128xf32> to vector<8x128xbf16>
    %c0_60 = arith.constant 0 : index
    %c0_61 = arith.constant 0 : index
    %156 = vector.load %arg5[%c0_60, %c0_61] : memref<128x128xbf16, #tpu.memory_space<vmem>>, vector<128x128xbf16>
    %cst_62 = arith.constant dense<0.000000e+00> : vector<8x128xf32>
    %157 = tpu.matmul %155, %156, %cst_62 {dimension_numbers = #tpu.dot_dimension_numbers<[1], [0], [0], [1], [0, 0, 1, 1], [], []>} : vector<8x128xbf16>, vector<128x128xbf16>, vector<8x128xf32> -> vector<8x128xf32>
    %c16 = arith.constant 16 : index
    %c0_63 = arith.constant 0 : index
    %158 = vector.load %arg6[%c16, %c0_63] : memref<24x512xf32, #tpu.memory_space<vmem>>, vector<1x128xf32>
    %159 = vector.broadcast %158 : vector<1x128xf32> to vector<8x128xf32>
    %160 = arith.addf %157, %159 : vector<8x128xf32>
    %c0_64 = arith.constant 0 : index
    %c0_65 = arith.constant 0 : index
    %161 = vector.load %arg7[%c0_64, %c0_65] : memref<8x128xf32, #tpu.memory_space<vmem>>, vector<8x128xf32>
    tpu.vector_store %arg7[%c0_64, %c0_65], %160 {strides = array<i32>} : memref<8x128xf32, #tpu.memory_space<vmem>>, vector<8x128xf32>,
    return
  }
  func.func @transform_0(%arg0: i32) -> (i32, i32) {
    %c0_i32 = arith.constant 0 : i32
    %c0_i32_0 = arith.constant 0 : i32
    return %arg0, %c0_i32 : i32, i32
  }
  func.func @transform_1(%arg0: i32) -> (i32, i32) {
    %c0_i32 = arith.constant 0 : i32
    %c0_i32_0 = arith.constant 0 : i32
    %c0_i32_1 = arith.constant 0 : i32
    return %c0_i32, %c0_i32_0 : i32, i32
  }
  func.func @transform_2(%arg0: i32) -> (i32, i32) {
    %c0_i32 = arith.constant 0 : i32
    %c0_i32_0 = arith.constant 0 : i32
    %c0_i32_1 = arith.constant 0 : i32
    return %c0_i32, %c0_i32_0 : i32, i32
  }
  func.func @transform_3(%arg0: i32) -> (i32, i32) {
    %c0_i32 = arith.constant 0 : i32
    %c0_i32_0 = arith.constant 0 : i32
    %c0_i32_1 = arith.constant 0 : i32
    return %c0_i32, %c0_i32_0 : i32, i32
  }
  func.func @transform_4(%arg0: i32) -> (i32, i32) {
    %c0_i32 = arith.constant 0 : i32
    %c0_i32_0 = arith.constant 0 : i32
    %c0_i32_1 = arith.constant 0 : i32
    return %c0_i32, %c0_i32_0 : i32, i32
  }
  func.func @transform_5(%arg0: i32) -> (i32, i32) {
    %c0_i32 = arith.constant 0 : i32
    %c0_i32_0 = arith.constant 0 : i32
    %c0_i32_1 = arith.constant 0 : i32
    return %c0_i32, %c0_i32_0 : i32, i32
  }
  func.func @transform_6(%arg0: i32) -> (i32, i32) {
    %c0_i32 = arith.constant 0 : i32
    %c0_i32_0 = arith.constant 0 : i32
    return %arg0, %c0_i32 : i32, i32
  }
}

</mosaic_0001>

<llo_original>
// kernel: tpu_custom_call.1
$region0: #{tpu_custom_call.1}
  #allocation0 [shape = 'u32[]', space=smem, size = 0x4, offset = 0x4, fixed_abs, tag = 'smem constant byte address 0x4 - core index']
  #allocation1 [shape = 'u32[144,128]{1,0:T(1,128)}', space=vmem, size = 0x12000, scoped, tag = 'internal scratch']
  %s0 = inlined_call_operand.hbm [shape: f32[16,128], index: 0, kind: input, shape index: {}]
  %s1 = inlined_call_operand.hbm [shape: bf16[256,1664], index: 1, kind: input, shape index: {}]
  %s2 = inlined_call_operand.hbm [shape: bf16[512,512], index: 2, kind: input, shape index: {}]
  %s3 = inlined_call_operand.hbm [shape: bf16[128,256], index: 3, kind: input, shape index: {}]
  %s4 = inlined_call_operand.hbm [shape: bf16[128,128], index: 4, kind: input, shape index: {}]
  %s5 = inlined_call_operand.hbm [shape: f32[24,512], index: 5, kind: input, shape index: {}]
  %s6 = inlined_call_operand.hbm [shape: f32[16,128], index: 6, kind: output, shape index: {}]
  %s7 = sld [smem:[#allocation0]]
  $region81: #{tpu_custom_call.1} parent=0
    _
  %s9 = ssub.s32 1, %s7
  %s10 = scalar_select 0, %s9, %s7
  $region1: #{tpu_custom_call.1} parent=0
    #allocation2 [shape = 'u8[8192]{0}', space=vmem, size = 0x2000, scoped, tag = 'input window, operand 0']
    #allocation3 [shape = 's32[2]{0}', space=sflag, size = 0x8, scoped, tag = 'scoped memory for tpu_custom_call.1']
    #allocation4 [shape = 's32[2]{0}', space=sflag, size = 0x8, scoped, tag = 'scoped memory for tpu_custom_call.1']
    #allocation5 [shape = 'u8[851968]{0}', space=vmem, size = 0xd0000, scoped, tag = 'input window, operand 1, single buffered']
    #allocation6 [shape = 's32[1]{0}', space=sflag, size = 0x4, scoped, tag = 'scoped memory for tpu_custom_call.1']
    #allocation7 [shape = 'u8[524288]{0}', space=vmem, size = 0x80000, scoped, tag = 'input window, operand 2, single buffered']
    #allocation8 [shape = 'u8[65536]{0}', space=vmem, size = 0x10000, scoped, tag = 'input window, operand 3, single buffered']
    #allocation9 [shape = 's32[1]{0}', space=sflag, size = 0x4, scoped, tag = 'scoped memory for tpu_custom_call.1']
    #allocation10 [shape = 'u8[32768]{0}', space=vmem, size = 0x8000, scoped, tag = 'input window, operand 4, single buffered']
    #allocation11 [shape = 'u8[49152]{0}', space=vmem, size = 0xc000, scoped, tag = 'input window, operand 5, single buffered']
    #allocation12 [shape = 's32[1]{0}', space=sflag, size = 0x4, scoped, tag = 'scoped memory for tpu_custom_call.1']
    #allocation13 [shape = 'u8[8192]{0}', space=vmem, size = 0x2000, scoped, tag = 'output window, operand 0']
    %11 = vsyncpa [#allocation3], 0
    %s12 = scalar_lea.sflag [#allocation3], 1
    %13 = vsyncpa %s12, 0
    %14 = vsyncpa [#allocation6], 0
    %15 = vsyncpa [#allocation9], 0
    %16 = vsyncpa [#allocation12], 0
    %17 = vsyncpa [#allocation4], 0
    %s18 = scalar_lea.sflag [#allocation4], 1
    %19 = vsyncpa %s18, 0
    loop: start=0, step=1, limit=4
    $region2: #{tpu_custom_call.1} parent=1 // loop_pre_header
      _
    $region3: #{tpu_custom_call.1} parent=1 // loop_header
      %s21 = sphi 0, %s25
      %p22 = scmp.ge.s32.totalorder %s21, 4
      %s31 = sphi 0, %s33
      %s34 = sphi 0, %s31
      %s35 = sphi 0, %s34
      %s51 = sphi 0, %s35
      %s55 = sphi 0, %s55
      %s57 = sphi 0, %s55
      %s58 = sphi 0, %s57
      %s72 = sphi 0, %s58
      %s76 = sphi 0, %s76
      %s78 = sphi 0, %s76
      %s79 = sphi 0, %s78
      %s93 = sphi 0, %s79
      %s97 = sphi 0, %s97
      %s99 = sphi 0, %s97
      %s100 = sphi 0, %s99
      %s114 = sphi 0, %s100
      %s118 = sphi 0, %s118
      %s120 = sphi 0, %s118
      %s121 = sphi 0, %s120
      %s135 = sphi 0, %s121
      %s139 = sphi 0, %s139
      %s141 = sphi 0, %s139
      %s142 = sphi 0, %s141
      %s156 = sphi 0, %s142
      %s162 = sphi 0, %s164
      %s165 = sphi 0, %s162
      %s166 = sphi 0, %s165
      %s182 = sphi 0, %s166
    $region4: #{tpu_custom_call.1} parent=1 // loop_header_branch
      %24 = sbr.rel (%p22) target = $region8
    $region5: #{tpu_custom_call.1} parent=1 // loop_body
      %s26 = ssub.s32 %s21, 1
      %s27 = ssub.s32 %s21, 2
      %s28 = sadd.s32 %s21, 1
      %s29 = ssub.s32 %s21, %s28
      %p30 = scmp.eq.s32.totalorder %s29, 0
      %s32 = sadd.s32 %s31, 1
      %s33 = scalar_select %p30, %s31, %s32
      %p36 = pneg %p30
      %p37 = scmp.eq.s32.totalorder %s21, 1
      %p38 = por %p36, %p37
      %p39 = scmp.ne.s32.totalorder %s31, %s34
      %p40 = scmp.eq.s32.totalorder %s21, 0
      %p41 = por %p39, %p40
      %p42 = scmp.ne.s32.totalorder %s31, %s34
      %p43 = scmp.eq.s32.totalorder %s26, 1
      %p44 = por %p42, %p43
      %p45 = scmp.ne.s32.totalorder %s34, %s35
      %p46 = scmp.eq.s32.totalorder %s26, 0
      %p47 = por %p45, %p46
      %p48 = scmp.ne.s32.totalorder %s34, %s35
      %p49 = scmp.eq.s32.totalorder %s27, 1
      %p50 = por %p48, %p49
      %p52 = scmp.ne.s32.totalorder %s35, %s51
      %p53 = scmp.eq.s32.totalorder %s27, 0
      %p54 = por %p52, %p53
      %s56 = sadd.s32 %s55, 1
      %p59 = scmp.eq.s32.totalorder %s21, 1
      %p60 = scmp.ne.s32.totalorder %s55, %s57
      %p61 = scmp.eq.s32.totalorder %s21, 0
      %p62 = por %p60, %p61
      %p63 = scmp.ne.s32.totalorder %s55, %s57
      %p64 = scmp.eq.s32.totalorder %s26, 1
      %p65 = por %p63, %p64
      %p66 = scmp.ne.s32.totalorder %s57, %s58
      %p67 = scmp.eq.s32.totalorder %s26, 0
      %p68 = por %p66, %p67
      %p69 = scmp.ne.s32.totalorder %s57, %s58
      %p70 = scmp.eq.s32.totalorder %s27, 1
      %p71 = por %p69, %p70
      %p73 = scmp.ne.s32.totalorder %s58, %s72
      %p74 = scmp.eq.s32.totalorder %s27, 0
      %p75 = por %p73, %p74
      %s77 = sadd.s32 %s76, 1
      %p80 = scmp.eq.s32.totalorder %s21, 1
      %p81 = scmp.ne.s32.totalorder %s76, %s78
      %p82 = scmp.eq.s32.totalorder %s21, 0
      %p83 = por %p81, %p82
      %p84 = scmp.ne.s32.totalorder %s76, %s78
      %p85 = scmp.eq.s32.totalorder %s26, 1
      %p86 = por %p84, %p85
      %p87 = scmp.ne.s32.totalorder %s78, %s79
      %p88 = scmp.eq.s32.totalorder %s26, 0
      %p89 = por %p87, %p88
      %p90 = scmp.ne.s32.totalorder %s78, %s79
      %p91 = scmp.eq.s32.totalorder %s27, 1
      %p92 = por %p90, %p91
      %p94 = scmp.ne.s32.totalorder %s79, %s93
      %p95 = scmp.eq.s32.totalorder %s27, 0
      %p96 = por %p94, %p95
      %s98 = sadd.s32 %s97, 1
      %p101 = scmp.eq.s32.totalorder %s21, 1
      %p102 = scmp.ne.s32.totalorder %s97, %s99
      %p103 = scmp.eq.s32.totalorder %s21, 0
      %p104 = por %p102, %p103
      %p105 = scmp.ne.s32.totalorder %s97, %s99
      %p106 = scmp.eq.s32.totalorder %s26, 1
      %p107 = por %p105, %p106
      %p108 = scmp.ne.s32.totalorder %s99, %s100
      %p109 = scmp.eq.s32.totalorder %s26, 0
      %p110 = por %p108, %p109
      %p111 = scmp.ne.s32.totalorder %s99, %s100
      %p112 = scmp.eq.s32.totalorder %s27, 1
      %p113 = por %p111, %p112
      %p115 = scmp.ne.s32.totalorder %s100, %s114
      %p116 = scmp.eq.s32.totalorder %s27, 0
      %p117 = por %p115, %p116
      %s119 = sadd.s32 %s118, 1
      %p122 = scmp.eq.s32.totalorder %s21, 1
      %p123 = scmp.ne.s32.totalorder %s118, %s120
      %p124 = scmp.eq.s32.totalorder %s21, 0
      %p125 = por %p123, %p124
      %p126 = scmp.ne.s32.totalorder %s118, %s120
      %p127 = scmp.eq.s32.totalorder %s26, 1
      %p128 = por %p126, %p127
      %p129 = scmp.ne.s32.totalorder %s120, %s121
      %p130 = scmp.eq.s32.totalorder %s26, 0
      %p131 = por %p129, %p130
      %p132 = scmp.ne.s32.totalorder %s120, %s121
      %p133 = scmp.eq.s32.totalorder %s27, 1
      %p134 = por %p132, %p133
      %p136 = scmp.ne.s32.totalorder %s121, %s135
      %p137 = scmp.eq.s32.totalorder %s27, 0
      %p138 = por %p136, %p137
      %s140 = sadd.s32 %s139, 1
      %p143 = scmp.eq.s32.totalorder %s21, 1
      %p144 = scmp.ne.s32.totalorder %s139, %s141
      %p145 = scmp.eq.s32.totalorder %s21, 0
      %p146 = por %p144, %p145
      %p147 = scmp.ne.s32.totalorder %s139, %s141
      %p148 = scmp.eq.s32.totalorder %s26, 1
      %p149 = por %p147, %p148
      %p150 = scmp.ne.s32.totalorder %s141, %s142
      %p151 = scmp.eq.s32.totalorder %s26, 0
      %p152 = por %p150, %p151
      %p153 = scmp.ne.s32.totalorder %s141, %s142
      %p154 = scmp.eq.s32.totalorder %s27, 1
      %p155 = por %p153, %p154
      %p157 = scmp.ne.s32.totalorder %s142, %s156
      %p158 = scmp.eq.s32.totalorder %s27, 0
      %p159 = por %p157, %p158
      %s160 = ssub.s32 %s21, %s28
      %p161 = scmp.eq.s32.totalorder %s160, 0
      %s163 = sadd.s32 %s162, 1
      %s164 = scalar_select %p161, %s162, %s163
      %p167 = pneg %p161
      %p168 = scmp.eq.s32.totalorder %s21, 1
      %p169 = por %p167, %p168
      %p170 = scmp.ne.s32.totalorder %s162, %s165
      %p171 = scmp.eq.s32.totalorder %s21, 0
      %p172 = por %p170, %p171
      %p173 = scmp.ne.s32.totalorder %s162, %s165
      %p174 = scmp.eq.s32.totalorder %s26, 1
      %p175 = por %p173, %p174
      %p176 = scmp.ne.s32.totalorder %s165, %s166
      %p177 = scmp.eq.s32.totalorder %s26, 0
      %p178 = por %p176, %p177
      %p179 = scmp.ne.s32.totalorder %s165, %s166
      %p180 = scmp.eq.s32.totalorder %s27, 1
      %p181 = por %p179, %p180
      %p183 = scmp.ne.s32.totalorder %s166, %s182
      %p184 = scmp.eq.s32.totalorder %s27, 0
      %p185 = por %p183, %p184
      %p186 = scmp.le.s32.totalorder 1, %s21
      %p187 = scmp.lt.s32.totalorder %s21, 3
      %p188 = pnand %p186, %p187
      %p189 = pneg %p188
      // Predicated region
      $region9: #{tpu_custom_call.1} parent=5 // pred_check
        _
      $region10: #{tpu_custom_call.1} parent=5 // pred_check_branch
        %191 = sbr.rel (%p188) target = $region12
      $region11: #{tpu_custom_call.1} parent=5 // pred_region
        %s192 = ssub.s32 %s21, 1
        // Predicated region
        $region13: #{tpu_custom_call.1} parent=11 // pred_check
          %p193 = pneg %p68
        $region14: #{tpu_custom_call.1} parent=11 // pred_check_branch
          %195 = sbr.rel (%p193) target = $region16
        $region15: #{tpu_custom_call.1} parent=11 // pred_region
          %s197 = ssub.s32 26624, 26624
          %198 = vsyncadd [#allocation6], %s197
          %s199 = sshll.u32 [#allocation5], 4
          %s200 = int_to_ptr.vmem [resolvable:$true] %s199
          %205 = dma.hbm_to_vmem [thread:$0]  %s1, 26624, %s200, [#allocation6], 832, 832, 52
        $region16: #{tpu_custom_call.1} parent=11 // pred_fallthru
          _
        // Predicated region
        $region17: #{tpu_custom_call.1} parent=11 // pred_check
          %p206 = pneg %p89
        $region18: #{tpu_custom_call.1} parent=11 // pred_check_branch
          %208 = sbr.rel (%p206) target = $region20
        $region19: #{tpu_custom_call.1} parent=11 // pred_region
          %s210 = ssub.s32 16384, 16384
          %211 = vsyncadd [#allocation6], %s210
          %s212 = sshll.u32 [#allocation7], 4
          %s213 = int_to_ptr.vmem [resolvable:$true] %s212
          %218 = dma.hbm_to_vmem [thread:$0]  %s2, 16384, %s213, [#allocation6], 256, 256, 16
        $region20: #{tpu_custom_call.1} parent=11 // pred_fallthru
          _
        // Predicated region
        $region21: #{tpu_custom_call.1} parent=11 // pred_check
          %p219 = pneg %p110
        $region22: #{tpu_custom_call.1} parent=11 // pred_check_branch
          %221 = sbr.rel (%p219) target = $region24
        $region23: #{tpu_custom_call.1} parent=11 // pred_region
          %s223 = ssub.s32 2048, 2048
          %224 = vsyncadd [#allocation9], %s223
          %s225 = sshll.u32 [#allocation8], 4
          %s226 = int_to_ptr.vmem [resolvable:$true] %s225
          %231 = dma.hbm_to_vmem [thread:$0]  %s3, 2048, %s226, [#allocation9], 128, 128, 8
        $region24: #{tpu_custom_call.1} parent=11 // pred_fallthru
          _
        // Predicated region
        $region25: #{tpu_custom_call.1} parent=11 // pred_check
          %p232 = pneg %p131
        $region26: #{tpu_custom_call.1} parent=11 // pred_check_branch
          %234 = sbr.rel (%p232) target = $region28
        $region27: #{tpu_custom_call.1} parent=11 // pred_region
          %s236 = ssub.s32 1024, 1024
          %237 = vsyncadd [#allocation9], %s236
          %s238 = sshll.u32 [#allocation10], 4
          %s239 = int_to_ptr.vmem [resolvable:$true] %s238
          %244 = dma.hbm_to_vmem [thread:$0]  %s4, 1024, %s239, [#allocation9], 64, 64, 4
        $region28: #{tpu_custom_call.1} parent=11 // pred_fallthru
          _
        // Predicated region
        $region29: #{tpu_custom_call.1} parent=11 // pred_check
          %p245 = pneg %p152
        $region30: #{tpu_custom_call.1} parent=11 // pred_check_branch
          %247 = sbr.rel (%p245) target = $region32
        $region31: #{tpu_custom_call.1} parent=11 // pred_region
          %s249 = ssub.s32 1536, 1536
          %250 = vsyncadd [#allocation12], %s249
          %s251 = sshll.u32 [#allocation11], 4
          %s252 = int_to_ptr.vmem [resolvable:$true] %s251
          %257 = dma.hbm_to_vmem [thread:$0]  %s5, 1536, %s252, [#allocation12], 512, 512, 32
        $region32: #{tpu_custom_call.1} parent=11 // pred_fallthru
          _
      $region12: #{tpu_custom_call.1} parent=5 // pred_fallthru
        _
      %p258 = scmp.lt.s32.totalorder %s21, 2
      // Predicated region
      $region33: #{tpu_custom_call.1} parent=5 // pred_check
        %p259 = pneg %p258
      $region34: #{tpu_custom_call.1} parent=5 // pred_check_branch
        %261 = sbr.rel (%p259) target = $region36
      $region35: #{tpu_custom_call.1} parent=5 // pred_region
        // Predicated region
        $region37: #{tpu_custom_call.1} parent=35 // pred_check
          %p262 = pneg %p41
        $region38: #{tpu_custom_call.1} parent=35 // pred_check_branch
          %264 = sbr.rel (%p262) target = $region40
        $region39: #{tpu_custom_call.1} parent=35 // pred_region
          %s265 = sand.u32 %s31, 1
          %s266 = scalar_lea.sflag [#allocation3], %s265
          %s267 = sand.u32 %s31, 1
          %s268 = smul.addr %s267, 8
          %s269 = scalar_lea.vmem [#allocation2], %s268
          %s271 = ssub.s32 128, 128
          %272 = vsyncadd %s266, %s271
          %s273 = smul.addr %s21, 128
          %s274 = scalar_lea.hbm %s0, %s273
          %s276 = sshll.u32 %s269, 4
          %s277 = int_to_ptr.vmem [resolvable:$true] %s276
          %279 = dma.hbm_to_vmem [thread:$0]  %s274, 128, %s277, %s266
        $region40: #{tpu_custom_call.1} parent=35 // pred_fallthru
          _
      $region36: #{tpu_custom_call.1} parent=5 // pred_fallthru
        _
      %p280 = scmp.le.s32.totalorder 1, %s21
      %p281 = scmp.lt.s32.totalorder %s21, 3
      %p282 = pnand %p280, %p281
      %p283 = pneg %p282
      // Predicated region
      $region41: #{tpu_custom_call.1} parent=5 // pred_check
        _
      $region42: #{tpu_custom_call.1} parent=5 // pred_check_branch
        %285 = sbr.rel (%p282) target = $region44
      $region43: #{tpu_custom_call.1} parent=5 // pred_region
        %s286 = ssub.s32 %s21, 1
        %s287 = sand.u32 %s34, 1
        %s288 = scalar_lea.sflag [#allocation3], %s287
        %s289 = sand.u32 %s34, 1
        %s290 = smul.addr %s289, 8
        %s291 = scalar_lea.vmem [#allocation2], %s290
        // Predicated region
        $region45: #{tpu_custom_call.1} parent=43 // pred_check
          %p292 = pneg %p47
        $region46: #{tpu_custom_call.1} parent=43 // pred_check_branch
          %294 = sbr.rel (%p292) target = $region48
        $region47: #{tpu_custom_call.1} parent=43 // pred_region
          %295 = dma.done %s288, 128
        $region48: #{tpu_custom_call.1} parent=43 // pred_fallthru
          _
        // Predicated region
        $region49: #{tpu_custom_call.1} parent=43 // pred_check
          %p296 = pneg %p68
        $region50: #{tpu_custom_call.1} parent=43 // pred_check_branch
          %298 = sbr.rel (%p296) target = $region52
        $region51: #{tpu_custom_call.1} parent=43 // pred_region
          %299 = dma.done [#allocation6], 26624
        $region52: #{tpu_custom_call.1} parent=43 // pred_fallthru
          _
        // Predicated region
        $region53: #{tpu_custom_call.1} parent=43 // pred_check
          %p300 = pneg %p89
        $region54: #{tpu_custom_call.1} parent=43 // pred_check_branch
          %302 = sbr.rel (%p300) target = $region56
        $region55: #{tpu_custom_call.1} parent=43 // pred_region
          %303 = dma.done [#allocation6], 16384
        $region56: #{tpu_custom_call.1} parent=43 // pred_fallthru
          _
        // Predicated region
        $region57: #{tpu_custom_call.1} parent=43 // pred_check
          %p304 = pneg %p110
        $region58: #{tpu_custom_call.1} parent=43 // pred_check_branch
          %306 = sbr.rel (%p304) target = $region60
        $region59: #{tpu_custom_call.1} parent=43 // pred_region
          %307 = dma.done [#allocation9], 2048
        $region60: #{tpu_custom_call.1} parent=43 // pred_fallthru
          _
        // Predicated region
        $region61: #{tpu_custom_call.1} parent=43 // pred_check
          %p308 = pneg %p131
        $region62: #{tpu_custom_call.1} parent=43 // pred_check_branch
          %310 = sbr.rel (%p308) target = $region64
        $region63: #{tpu_custom_call.1} parent=43 // pred_region
          %311 = dma.done [#allocation9], 1024
        $region64: #{tpu_custom_call.1} parent=43 // pred_fallthru
          _
        // Predicated region
        $region65: #{tpu_custom_call.1} parent=43 // pred_check
          %p312 = pneg %p152
        $region66: #{tpu_custom_call.1} parent=43 // pred_check_branch
          %314 = sbr.rel (%p312) target = $region68
        $region67: #{tpu_custom_call.1} parent=43 // pred_region
          %315 = dma.done [#allocation12], 1536
        $region68: #{tpu_custom_call.1} parent=43 // pred_fallthru
          _
        %s316 = sand.u32 %s34, 1
        %s317 = scalar_lea.sflag [#allocation3], %s316
        %s318 = sand.u32 %s34, 1
        %s319 = smul.addr %s318, 8
        %s320 = scalar_lea.vmem [#allocation2], %s319
        %p321 = pneg %p47
        %p322 = pneg %p44
        %p323 = pneg %p68
        %p324 = pneg %p65
        %p325 = pneg %p89
        %p326 = pneg %p86
        %p327 = pneg %p110
        %p328 = pneg %p107
        %p329 = pneg %p131
        %p330 = pneg %p128
        %p331 = pneg %p152
        %p332 = pneg %p149
        %p333 = pneg %p178
        %p334 = pneg %p175
        %s335 = sand.u32 %s165, 1
        %s336 = scalar_lea.sflag [#allocation4], %s335
        %s337 = sand.u32 %s165, 1
        %s338 = smul.addr %s337, 8
        %s339 = scalar_lea.vmem [#allocation13], %s338
        %v341 = vld [vmem:[%s291] sm:$0xff]
        %v342 = vpack.c.bf16 %v341, %v341
        %v343 = vld [vmem:[#allocation8] sm:$0xff]
        %v344 = vld [vmem:[#allocation8 + $0x8] sm:$0xff]
        %v345 = vld [vmem:[#allocation8 + $0x10] sm:$0xff]
        %v346 = vld [vmem:[#allocation8 + $0x18] sm:$0xff]
        %v347 = vld [vmem:[#allocation8 + $0x20] sm:$0xff]
        %v348 = vld [vmem:[#allocation8 + $0x28] sm:$0xff]
        %v349 = vld [vmem:[#allocation8 + $0x30] sm:$0xff]
        %v350 = vld [vmem:[#allocation8 + $0x38] sm:$0xff]
        %v351 = vld [vmem:[#allocation8 + $0x40] sm:$0xff]
        %v352 = vld [vmem:[#allocation8 + $0x48] sm:$0xff]
        %v353 = vld [vmem:[#allocation8 + $0x50] sm:$0xff]
        %v354 = vld [vmem:[#allocation8 + $0x58] sm:$0xff]
        %v355 = vld [vmem:[#allocation8 + $0x60] sm:$0xff]
        %v356 = vld [vmem:[#allocation8 + $0x68] sm:$0xff]
        %v357 = vld [vmem:[#allocation8 + $0x70] sm:$0xff]
        %v358 = vld [vmem:[#allocation8 + $0x78] sm:$0xff]
        %v359 = vld [vmem:[#allocation11] ss:$8 sm:$0x3]
        %v361 = vlaneseq
        %v362 = vshrl.u32 %v361, 7
        %v363 = vsub.s32 0, %v362
        %v364 = vrot.slane %v359, %v363
        %v365 = vlaneseq
        %v366 = vshrl.u32 %v365, 7
        %v367 = vsub.s32 1, %v366
        %v368 = vrot.slane %v359, %v367
        %v387 = vunpack.c.l.b16 %v343
        %v388 = vunpack.c.h.b16 %v343
        %v389 = vunpack.c.l.b16 %v344
        %v390 = vunpack.c.h.b16 %v344
        %v391 = vunpack.c.l.b16 %v345
        %v392 = vunpack.c.h.b16 %v345
        %v393 = vunpack.c.l.b16 %v346
        %v394 = vunpack.c.h.b16 %v346
        %v395 = vunpack.c.l.b16 %v347
        %v396 = vunpack.c.h.b16 %v347
        %v397 = vunpack.c.l.b16 %v348
        %v398 = vunpack.c.h.b16 %v348
        %v399 = vunpack.c.l.b16 %v349
        %v400 = vunpack.c.h.b16 %v349
        %v401 = vunpack.c.l.b16 %v350
        %v402 = vunpack.c.h.b16 %v350
        %v403 = vunpack.c.l.b16 %v351
        %v404 = vunpack.c.h.b16 %v351
        %v405 = vunpack.c.l.b16 %v352
        %v406 = vunpack.c.h.b16 %v352
        %v407 = vunpack.c.l.b16 %v353
        %v408 = vunpack.c.h.b16 %v353
        %v409 = vunpack.c.l.b16 %v354
        %v410 = vunpack.c.h.b16 %v354
        %v411 = vunpack.c.l.b16 %v355
        %v412 = vunpack.c.h.b16 %v355
        %v413 = vunpack.c.l.b16 %v356
        %v414 = vunpack.c.h.b16 %v356
        %v415 = vunpack.c.l.b16 %v357
        %v416 = vunpack.c.h.b16 %v357
        %v417 = vunpack.c.l.b16 %v358
        %v418 = vunpack.c.h.b16 %v358
        %v419 = vpack.c.b16 %v389, %v387
        %v420 = vpack.c.b16 %v390, %v388
        %v421 = vpack.c.b16 %v393, %v391
        %v422 = vpack.c.b16 %v394, %v392
        %v423 = vpack.c.b16 %v397, %v395
        %v424 = vpack.c.b16 %v398, %v396
        %v425 = vpack.c.b16 %v401, %v399
        %v426 = vpack.c.b16 %v402, %v400
        %v427 = vpack.c.b16 %v405, %v403
        %v428 = vpack.c.b16 %v406, %v404
        %v429 = vpack.c.b16 %v409, %v407
        %v430 = vpack.c.b16 %v410, %v408
        %v431 = vpack.c.b16 %v413, %v411
        %v432 = vpack.c.b16 %v414, %v412
        %v433 = vpack.c.b16 %v417, %v415
        %v434 = vpack.c.b16 %v418, %v416
        %451 = vmatprep.subr.bf16.mxu0 %v420
        %452 = vmatpush1.bf16.msra.mxu0 %v419
        %453 = vmatprep.subr.bf16.mxu0 %v422
        %454 = vmatpush1.bf16.msra.mxu0 %v421
        %455 = vmatprep.subr.bf16.mxu0 %v424
        %456 = vmatpush1.bf16.msra.mxu0 %v423
        %457 = vmatprep.subr.bf16.mxu0 %v426
        %458 = vmatpush1.bf16.msra.mxu0 %v425
        %459 = vmatprep.subr.bf16.mxu0 %v428
        %460 = vmatpush1.bf16.msra.mxu0 %v427
        %461 = vmatprep.subr.bf16.mxu0 %v430
        %462 = vmatpush1.bf16.msra.mxu0 %v429
        %463 = vmatprep.subr.bf16.mxu0 %v432
        %464 = vmatpush1.bf16.msra.mxu0 %v431
        %465 = vmatprep.subr.bf16.mxu0 %v434
        %466 = vmatpush1.bf16.msra.mxu0 %v433
        %467 = vmatprep.subr.bf16.mxu0 0
        %468 = vmatpush1.bf16.msra.mxu0 0
        %469 = vmatprep.subr.bf16.mxu0 0
        %470 = vmatpush1.bf16.msra.mxu0 0
        %471 = vmatprep.subr.bf16.mxu0 0
        %472 = vmatpush1.bf16.msra.mxu0 0
        %473 = vmatprep.subr.bf16.mxu0 0
        %474 = vmatpush1.bf16.msra.mxu0 0
        %475 = vmatprep.subr.bf16.mxu0 0
        %476 = vmatpush1.bf16.msra.mxu0 0
        %477 = vmatprep.subr.bf16.mxu0 0
        %478 = vmatpush1.bf16.msra.mxu0 0
        %479 = vmatprep.subr.bf16.mxu0 0
        %480 = vmatpush1.bf16.msra.mxu0 0
        %481 = vmatprep.subr.bf16.mxu0 0
        %482 = vmatpush1.bf16.msra.mxu0 0
        %483 = vmatprep.mubr.bf16.mxu0 0
        %484 = vmatmul.mubr.bf16.gmra.mrb[0].mxu0 %v342
        %v485 = vpop.f32.mrb[0].mxu0
        %v486 = vadd.f32 %v364, %v485
        %v487 = vpop.f32.mrb[0].mxu0
        %v488 = vadd.f32 %v368, %v487
        %v489 = vpop.f32.mrb[0].mxu0
        %v490 = vpop.f32.mrb[0].mxu0
        %491 = vdwg.mxu0
        %v492 = vld [vmem:[#allocation5] sm:$0xff]
        %v493 = vld [vmem:[#allocation5 + $0x34] sm:$0xff]
        %v494 = vld [vmem:[#allocation5 + $0x68] sm:$0xff]
        %v495 = vld [vmem:[#allocation5 + $0x9c] sm:$0xff]
        %v496 = vld [vmem:[#allocation5 + $0xd0] sm:$0xff]
        %v497 = vld [vmem:[#allocation5 + $0x104] sm:$0xff]
        %v498 = vld [vmem:[#allocation5 + $0x138] sm:$0xff]
        %v499 = vld [vmem:[#allocation5 + $0x16c] sm:$0xff]
        %v500 = vld [vmem:[#allocation5 + $0x1a0] sm:$0xff]
        %v501 = vld [vmem:[#allocation5 + $0x1d4] sm:$0xff]
        %v502 = vld [vmem:[#allocation5 + $0x208] sm:$0xff]
        %v503 = vld [vmem:[#allocation5 + $0x23c] sm:$0xff]
        %v504 = vld [vmem:[#allocation5 + $0x270] sm:$0xff]
        %v505 = vld [vmem:[#allocation5 + $0x2a4] sm:$0xff]
        %v506 = vld [vmem:[#allocation5 + $0x2d8] sm:$0xff]
        %v507 = vld [vmem:[#allocation5 + $0x30c] sm:$0xff]
        %v508 = vld [vmem:[#allocation5 + $0x340] sm:$0xff]
        %v509 = vld [vmem:[#allocation5 + $0x374] sm:$0xff]
        %v510 = vld [vmem:[#allocation5 + $0x3a8] sm:$0xff]
        %v511 = vld [vmem:[#allocation5 + $0x3dc] sm:$0xff]
        %v512 = vld [vmem:[#allocation5 + $0x410] sm:$0xff]
        %v513 = vld [vmem:[#allocation5 + $0x444] sm:$0xff]
        %v514 = vld [vmem:[#allocation5 + $0x478] sm:$0xff]
        %v515 = vld [vmem:[#allocation5 + $0x4ac] sm:$0xff]
        %v516 = vld [vmem:[#allocation5 + $0x4e0] sm:$0xff]
        %v517 = vld [vmem:[#allocation5 + $0x514] sm:$0xff]
        %v518 = vld [vmem:[#allocation5 + $0x548] sm:$0xff]
        %v519 = vld [vmem:[#allocation5 + $0x57c] sm:$0xff]
        %v520 = vld [vmem:[#allocation5 + $0x5b0] sm:$0xff]
        %v521 = vld [vmem:[#allocation5 + $0x5e4] sm:$0xff]
        %v522 = vld [vmem:[#allocation5 + $0x618] sm:$0xff]
        %v523 = vld [vmem:[#allocation5 + $0x64c] sm:$0xff]
        %v524 = vld [vmem:[#allocation5 + $0x8] sm:$0xff]
        %v525 = vld [vmem:[#allocation5 + $0x10] sm:$0xff]
        %v526 = vld [vmem:[#allocation5 + $0x3c] sm:$0xff]
        %v527 = vld [vmem:[#allocation5 + $0x44] sm:$0xff]
        %v528 = vld [vmem:[#allocation5 + $0x70] sm:$0xff]
        %v529 = vld [vmem:[#allocation5 + $0x78] sm:$0xff]
        %v530 = vld [vmem:[#allocation5 + $0xa4] sm:$0xff]
        %v531 = vld [vmem:[#allocation5 + $0xac] sm:$0xff]
        %v532 = vld [vmem:[#allocation5 + $0xd8] sm:$0xff]
        %v533 = vld [vmem:[#allocation5 + $0xe0] sm:$0xff]
        %v534 = vld [vmem:[#allocation5 + $0x10c] sm:$0xff]
        %v535 = vld [vmem:[#allocation5 + $0x114] sm:$0xff]
        %v536 = vld [vmem:[#allocation5 + $0x140] sm:$0xff]
        %v537 = vld [vmem:[#allocation5 + $0x148] sm:$0xff]
        %v538 = vld [vmem:[#allocation5 + $0x174] sm:$0xff]
        %v539 = vld [vmem:[#allocation5 + $0x17c] sm:$0xff]
        %v540 = vld [vmem:[#allocation5 + $0x1a8] sm:$0xff]
        %v541 = vld [vmem:[#allocation5 + $0x1b0] sm:$0xff]
        %v542 = vld [vmem:[#allocation5 + $0x1dc] sm:$0xff]
        %v543 = vld [vmem:[#allocation5 + $0x1e4] sm:$0xff]
        %v544 = vld [vmem:[#allocation5 + $0x210] sm:$0xff]
        %v545 = vld [vmem:[#allocation5 + $0x218] sm:$0xff]
        %v546 = vld [vmem:[#allocation5 + $0x244] sm:$0xff]
        %v547 = vld [vmem:[#allocation5 + $0x24c] sm:$0xff]
        %v548 = vld [vmem:[#allocation5 + $0x278] sm:$0xff]
        %v549 = vld [vmem:[#allocation5 + $0x280] sm:$0xff]
        %v550 = vld [vmem:[#allocation5 + $0x2ac] sm:$0xff]
        %v551 = vld [vmem:[#allocation5 + $0x2b4] sm:$0xff]
        %v552 = vld [vmem:[#allocation5 + $0x2e0] sm:$0xff]
        %v553 = vld [vmem:[#allocation5 + $0x2e8] sm:$0xff]
        %v554 = vld [vmem:[#allocation5 + $0x314] sm:$0xff]
        %v555 = vld [vmem:[#allocation5 + $0x31c] sm:$0xff]
        %v556 = vld [vmem:[#allocation5 + $0x348] sm:$0xff]
        %v557 = vld [vmem:[#allocation5 + $0x350] sm:$0xff]
        %v558 = vld [vmem:[#allocation5 + $0x37c] sm:$0xff]
        %v559 = vld [vmem:[#allocation5 + $0x384] sm:$0xff]
        %v560 = vld [vmem:[#allocation5 + $0x3b0] sm:$0xff]
        %v561 = vld [vmem:[#allocation5 + $0x3b8] sm:$0xff]
        %v562 = vld [vmem:[#allocation5 + $0x3e4] sm:$0xff]
        %v563 = vld [vmem:[#allocation5 + $0x3ec] sm:$0xff]
        %v564 = vld [vmem:[#allocation5 + $0x418] sm:$0xff]
        %v565 = vld [vmem:[#allocation5 + $0x420] sm:$0xff]
        %v566 = vld [vmem:[#allocation5 + $0x44c] sm:$0xff]
        %v567 = vld [vmem:[#allocation5 + $0x454] sm:$0xff]
        %v568 = vld [vmem:[#allocation5 + $0x480] sm:$0xff]
        %v569 = vld [vmem:[#allocation5 + $0x488] sm:$0xff]
        %v570 = vld [vmem:[#allocation5 + $0x4b4] sm:$0xff]
        %v571 = vld [vmem:[#allocation5 + $0x4bc] sm:$0xff]
        %v572 = vld [vmem:[#allocation5 + $0x4e8] sm:$0xff]
        %v573 = vld [vmem:[#allocation5 + $0x4f0] sm:$0xff]
        %v574 = vld [vmem:[#allocation5 + $0x51c] sm:$0xff]
        %v575 = vld [vmem:[#allocation5 + $0x524] sm:$0xff]
        %v576 = vld [vmem:[#allocation5 + $0x550] sm:$0xff]
        %v577 = vld [vmem:[#allocation5 + $0x558] sm:$0xff]
        %v578 = vld [vmem:[#allocation5 + $0x584] sm:$0xff]
        %v579 = vld [vmem:[#allocation5 + $0x58c] sm:$0xff]
        %v580 = vld [vmem:[#allocation5 + $0x5b8] sm:$0xff]
        %v581 = vld [vmem:[#allocation5 + $0x5c0] sm:$0xff]
        %v582 = vld [vmem:[#allocation5 + $0x5ec] sm:$0xff]
        %v583 = vld [vmem:[#allocation5 + $0x5f4] sm:$0xff]
        %v584 = vld [vmem:[#allocation5 + $0x620] sm:$0xff]
        %v585 = vld [vmem:[#allocation5 + $0x628] sm:$0xff]
        %v586 = vld [vmem:[#allocation5 + $0x654] sm:$0xff]
        %v587 = vld [vmem:[#allocation5 + $0x65c] sm:$0xff]
        %v588 = vld [vmem:[#allocation7] sm:$0xff]
        %v589 = vld [vmem:[#allocation7 + $0x10] sm:$0xff]
        %v590 = vld [vmem:[#allocation7 + $0x20] sm:$0xff]
        %v591 = vld [vmem:[#allocation7 + $0x30] sm:$0xff]
        %v592 = vld [vmem:[#allocation7 + $0x40] sm:$0xff]
        %v593 = vld [vmem:[#allocation7 + $0x50] sm:$0xff]
        %v594 = vld [vmem:[#allocation7 + $0x60] sm:$0xff]
        %v595 = vld [vmem:[#allocation7 + $0x70] sm:$0xff]
        %v596 = vld [vmem:[#allocation7 + $0x80] sm:$0xff]
        %v597 = vld [vmem:[#allocation7 + $0x90] sm:$0xff]
        %v598 = vld [vmem:[#allocation7 + $0xa0] sm:$0xff]
        %v599 = vld [vmem:[#allocation7 + $0xb0] sm:$0xff]
        %v600 = vld [vmem:[#allocation7 + $0xc0] sm:$0xff]
        %v601 = vld [vmem:[#allocation7 + $0xd0] sm:$0xff]
        %v602 = vld [vmem:[#allocation7 + $0xe0] sm:$0xff]
        %v603 = vld [vmem:[#allocation7 + $0xf0] sm:$0xff]
        %v604 = vld [vmem:[#allocation7 + $0x100] sm:$0xff]
        %v605 = vld [vmem:[#allocation7 + $0x110] sm:$0xff]
        %v606 = vld [vmem:[#allocation7 + $0x120] sm:$0xff]
        %v607 = vld [vmem:[#allocation7 + $0x130] sm:$0xff]
        %v608 = vld [vmem:[#allocation7 + $0x140] sm:$0xff]
        %v609 = vld [vmem:[#allocation7 + $0x150] sm:$0xff]
        %v610 = vld [vmem:[#allocation7 + $0x160] sm:$0xff]
        %v611 = vld [vmem:[#allocation7 + $0x170] sm:$0xff]
        %v612 = vld [vmem:[#allocation7 + $0x180] sm:$0xff]
        %v613 = vld [vmem:[#allocation7 + $0x190] sm:$0xff]
        %v614 = vld [vmem:[#allocation7 + $0x1a0] sm:$0xff]
        %v615 = vld [vmem:[#allocation7 + $0x1b0] sm:$0xff]
        %v616 = vld [vmem:[#allocation7 + $0x1c0] sm:$0xff]
        %v617 = vld [vmem:[#allocation7 + $0x1d0] sm:$0xff]
        %v618 = vld [vmem:[#allocation7 + $0x1e0] sm:$0xff]
        %v619 = vld [vmem:[#allocation7 + $0x1f0] sm:$0xff]
        %v620 = vld [vmem:[#allocation7 + $0x200] sm:$0xff]
        %v621 = vld [vmem:[#allocation7 + $0x210] sm:$0xff]
        %v622 = vld [vmem:[#allocation7 + $0x220] sm:$0xff]
        %v623 = vld [vmem:[#allocation7 + $0x230] sm:$0xff]
        %v624 = vld [vmem:[#allocation7 + $0x240] sm:$0xff]
        %v625 = vld [vmem:[#allocation7 + $0x250] sm:$0xff]
        %v626 = vld [vmem:[#allocation7 + $0x260] sm:$0xff]
        %v627 = vld [vmem:[#allocation7 + $0x270] sm:$0xff]
        %v628 = vld [vmem:[#allocation7 + $0x280] sm:$0xff]
        %v629 = vld [vmem:[#allocation7 + $0x290] sm:$0xff]
        %v630 = vld [vmem:[#allocation7 + $0x2a0] sm:$0xff]
        %v631 = vld [vmem:[#allocation7 + $0x2b0] sm:$0xff]
        %v632 = vld [vmem:[#allocation7 + $0x2c0] sm:$0xff]
        %v633 = vld [vmem:[#allocation7 + $0x2d0] sm:$0xff]
        %v634 = vld [vmem:[#allocation7 + $0x2e0] sm:$0xff]
        %v635 = vld [vmem:[#allocation7 + $0x2f0] sm:$0xff]
        %v636 = vld [vmem:[#allocation7 + $0x300] sm:$0xff]
        %v637 = vld [vmem:[#allocation7 + $0x310] sm:$0xff]
        %v638 = vld [vmem:[#allocation7 + $0x320] sm:$0xff]
        %v639 = vld [vmem:[#allocation7 + $0x330] sm:$0xff]
        %v640 = vld [vmem:[#allocation7 + $0x340] sm:$0xff]
        %v641 = vld [vmem:[#allocation7 + $0x350] sm:$0xff]
        %v642 = vld [vmem:[#allocation7 + $0x360] sm:$0xff]
        %v643 = vld [vmem:[#allocation7 + $0x370] sm:$0xff]
        %v644 = vld [vmem:[#allocation7 + $0x380] sm:$0xff]
        %v645 = vld [vmem:[#allocation7 + $0x390] sm:$0xff]
        %v646 = vld [vmem:[#allocation7 + $0x3a0] sm:$0xff]
        %v647 = vld [vmem:[#allocation7 + $0x3b0] sm:$0xff]
        %v648 = vld [vmem:[#allocation7 + $0x3c0] sm:$0xff]
        %v649 = vld [vmem:[#allocation7 + $0x3d0] sm:$0xff]
        %v650 = vld [vmem:[#allocation7 + $0x3e0] sm:$0xff]
        %v651 = vld [vmem:[#allocation7 + $0x3f0] sm:$0xff]
        %v652 = vpack.c.bf16 %v486, %v486
        %v653 = vpack.c.bf16 %v488, %v488
        %s654 = scalar_lea.vmem [#allocation11], 1
        %v655 = vld [vmem:[%s654] ss:$8 sm:$0x3]
        %v657 = vlaneseq
        %v658 = vshrl.u32 %v657, 7
        %v659 = vsub.s32 0, %v658
        %v660 = vrot.slane %v655, %v659
        %v661 = vlaneseq
        %v662 = vshrl.u32 %v661, 7
        %v663 = vsub.s32 1, %v662
        %v664 = vrot.slane %v655, %v663
        %v699 = vunpack.c.l.b16 %v492
        %v700 = vunpack.c.h.b16 %v492
        %v701 = vunpack.c.l.b16 %v493
        %v702 = vunpack.c.h.b16 %v493
        %v703 = vunpack.c.l.b16 %v494
        %v704 = vunpack.c.h.b16 %v494
        %v705 = vunpack.c.l.b16 %v495
        %v706 = vunpack.c.h.b16 %v495
        %v707 = vunpack.c.l.b16 %v496
        %v708 = vunpack.c.h.b16 %v496
        %v709 = vunpack.c.l.b16 %v497
        %v710 = vunpack.c.h.b16 %v497
        %v711 = vunpack.c.l.b16 %v498
        %v712 = vunpack.c.h.b16 %v498
        %v713 = vunpack.c.l.b16 %v499
        %v714 = vunpack.c.h.b16 %v499
        %v715 = vunpack.c.l.b16 %v500
        %v716 = vunpack.c.h.b16 %v500
        %v717 = vunpack.c.l.b16 %v501
        %v718 = vunpack.c.h.b16 %v501
        %v719 = vunpack.c.l.b16 %v502
        %v720 = vunpack.c.h.b16 %v502
        %v721 = vunpack.c.l.b16 %v503
        %v722 = vunpack.c.h.b16 %v503
        %v723 = vunpack.c.l.b16 %v504
        %v724 = vunpack.c.h.b16 %v504
        %v725 = vunpack.c.l.b16 %v505
        %v726 = vunpack.c.h.b16 %v505
        %v727 = vunpack.c.l.b16 %v506
        %v728 = vunpack.c.h.b16 %v506
        %v729 = vunpack.c.l.b16 %v507
        %v730 = vunpack.c.h.b16 %v507
        %v731 = vunpack.c.l.b16 %v508
        %v732 = vunpack.c.h.b16 %v508
        %v733 = vunpack.c.l.b16 %v509
        %v734 = vunpack.c.h.b16 %v509
        %v735 = vunpack.c.l.b16 %v510
        %v736 = vunpack.c.h.b16 %v510
        %v737 = vunpack.c.l.b16 %v511
        %v738 = vunpack.c.h.b16 %v511
        %v739 = vunpack.c.l.b16 %v512
        %v740 = vunpack.c.h.b16 %v512
        %v741 = vunpack.c.l.b16 %v513
        %v742 = vunpack.c.h.b16 %v513
        %v743 = vunpack.c.l.b16 %v514
        %v744 = vunpack.c.h.b16 %v514
        %v745 = vunpack.c.l.b16 %v515
        %v746 = vunpack.c.h.b16 %v515
        %v747 = vunpack.c.l.b16 %v516
        %v748 = vunpack.c.h.b16 %v516
        %v749 = vunpack.c.l.b16 %v517
        %v750 = vunpack.c.h.b16 %v517
        %v751 = vunpack.c.l.b16 %v518
        %v752 = vunpack.c.h.b16 %v518
        %v753 = vunpack.c.l.b16 %v519
        %v754 = vunpack.c.h.b16 %v519
        %v755 = vunpack.c.l.b16 %v520
        %v756 = vunpack.c.h.b16 %v520
        %v757 = vunpack.c.l.b16 %v521
        %v758 = vunpack.c.h.b16 %v521
        %v759 = vunpack.c.l.b16 %v522
        %v760 = vunpack.c.h.b16 %v522
        %v761 = vunpack.c.l.b16 %v523
        %v762 = vunpack.c.h.b16 %v523
        %v763 = vpack.c.b16 %v701, %v699
        %v764 = vpack.c.b16 %v702, %v700
        %v765 = vpack.c.b16 %v705, %v703
        %v766 = vpack.c.b16 %v706, %v704
        %v767 = vpack.c.b16 %v709, %v707
        %v768 = vpack.c.b16 %v710, %v708
        %v769 = vpack.c.b16 %v713, %v711
        %v770 = vpack.c.b16 %v714, %v712
        %v771 = vpack.c.b16 %v717, %v715
        %v772 = vpack.c.b16 %v718, %v716
        %v773 = vpack.c.b16 %v721, %v719
        %v774 = vpack.c.b16 %v722, %v720
        %v775 = vpack.c.b16 %v725, %v723
        %v776 = vpack.c.b16 %v726, %v724
        %v777 = vpack.c.b16 %v729, %v727
        %v778 = vpack.c.b16 %v730, %v728
        %v779 = vpack.c.b16 %v733, %v731
        %v780 = vpack.c.b16 %v734, %v732
        %v781 = vpack.c.b16 %v737, %v735
        %v782 = vpack.c.b16 %v738, %v736
        %v783 = vpack.c.b16 %v741, %v739
        %v784 = vpack.c.b16 %v742, %v740
        %v785 = vpack.c.b16 %v745, %v743
        %v786 = vpack.c.b16 %v746, %v744
        %v787 = vpack.c.b16 %v749, %v747
        %v788 = vpack.c.b16 %v750, %v748
        %v789 = vpack.c.b16 %v753, %v751
        %v790 = vpack.c.b16 %v754, %v752
        %v791 = vpack.c.b16 %v757, %v755
        %v792 = vpack.c.b16 %v758, %v756
        %v793 = vpack.c.b16 %v761, %v759
        %v794 = vpack.c.b16 %v762, %v760
        %827 = vmatprep.subr.bf16.mxu0 %v764
        %828 = vmatpush1.bf16.msra.mxu0 %v763
        %829 = vmatprep.subr.bf16.mxu0 %v766
        %830 = vmatpush1.bf16.msra.mxu0 %v765
        %831 = vmatprep.subr.bf16.mxu0 %v768
        %832 = vmatpush1.bf16.msra.mxu0 %v767
        %833 = vmatprep.subr.bf16.mxu0 %v770
        %834 = vmatpush1.bf16.msra.mxu0 %v769
        %835 = vmatprep.subr.bf16.mxu0 %v772
        %836 = vmatpush1.bf16.msra.mxu0 %v771
        %837 = vmatprep.subr.bf16.mxu0 %v774
        %838 = vmatpush1.bf16.msra.mxu0 %v773
        %839 = vmatprep.subr.bf16.mxu0 %v776
        %840 = vmatpush1.bf16.msra.mxu0 %v775
        %841 = vmatprep.subr.bf16.mxu0 %v778
        %842 = vmatpush1.bf16.msra.mxu0 %v777
        %843 = vmatprep.subr.bf16.mxu0 %v780
        %844 = vmatpush1.bf16.msra.mxu0 %v779
        %845 = vmatprep.subr.bf16.mxu0 %v782
        %846 = vmatpush1.bf16.msra.mxu0 %v781
        %847 = vmatprep.subr.bf16.mxu0 %v784
        %848 = vmatpush1.bf16.msra.mxu0 %v783
        %849 = vmatprep.subr.bf16.mxu0 %v786
        %850 = vmatpush1.bf16.msra.mxu0 %v785
        %851 = vmatprep.subr.bf16.mxu0 %v788
        %852 = vmatpush1.bf16.msra.mxu0 %v787
        %853 = vmatprep.subr.bf16.mxu0 %v790
        %854 = vmatpush1.bf16.msra.mxu0 %v789
        %855 = vmatprep.subr.bf16.mxu0 %v792
        %856 = vmatpush1.bf16.msra.mxu0 %v791
        %857 = vmatprep.subr.bf16.mxu0 %v794
        %858 = vmatpush1.bf16.msra.mxu0 %v793
        %859 = vmatprep.mubr.bf16.mxu0 %v653
        %860 = vmatmul.mubr.bf16.gmra.mrb[0].mxu0 %v652
        %v861 = vpop.f32.mrb[0].mxu0
        %v862 = vadd.f32 %v660, %v861
        %v863 = vpop.f32.mrb[0].mxu0
        %v864 = vadd.f32 %v664, %v863
        %v865 = vpop.f32.mrb[0].mxu0
        %v866 = vpop.f32.mrb[0].mxu0
        %867 = vdwg.mxu0
        %v868 = vadd.f32 %v486, %v862
        %v869 = vadd.f32 %v488, %v864
        %s870 = scalar_lea.vmem [#allocation11], 4
        %v871 = vld [vmem:[%s870] ss:$8 sm:$0x3]
        %s872 = scalar_lea.vmem [#allocation11], 5
        %v873 = vld [vmem:[%s872] ss:$8 sm:$0x3]
        %v874 = vadd.f32 %v868, %v869
        %875 = vadd.xlane.f32.xlu0 %v874
        %v876 = vpop.xlane.xlu0 %875
        %v877 = vrcp.pop 256.0
        %v878 = vmul.f32 %v876, %v877
        %v879 = vmul.f32 %v868, %v868
        %v880 = vmul.f32 %v869, %v869
        %v881 = vadd.f32 %v879, %v880
        %882 = vadd.xlane.f32.xlu0 %v881
        %v883 = vpop.xlane.xlu0 %882
        %v884 = vmul.f32 %v883, %v877
        %v885 = vmul.f32 %v878, %v878
        %v886 = vsub.f32 %v884, %v885
        %v887 = vsub.f32 %v868, %v878
        %v888 = vsub.f32 %v869, %v878
        %v889 = vadd.f32 %v886, 1e-05
        %v890 = vrsqrt.pop %v889
        %v891 = vmul.f32 %v887, %v890
        %v892 = vmul.f32 %v888, %v890
        %v894 = vlaneseq
        %v895 = vshrl.u32 %v894, 7
        %v896 = vsub.s32 0, %v895
        %v897 = vrot.slane %v871, %v896
        %v898 = vlaneseq
        %v899 = vshrl.u32 %v898, 7
        %v900 = vsub.s32 1, %v899
        %v901 = vrot.slane %v871, %v900
        %v904 = vmul.f32 %v891, %v897
        %v905 = vmul.f32 %v892, %v901
        %v907 = vlaneseq
        %v908 = vshrl.u32 %v907, 7
        %v909 = vsub.s32 0, %v908
        %v910 = vrot.slane %v873, %v909
        %v911 = vlaneseq
        %v912 = vshrl.u32 %v911, 7
        %v913 = vsub.s32 1, %v912
        %v914 = vrot.slane %v873, %v913
        %v917 = vadd.f32 %v904, %v910
        %v918 = vadd.f32 %v905, %v914
        %v919 = vpack.c.bf16 %v917, %v917
        %v920 = vpack.c.bf16 %v918, %v918
        %s921 = scalar_lea.vmem [#allocation11], 2
        %v922 = vld [vmem:[%s921] ss:$8 sm:$0xf]
        %v924 = vlaneseq
        %v925 = vshrl.u32 %v924, 7
        %v926 = vsub.s32 0, %v925
        %v927 = vrot.slane %v922, %v926
        %v928 = vlaneseq
        %v929 = vshrl.u32 %v928, 7
        %v930 = vsub.s32 1, %v929
        %v931 = vrot.slane %v922, %v930
        %v932 = vlaneseq
        %v933 = vshrl.u32 %v932, 7
        %v934 = vsub.s32 2, %v933
        %v935 = vrot.slane %v922, %v934
        %v936 = vlaneseq
        %v937 = vshrl.u32 %v936, 7
        %v938 = vsub.s32 3, %v937
        %v939 = vrot.slane %v922, %v938
        %v1008 = vunpack.c.l.b16 %v524
        %v1009 = vunpack.c.h.b16 %v524
        %v1010 = vunpack.c.l.b16 %v525
        %v1011 = vunpack.c.h.b16 %v525
        %v1012 = vunpack.c.l.b16 %v526
        %v1013 = vunpack.c.h.b16 %v526
        %v1014 = vunpack.c.l.b16 %v527
        %v1015 = vunpack.c.h.b16 %v527
        %v1016 = vunpack.c.l.b16 %v528
        %v1017 = vunpack.c.h.b16 %v528
        %v1018 = vunpack.c.l.b16 %v529
        %v1019 = vunpack.c.h.b16 %v529
        %v1020 = vunpack.c.l.b16 %v530
        %v1021 = vunpack.c.h.b16 %v530
        %v1022 = vunpack.c.l.b16 %v531
        %v1023 = vunpack.c.h.b16 %v531
        %v1024 = vunpack.c.l.b16 %v532
        %v1025 = vunpack.c.h.b16 %v532
        %v1026 = vunpack.c.l.b16 %v533
        %v1027 = vunpack.c.h.b16 %v533
        %v1028 = vunpack.c.l.b16 %v534
        %v1029 = vunpack.c.h.b16 %v534
        %v1030 = vunpack.c.l.b16 %v535
        %v1031 = vunpack.c.h.b16 %v535
        %v1032 = vunpack.c.l.b16 %v536
        %v1033 = vunpack.c.h.b16 %v536
        %v1034 = vunpack.c.l.b16 %v537
        %v1035 = vunpack.c.h.b16 %v537
        %v1036 = vunpack.c.l.b16 %v538
        %v1037 = vunpack.c.h.b16 %v538
        %v1038 = vunpack.c.l.b16 %v539
        %v1039 = vunpack.c.h.b16 %v539
        %v1040 = vunpack.c.l.b16 %v540
        %v1041 = vunpack.c.h.b16 %v540
        %v1042 = vunpack.c.l.b16 %v541
        %v1043 = vunpack.c.h.b16 %v541
        %v1044 = vunpack.c.l.b16 %v542
        %v1045 = vunpack.c.h.b16 %v542
        %v1046 = vunpack.c.l.b16 %v543
        %v1047 = vunpack.c.h.b16 %v543
        %v1048 = vunpack.c.l.b16 %v544
        %v1049 = vunpack.c.h.b16 %v544
        %v1050 = vunpack.c.l.b16 %v545
        %v1051 = vunpack.c.h.b16 %v545
        %v1052 = vunpack.c.l.b16 %v546
        %v1053 = vunpack.c.h.b16 %v546
        %v1054 = vunpack.c.l.b16 %v547
        %v1055 = vunpack.c.h.b16 %v547
        %v1056 = vunpack.c.l.b16 %v548
        %v1057 = vunpack.c.h.b16 %v548
        %v1058 = vunpack.c.l.b16 %v549
        %v1059 = vunpack.c.h.b16 %v549
        %v1060 = vunpack.c.l.b16 %v550
        %v1061 = vunpack.c.h.b16 %v550
        %v1062 = vunpack.c.l.b16 %v551
        %v1063 = vunpack.c.h.b16 %v551
        %v1064 = vunpack.c.l.b16 %v552
        %v1065 = vunpack.c.h.b16 %v552
        %v1066 = vunpack.c.l.b16 %v553
        %v1067 = vunpack.c.h.b16 %v553
        %v1068 = vunpack.c.l.b16 %v554
        %v1069 = vunpack.c.h.b16 %v554
        %v1070 = vunpack.c.l.b16 %v555
        %v1071 = vunpack.c.h.b16 %v555
        %v1072 = vunpack.c.l.b16 %v556
        %v1073 = vunpack.c.h.b16 %v556
        %v1074 = vunpack.c.l.b16 %v557
        %v1075 = vunpack.c.h.b16 %v557
        %v1076 = vunpack.c.l.b16 %v558
        %v1077 = vunpack.c.h.b16 %v558
        %v1078 = vunpack.c.l.b16 %v559
        %v1079 = vunpack.c.h.b16 %v559
        %v1080 = vunpack.c.l.b16 %v560
        %v1081 = vunpack.c.h.b16 %v560
        %v1082 = vunpack.c.l.b16 %v561
        %v1083 = vunpack.c.h.b16 %v561
        %v1084 = vunpack.c.l.b16 %v562
        %v1085 = vunpack.c.h.b16 %v562
        %v1086 = vunpack.c.l.b16 %v563
        %v1087 = vunpack.c.h.b16 %v563
        %v1088 = vunpack.c.l.b16 %v564
        %v1089 = vunpack.c.h.b16 %v564
        %v1090 = vunpack.c.l.b16 %v565
        %v1091 = vunpack.c.h.b16 %v565
        %v1092 = vunpack.c.l.b16 %v566
        %v1093 = vunpack.c.h.b16 %v566
        %v1094 = vunpack.c.l.b16 %v567
        %v1095 = vunpack.c.h.b16 %v567
        %v1096 = vunpack.c.l.b16 %v568
        %v1097 = vunpack.c.h.b16 %v568
        %v1098 = vunpack.c.l.b16 %v569
        %v1099 = vunpack.c.h.b16 %v569
        %v1100 = vunpack.c.l.b16 %v570
        %v1101 = vunpack.c.h.b16 %v570
        %v1102 = vunpack.c.l.b16 %v571
        %v1103 = vunpack.c.h.b16 %v571
        %v1104 = vunpack.c.l.b16 %v572
        %v1105 = vunpack.c.h.b16 %v572
        %v1106 = vunpack.c.l.b16 %v573
        %v1107 = vunpack.c.h.b16 %v573
        %v1108 = vunpack.c.l.b16 %v574
        %v1109 = vunpack.c.h.b16 %v574
        %v1110 = vunpack.c.l.b16 %v575
        %v1111 = vunpack.c.h.b16 %v575
        %v1112 = vunpack.c.l.b16 %v576
        %v1113 = vunpack.c.h.b16 %v576
        %v1114 = vunpack.c.l.b16 %v577
        %v1115 = vunpack.c.h.b16 %v577
        %v1116 = vunpack.c.l.b16 %v578
        %v1117 = vunpack.c.h.b16 %v578
        %v1118 = vunpack.c.l.b16 %v579
        %v1119 = vunpack.c.h.b16 %v579
        %v1120 = vunpack.c.l.b16 %v580
        %v1121 = vunpack.c.h.b16 %v580
        %v1122 = vunpack.c.l.b16 %v581
        %v1123 = vunpack.c.h.b16 %v581
        %v1124 = vunpack.c.l.b16 %v582
        %v1125 = vunpack.c.h.b16 %v582
        %v1126 = vunpack.c.l.b16 %v583
        %v1127 = vunpack.c.h.b16 %v583
        %v1128 = vunpack.c.l.b16 %v584
        %v1129 = vunpack.c.h.b16 %v584
        %v1130 = vunpack.c.l.b16 %v585
        %v1131 = vunpack.c.h.b16 %v585
        %v1132 = vunpack.c.l.b16 %v586
        %v1133 = vunpack.c.h.b16 %v586
        %v1134 = vunpack.c.l.b16 %v587
        %v1135 = vunpack.c.h.b16 %v587
        %v1136 = vpack.c.b16 %v1012, %v1008
        %v1137 = vpack.c.b16 %v1013, %v1009
        %v1138 = vpack.c.b16 %v1014, %v1010
        %v1139 = vpack.c.b16 %v1015, %v1011
        %v1140 = vpack.c.b16 %v1020, %v1016
        %v1141 = vpack.c.b16 %v1021, %v1017
        %v1142 = vpack.c.b16 %v1022, %v1018
        %v1143 = vpack.c.b16 %v1023, %v1019
        %v1144 = vpack.c.b16 %v1028, %v1024
        %v1145 = vpack.c.b16 %v1029, %v1025
        %v1146 = vpack.c.b16 %v1030, %v1026
        %v1147 = vpack.c.b16 %v1031, %v1027
        %v1148 = vpack.c.b16 %v1036, %v1032
        %v1149 = vpack.c.b16 %v1037, %v1033
        %v1150 = vpack.c.b16 %v1038, %v1034
        %v1151 = vpack.c.b16 %v1039, %v1035
        %v1152 = vpack.c.b16 %v1044, %v1040
        %v1153 = vpack.c.b16 %v1045, %v1041
        %v1154 = vpack.c.b16 %v1046, %v1042
        %v1155 = vpack.c.b16 %v1047, %v1043
        %v1156 = vpack.c.b16 %v1052, %v1048
        %v1157 = vpack.c.b16 %v1053, %v1049
        %v1158 = vpack.c.b16 %v1054, %v1050
        %v1159 = vpack.c.b16 %v1055, %v1051
        %v1160 = vpack.c.b16 %v1060, %v1056
        %v1161 = vpack.c.b16 %v1061, %v1057
        %v1162 = vpack.c.b16 %v1062, %v1058
        %v1163 = vpack.c.b16 %v1063, %v1059
        %v1164 = vpack.c.b16 %v1068, %v1064
        %v1165 = vpack.c.b16 %v1069, %v1065
        %v1166 = vpack.c.b16 %v1070, %v1066
        %v1167 = vpack.c.b16 %v1071, %v1067
        %v1168 = vpack.c.b16 %v1076, %v1072
        %v1169 = vpack.c.b16 %v1077, %v1073
        %v1170 = vpack.c.b16 %v1078, %v1074
        %v1171 = vpack.c.b16 %v1079, %v1075
        %v1172 = vpack.c.b16 %v1084, %v1080
        %v1173 = vpack.c.b16 %v1085, %v1081
        %v1174 = vpack.c.b16 %v1086, %v1082
        %v1175 = vpack.c.b16 %v1087, %v1083
        %v1176 = vpack.c.b16 %v1092, %v1088
        %v1177 = vpack.c.b16 %v1093, %v1089
        %v1178 = vpack.c.b16 %v1094, %v1090
        %v1179 = vpack.c.b16 %v1095, %v1091
        %v1180 = vpack.c.b16 %v1100, %v1096
        %v1181 = vpack.c.b16 %v1101, %v1097
        %v1182 = vpack.c.b16 %v1102, %v1098
        %v1183 = vpack.c.b16 %v1103, %v1099
        %v1184 = vpack.c.b16 %v1108, %v1104
        %v1185 = vpack.c.b16 %v1109, %v1105
        %v1186 = vpack.c.b16 %v1110, %v1106
        %v1187 = vpack.c.b16 %v1111, %v1107
        %v1188 = vpack.c.b16 %v1116, %v1112
        %v1189 = vpack.c.b16 %v1117, %v1113
        %v1190 = vpack.c.b16 %v1118, %v1114
        %v1191 = vpack.c.b16 %v1119, %v1115
        %v1192 = vpack.c.b16 %v1124, %v1120
        %v1193 = vpack.c.b16 %v1125, %v1121
        %v1194 = vpack.c.b16 %v1126, %v1122
        %v1195 = vpack.c.b16 %v1127, %v1123
        %v1196 = vpack.c.b16 %v1132, %v1128
        %v1197 = vpack.c.b16 %v1133, %v1129
        %v1198 = vpack.c.b16 %v1134, %v1130
        %v1199 = vpack.c.b16 %v1135, %v1131
        %1264 = vmatprep.subr.bf16.mxu0 %v1137
        %1265 = vmatpush1.bf16.msra.mxu0 %v1136
        %1266 = vmatprep.subr.bf16.mxu0 %v1141
        %1267 = vmatpush1.bf16.msra.mxu0 %v1140
        %1268 = vmatprep.subr.bf16.mxu0 %v1145
        %1269 = vmatpush1.bf16.msra.mxu0 %v1144
        %1270 = vmatprep.subr.bf16.mxu0 %v1149
        %1271 = vmatpush1.bf16.msra.mxu0 %v1148
        %1272 = vmatprep.subr.bf16.mxu0 %v1153
        %1273 = vmatpush1.bf16.msra.mxu0 %v1152
        %1274 = vmatprep.subr.bf16.mxu0 %v1157
        %1275 = vmatpush1.bf16.msra.mxu0 %v1156
        %1276 = vmatprep.subr.bf16.mxu0 %v1161
        %1277 = vmatpush1.bf16.msra.mxu0 %v1160
        %1278 = vmatprep.subr.bf16.mxu0 %v1165
        %1279 = vmatpush1.bf16.msra.mxu0 %v1164
        %1280 = vmatprep.subr.bf16.mxu0 %v1169
        %1281 = vmatpush1.bf16.msra.mxu0 %v1168
        %1282 = vmatprep.subr.bf16.mxu0 %v1173
        %1283 = vmatpush1.bf16.msra.mxu0 %v1172
        %1284 = vmatprep.subr.bf16.mxu0 %v1177
        %1285 = vmatpush1.bf16.msra.mxu0 %v1176
        %1286 = vmatprep.subr.bf16.mxu0 %v1181
        %1287 = vmatpush1.bf16.msra.mxu0 %v1180
        %1288 = vmatprep.subr.bf16.mxu0 %v1185
        %1289 = vmatpush1.bf16.msra.mxu0 %v1184
        %1290 = vmatprep.subr.bf16.mxu0 %v1189
        %1291 = vmatpush1.bf16.msra.mxu0 %v1188
        %1292 = vmatprep.subr.bf16.mxu0 %v1193
        %1293 = vmatpush1.bf16.msra.mxu0 %v1192
        %1294 = vmatprep.subr.bf16.mxu0 %v1197
        %1295 = vmatpush1.bf16.msra.mxu0 %v1196
        %1296 = vmatprep.mubr.bf16.mxu0 %v920
        %1297 = vmatmul.mubr.bf16.gmra.mrb[0].mxu0 %v919
        %v1298 = vpop.f32.mrb[0].mxu0
        %v1299 = vadd.f32 %v927, %v1298
        %v1300 = vpop.f32.mrb[0].mxu0
        %v1301 = vadd.f32 %v931, %v1300
        %v1302 = vpop.f32.mrb[0].mxu0
        %v1303 = vpop.f32.mrb[0].mxu0
        %1304 = vdwg.mxu0
        %1305 = vmatprep.subr.bf16.mxu0 %v1139
        %1306 = vmatpush1.bf16.msra.mxu0 %v1138
        %1307 = vmatprep.subr.bf16.mxu0 %v1143
        %1308 = vmatpush1.bf16.msra.mxu0 %v1142
        %1309 = vmatprep.subr.bf16.mxu0 %v1147
        %1310 = vmatpush1.bf16.msra.mxu0 %v1146
        %1311 = vmatprep.subr.bf16.mxu0 %v1151
        %1312 = vmatpush1.bf16.msra.mxu0 %v1150
        %1313 = vmatprep.subr.bf16.mxu0 %v1155
        %1314 = vmatpush1.bf16.msra.mxu0 %v1154
        %1315 = vmatprep.subr.bf16.mxu0 %v1159
        %1316 = vmatpush1.bf16.msra.mxu0 %v1158
        %1317 = vmatprep.subr.bf16.mxu0 %v1163
        %1318 = vmatpush1.bf16.msra.mxu0 %v1162
        %1319 = vmatprep.subr.bf16.mxu0 %v1167
        %1320 = vmatpush1.bf16.msra.mxu0 %v1166
        %1321 = vmatprep.subr.bf16.mxu0 %v1171
        %1322 = vmatpush1.bf16.msra.mxu0 %v1170
        %1323 = vmatprep.subr.bf16.mxu0 %v1175
        %1324 = vmatpush1.bf16.msra.mxu0 %v1174
        %1325 = vmatprep.subr.bf16.mxu0 %v1179
        %1326 = vmatpush1.bf16.msra.mxu0 %v1178
        %1327 = vmatprep.subr.bf16.mxu0 %v1183
        %1328 = vmatpush1.bf16.msra.mxu0 %v1182
        %1329 = vmatprep.subr.bf16.mxu0 %v1187
        %1330 = vmatpush1.bf16.msra.mxu0 %v1186
        %1331 = vmatprep.subr.bf16.mxu0 %v1191
        %1332 = vmatpush1.bf16.msra.mxu0 %v1190
        %1333 = vmatprep.subr.bf16.mxu0 %v1195
        %1334 = vmatpush1.bf16.msra.mxu0 %v1194
        %1335 = vmatprep.subr.bf16.mxu0 %v1199
        %1336 = vmatpush1.bf16.msra.mxu0 %v1198
        %1337 = vmatprep.mubr.bf16.mxu0 %v920
        %1338 = vmatmul.mubr.bf16.gmra.mrb[0].mxu0 %v919
        %v1339 = vpop.f32.mrb[0].mxu0
        %v1340 = vadd.f32 %v935, %v1339
        %v1341 = vpop.f32.mrb[0].mxu0
        %v1342 = vadd.f32 %v939, %v1341
        %v1343 = vpop.f32.mrb[0].mxu0
        %v1344 = vpop.f32.mrb[0].mxu0
        %1345 = vdwg.mxu0
        %v1346 = vmax.f32 %v1299, 0.0
        %v1347 = vmax.f32 %v1301, 0.0
        %v1348 = vmax.f32 %v1340, 0.0
        %v1349 = vmax.f32 %v1342, 0.0
        %v1350 = vpack.c.bf16 %v1346, %v1346
        %v1351 = vpack.c.bf16 %v1347, %v1347
        %v1352 = vpack.c.bf16 %v1348, %v1348
        %v1353 = vpack.c.bf16 %v1349, %v1349
        %s1354 = scalar_lea.vmem [#allocation11], 3
        %v1355 = vld [vmem:[%s1354] ss:$8 sm:$0x3]
        %v1357 = vlaneseq
        %v1358 = vshrl.u32 %v1357, 7
        %v1359 = vsub.s32 0, %v1358
        %v1360 = vrot.slane %v1355, %v1359
        %v1361 = vlaneseq
        %v1362 = vshrl.u32 %v1361, 7
        %v1363 = vsub.s32 1, %v1362
        %v1364 = vrot.slane %v1355, %v1363
        %v1431 = vunpack.c.l.b16 %v588
        %v1432 = vunpack.c.h.b16 %v588
        %v1433 = vunpack.c.l.b16 %v589
        %v1434 = vunpack.c.h.b16 %v589
        %v1435 = vunpack.c.l.b16 %v590
        %v1436 = vunpack.c.h.b16 %v590
        %v1437 = vunpack.c.l.b16 %v591
        %v1438 = vunpack.c.h.b16 %v591
        %v1439 = vunpack.c.l.b16 %v592
        %v1440 = vunpack.c.h.b16 %v592
        %v1441 = vunpack.c.l.b16 %v593
        %v1442 = vunpack.c.h.b16 %v593
        %v1443 = vunpack.c.l.b16 %v594
        %v1444 = vunpack.c.h.b16 %v594
        %v1445 = vunpack.c.l.b16 %v595
        %v1446 = vunpack.c.h.b16 %v595
        %v1447 = vunpack.c.l.b16 %v596
        %v1448 = vunpack.c.h.b16 %v596
        %v1449 = vunpack.c.l.b16 %v597
        %v1450 = vunpack.c.h.b16 %v597
        %v1451 = vunpack.c.l.b16 %v598
        %v1452 = vunpack.c.h.b16 %v598
        %v1453 = vunpack.c.l.b16 %v599
        %v1454 = vunpack.c.h.b16 %v599
        %v1455 = vunpack.c.l.b16 %v600
        %v1456 = vunpack.c.h.b16 %v600
        %v1457 = vunpack.c.l.b16 %v601
        %v1458 = vunpack.c.h.b16 %v601
        %v1459 = vunpack.c.l.b16 %v602
        %v1460 = vunpack.c.h.b16 %v602
        %v1461 = vunpack.c.l.b16 %v603
        %v1462 = vunpack.c.h.b16 %v603
        %v1463 = vunpack.c.l.b16 %v604
        %v1464 = vunpack.c.h.b16 %v604
        %v1465 = vunpack.c.l.b16 %v605
        %v1466 = vunpack.c.h.b16 %v605
        %v1467 = vunpack.c.l.b16 %v606
        %v1468 = vunpack.c.h.b16 %v606
        %v1469 = vunpack.c.l.b16 %v607
        %v1470 = vunpack.c.h.b16 %v607
        %v1471 = vunpack.c.l.b16 %v608
        %v1472 = vunpack.c.h.b16 %v608
        %v1473 = vunpack.c.l.b16 %v609
        %v1474 = vunpack.c.h.b16 %v609
        %v1475 = vunpack.c.l.b16 %v610
        %v1476 = vunpack.c.h.b16 %v610
        %v1477 = vunpack.c.l.b16 %v611
        %v1478 = vunpack.c.h.b16 %v611
        %v1479 = vunpack.c.l.b16 %v612
        %v1480 = vunpack.c.h.b16 %v612
        %v1481 = vunpack.c.l.b16 %v613
        %v1482 = vunpack.c.h.b16 %v613
        %v1483 = vunpack.c.l.b16 %v614
        %v1484 = vunpack.c.h.b16 %v614
        %v1485 = vunpack.c.l.b16 %v615
        %v1486 = vunpack.c.h.b16 %v615
        %v1487 = vunpack.c.l.b16 %v616
        %v1488 = vunpack.c.h.b16 %v616
        %v1489 = vunpack.c.l.b16 %v617
        %v1490 = vunpack.c.h.b16 %v617
        %v1491 = vunpack.c.l.b16 %v618
        %v1492 = vunpack.c.h.b16 %v618
        %v1493 = vunpack.c.l.b16 %v619
        %v1494 = vunpack.c.h.b16 %v619
        %v1495 = vunpack.c.l.b16 %v620
        %v1496 = vunpack.c.h.b16 %v620
        %v1497 = vunpack.c.l.b16 %v621
        %v1498 = vunpack.c.h.b16 %v621
        %v1499 = vunpack.c.l.b16 %v622
        %v1500 = vunpack.c.h.b16 %v622
        %v1501 = vunpack.c.l.b16 %v623
        %v1502 = vunpack.c.h.b16 %v623
        %v1503 = vunpack.c.l.b16 %v624
        %v1504 = vunpack.c.h.b16 %v624
        %v1505 = vunpack.c.l.b16 %v625
        %v1506 = vunpack.c.h.b16 %v625
        %v1507 = vunpack.c.l.b16 %v626
        %v1508 = vunpack.c.h.b16 %v626
        %v1509 = vunpack.c.l.b16 %v627
        %v1510 = vunpack.c.h.b16 %v627
        %v1511 = vunpack.c.l.b16 %v628
        %v1512 = vunpack.c.h.b16 %v628
        %v1513 = vunpack.c.l.b16 %v629
        %v1514 = vunpack.c.h.b16 %v629
        %v1515 = vunpack.c.l.b16 %v630
        %v1516 = vunpack.c.h.b16 %v630
        %v1517 = vunpack.c.l.b16 %v631
        %v1518 = vunpack.c.h.b16 %v631
        %v1519 = vunpack.c.l.b16 %v632
        %v1520 = vunpack.c.h.b16 %v632
        %v1521 = vunpack.c.l.b16 %v633
        %v1522 = vunpack.c.h.b16 %v633
        %v1523 = vunpack.c.l.b16 %v634
        %v1524 = vunpack.c.h.b16 %v634
        %v1525 = vunpack.c.l.b16 %v635
        %v1526 = vunpack.c.h.b16 %v635
        %v1527 = vunpack.c.l.b16 %v636
        %v1528 = vunpack.c.h.b16 %v636
        %v1529 = vunpack.c.l.b16 %v637
        %v1530 = vunpack.c.h.b16 %v637
        %v1531 = vunpack.c.l.b16 %v638
        %v1532 = vunpack.c.h.b16 %v638
        %v1533 = vunpack.c.l.b16 %v639
        %v1534 = vunpack.c.h.b16 %v639
        %v1535 = vunpack.c.l.b16 %v640
        %v1536 = vunpack.c.h.b16 %v640
        %v1537 = vunpack.c.l.b16 %v641
        %v1538 = vunpack.c.h.b16 %v641
        %v1539 = vunpack.c.l.b16 %v642
        %v1540 = vunpack.c.h.b16 %v642
        %v1541 = vunpack.c.l.b16 %v643
        %v1542 = vunpack.c.h.b16 %v643
        %v1543 = vunpack.c.l.b16 %v644
        %v1544 = vunpack.c.h.b16 %v644
        %v1545 = vunpack.c.l.b16 %v645
        %v1546 = vunpack.c.h.b16 %v645
        %v1547 = vunpack.c.l.b16 %v646
        %v1548 = vunpack.c.h.b16 %v646
        %v1549 = vunpack.c.l.b16 %v647
        %v1550 = vunpack.c.h.b16 %v647
        %v1551 = vunpack.c.l.b16 %v648
        %v1552 = vunpack.c.h.b16 %v648
        %v1553 = vunpack.c.l.b16 %v649
        %v1554 = vunpack.c.h.b16 %v649
        %v1555 = vunpack.c.l.b16 %v650
        %v1556 = vunpack.c.h.b16 %v650
        %v1557 = vunpack.c.l.b16 %v651
        %v1558 = vunpack.c.h.b16 %v651
        %v1559 = vpack.c.b16 %v1433, %v1431
        %v1560 = vpack.c.b16 %v1434, %v1432
        %v1561 = vpack.c.b16 %v1437, %v1435
        %v1562 = vpack.c.b16 %v1438, %v1436
        %v1563 = vpack.c.b16 %v1441, %v1439
        %v1564 = vpack.c.b16 %v1442, %v1440
        %v1565 = vpack.c.b16 %v1445, %v1443
        %v1566 = vpack.c.b16 %v1446, %v1444
        %v1567 = vpack.c.b16 %v1449, %v1447
        %v1568 = vpack.c.b16 %v1450, %v1448
        %v1569 = vpack.c.b16 %v1453, %v1451
        %v1570 = vpack.c.b16 %v1454, %v1452
        %v1571 = vpack.c.b16 %v1457, %v1455
        %v1572 = vpack.c.b16 %v1458, %v1456
        %v1573 = vpack.c.b16 %v1461, %v1459
        %v1574 = vpack.c.b16 %v1462, %v1460
        %v1575 = vpack.c.b16 %v1465, %v1463
        %v1576 = vpack.c.b16 %v1466, %v1464
        %v1577 = vpack.c.b16 %v1469, %v1467
        %v1578 = vpack.c.b16 %v1470, %v1468
        %v1579 = vpack.c.b16 %v1473, %v1471
        %v1580 = vpack.c.b16 %v1474, %v1472
        %v1581 = vpack.c.b16 %v1477, %v1475
        %v1582 = vpack.c.b16 %v1478, %v1476
        %v1583 = vpack.c.b16 %v1481, %v1479
        %v1584 = vpack.c.b16 %v1482, %v1480
        %v1585 = vpack.c.b16 %v1485, %v1483
        %v1586 = vpack.c.b16 %v1486, %v1484
        %v1587 = vpack.c.b16 %v1489, %v1487
        %v1588 = vpack.c.b16 %v1490, %v1488
        %v1589 = vpack.c.b16 %v1493, %v1491
        %v1590 = vpack.c.b16 %v1494, %v1492
        %v1591 = vpack.c.b16 %v1497, %v1495
        %v1592 = vpack.c.b16 %v1498, %v1496
        %v1593 = vpack.c.b16 %v1501, %v1499
        %v1594 = vpack.c.b16 %v1502, %v1500
        %v1595 = vpack.c.b16 %v1505, %v1503
        %v1596 = vpack.c.b16 %v1506, %v1504
        %v1597 = vpack.c.b16 %v1509, %v1507
        %v1598 = vpack.c.b16 %v1510, %v1508
        %v1599 = vpack.c.b16 %v1513, %v1511
        %v1600 = vpack.c.b16 %v1514, %v1512
        %v1601 = vpack.c.b16 %v1517, %v1515
        %v1602 = vpack.c.b16 %v1518, %v1516
        %v1603 = vpack.c.b16 %v1521, %v1519
        %v1604 = vpack.c.b16 %v1522, %v1520
        %v1605 = vpack.c.b16 %v1525, %v1523
        %v1606 = vpack.c.b16 %v1526, %v1524
        %v1607 = vpack.c.b16 %v1529, %v1527
        %v1608 = vpack.c.b16 %v1530, %v1528
        %v1609 = vpack.c.b16 %v1533, %v1531
        %v1610 = vpack.c.b16 %v1534, %v1532
        %v1611 = vpack.c.b16 %v1537, %v1535
        %v1612 = vpack.c.b16 %v1538, %v1536
        %v1613 = vpack.c.b16 %v1541, %v1539
        %v1614 = vpack.c.b16 %v1542, %v1540
        %v1615 = vpack.c.b16 %v1545, %v1543
        %v1616 = vpack.c.b16 %v1546, %v1544
        %v1617 = vpack.c.b16 %v1549, %v1547
        %v1618 = vpack.c.b16 %v1550, %v1548
        %v1619 = vpack.c.b16 %v1553, %v1551
        %v1620 = vpack.c.b16 %v1554, %v1552
        %v1621 = vpack.c.b16 %v1557, %v1555
        %v1622 = vpack.c.b16 %v1558, %v1556
        %1687 = vmatprep.subr.bf16.mxu0 %v1560
        %1688 = vmatpush1.bf16.msra.mxu0 %v1559
        %1689 = vmatprep.subr.bf16.mxu0 %v1562
        %1690 = vmatpush1.bf16.msra.mxu0 %v1561
        %1691 = vmatprep.subr.bf16.mxu0 %v1564
        %1692 = vmatpush1.bf16.msra.mxu0 %v1563
        %1693 = vmatprep.subr.bf16.mxu0 %v1566
        %1694 = vmatpush1.bf16.msra.mxu0 %v1565
        %1695 = vmatprep.subr.bf16.mxu0 %v1568
        %1696 = vmatpush1.bf16.msra.mxu0 %v1567
        %1697 = vmatprep.subr.bf16.mxu0 %v1570
        %1698 = vmatpush1.bf16.msra.mxu0 %v1569
        %1699 = vmatprep.subr.bf16.mxu0 %v1572
        %1700 = vmatpush1.bf16.msra.mxu0 %v1571
        %1701 = vmatprep.subr.bf16.mxu0 %v1574
        %1702 = vmatpush1.bf16.msra.mxu0 %v1573
        %1703 = vmatprep.subr.bf16.mxu0 %v1576
        %1704 = vmatpush1.bf16.msra.mxu0 %v1575
        %1705 = vmatprep.subr.bf16.mxu0 %v1578
        %1706 = vmatpush1.bf16.msra.mxu0 %v1577
        %1707 = vmatprep.subr.bf16.mxu0 %v1580
        %1708 = vmatpush1.bf16.msra.mxu0 %v1579
        %1709 = vmatprep.subr.bf16.mxu0 %v1582
        %1710 = vmatpush1.bf16.msra.mxu0 %v1581
        %1711 = vmatprep.subr.bf16.mxu0 %v1584
        %1712 = vmatpush1.bf16.msra.mxu0 %v1583
        %1713 = vmatprep.subr.bf16.mxu0 %v1586
        %1714 = vmatpush1.bf16.msra.mxu0 %v1585
        %1715 = vmatprep.subr.bf16.mxu0 %v1588
        %1716 = vmatpush1.bf16.msra.mxu0 %v1587
        %1717 = vmatprep.subr.bf16.mxu0 %v1590
        %1718 = vmatpush1.bf16.msra.mxu0 %v1589
        %1719 = vmatprep.mubr.bf16.mxu0 %v1351
        %1720 = vmatmul.mubr.bf16.gmra.mrb[0].mxu0 %v1350
        %v1721 = vpop.f32.mrb[0].mxu0
        %v1722 = vadd.f32 %v1360, %v1721
        %v1723 = vpop.f32.mrb[0].mxu0
        %v1724 = vadd.f32 %v1364, %v1723
        %v1725 = vpop.f32.mrb[0].mxu0
        %v1726 = vpop.f32.mrb[0].mxu0
        %1727 = vdwg.mxu0
        %1728 = vmatprep.subr.bf16.mxu0 %v1592
        %1729 = vmatpush1.bf16.msra.mxu0 %v1591
        %1730 = vmatprep.subr.bf16.mxu0 %v1594
        %1731 = vmatpush1.bf16.msra.mxu0 %v1593
        %1732 = vmatprep.subr.bf16.mxu0 %v1596
        %1733 = vmatpush1.bf16.msra.mxu0 %v1595
        %1734 = vmatprep.subr.bf16.mxu0 %v1598
        %1735 = vmatpush1.bf16.msra.mxu0 %v1597
        %1736 = vmatprep.subr.bf16.mxu0 %v1600
        %1737 = vmatpush1.bf16.msra.mxu0 %v1599
        %1738 = vmatprep.subr.bf16.mxu0 %v1602
        %1739 = vmatpush1.bf16.msra.mxu0 %v1601
        %1740 = vmatprep.subr.bf16.mxu0 %v1604
        %1741 = vmatpush1.bf16.msra.mxu0 %v1603
        %1742 = vmatprep.subr.bf16.mxu0 %v1606
        %1743 = vmatpush1.bf16.msra.mxu0 %v1605
        %1744 = vmatprep.subr.bf16.mxu0 %v1608
        %1745 = vmatpush1.bf16.msra.mxu0 %v1607
        %1746 = vmatprep.subr.bf16.mxu0 %v1610
        %1747 = vmatpush1.bf16.msra.mxu0 %v1609
        %1748 = vmatprep.subr.bf16.mxu0 %v1612
        %1749 = vmatpush1.bf16.msra.mxu0 %v1611
        %1750 = vmatprep.subr.bf16.mxu0 %v1614
        %1751 = vmatpush1.bf16.msra.mxu0 %v1613
        %1752 = vmatprep.subr.bf16.mxu0 %v1616
        %1753 = vmatpush1.bf16.msra.mxu0 %v1615
        %1754 = vmatprep.subr.bf16.mxu0 %v1618
        %1755 = vmatpush1.bf16.msra.mxu0 %v1617
        %1756 = vmatprep.subr.bf16.mxu0 %v1620
        %1757 = vmatpush1.bf16.msra.mxu0 %v1619
        %1758 = vmatprep.subr.bf16.mxu0 %v1622
        %1759 = vmatpush1.bf16.msra.mxu0 %v1621
        %1760 = vmatprep.mubr.bf16.mxu0 %v1353
        %1761 = vmatmul.mubr.bf16.gmra.mrb[0].mxu0 %v1352
        %v1762 = vpop.f32.mrb[0].mxu0
        %v1763 = vadd.f32 %v1722, %v1762
        %v1764 = vpop.f32.mrb[0].mxu0
        %v1765 = vadd.f32 %v1724, %v1764
        %v1766 = vpop.f32.mrb[0].mxu0
        %v1767 = vpop.f32.mrb[0].mxu0
        %1768 = vdwg.mxu0
        %v1769 = vadd.f32 %v917, %v1763
        %v1770 = vadd.f32 %v918, %v1765
        %s1771 = scalar_lea.vmem [#allocation11], 6
        %v1772 = vld [vmem:[%s1771] ss:$8 sm:$0x3]
        %s1773 = scalar_lea.vmem [#allocation11], 7
        %v1774 = vld [vmem:[%s1773] ss:$8 sm:$0x3]
        %v1775 = vadd.f32 %v1769, %v1770
        %1776 = vadd.xlane.f32.xlu0 %v1775
        %v1777 = vpop.xlane.xlu0 %1776
        %v1778 = vmul.f32 %v1777, %v877
        %v1779 = vmul.f32 %v1769, %v1769
        %v1780 = vmul.f32 %v1770, %v1770
        %v1781 = vadd.f32 %v1779, %v1780
        %1782 = vadd.xlane.f32.xlu0 %v1781
        %v1783 = vpop.xlane.xlu0 %1782
        %v1784 = vmul.f32 %v1783, %v877
        %v1785 = vmul.f32 %v1778, %v1778
        %v1786 = vsub.f32 %v1784, %v1785
        %v1787 = vsub.f32 %v1769, %v1778
        %v1788 = vsub.f32 %v1770, %v1778
        %v1789 = vadd.f32 %v1786, 1e-05
        %v1790 = vrsqrt.pop %v1789
        %v1791 = vmul.f32 %v1787, %v1790
        %v1792 = vmul.f32 %v1788, %v1790
        %v1794 = vlaneseq
        %v1795 = vshrl.u32 %v1794, 7
        %v1796 = vsub.s32 0, %v1795
        %v1797 = vrot.slane %v1772, %v1796
        %v1798 = vlaneseq
        %v1799 = vshrl.u32 %v1798, 7
        %v1800 = vsub.s32 1, %v1799
        %v1801 = vrot.slane %v1772, %v1800
        %v1804 = vmul.f32 %v1791, %v1797
        %v1805 = vmul.f32 %v1792, %v1801
        %v1807 = vlaneseq
        %v1808 = vshrl.u32 %v1807, 7
        %v1809 = vsub.s32 0, %v1808
        %v1810 = vrot.slane %v1774, %v1809
        %v1811 = vlaneseq
        %v1812 = vshrl.u32 %v1811, 7
        %v1813 = vsub.s32 1, %v1812
        %v1814 = vrot.slane %v1774, %v1813
        %v1817 = vadd.f32 %v1804, %v1810
        %v1818 = vadd.f32 %v1805, %v1814
        %v1819 = vld [vmem:[#allocation5 + $0x18] sm:$0xff]
        %v1820 = vld [vmem:[#allocation5 + $0x4c] sm:$0xff]
        %v1821 = vld [vmem:[#allocation5 + $0x80] sm:$0xff]
        %v1822 = vld [vmem:[#allocation5 + $0xb4] sm:$0xff]
        %v1823 = vld [vmem:[#allocation5 + $0xe8] sm:$0xff]
        %v1824 = vld [vmem:[#allocation5 + $0x11c] sm:$0xff]
        %v1825 = vld [vmem:[#allocation5 + $0x150] sm:$0xff]
        %v1826 = vld [vmem:[#allocation5 + $0x184] sm:$0xff]
        %v1827 = vld [vmem:[#allocation5 + $0x1b8] sm:$0xff]
        %v1828 = vld [vmem:[#allocation5 + $0x1ec] sm:$0xff]
        %v1829 = vld [vmem:[#allocation5 + $0x220] sm:$0xff]
        %v1830 = vld [vmem:[#allocation5 + $0x254] sm:$0xff]
        %v1831 = vld [vmem:[#allocation5 + $0x288] sm:$0xff]
        %v1832 = vld [vmem:[#allocation5 + $0x2bc] sm:$0xff]
        %v1833 = vld [vmem:[#allocation5 + $0x2f0] sm:$0xff]
        %v1834 = vld [vmem:[#allocation5 + $0x324] sm:$0xff]
        %v1835 = vld [vmem:[#allocation5 + $0x358] sm:$0xff]
        %v1836 = vld [vmem:[#allocation5 + $0x38c] sm:$0xff]
        %v1837 = vld [vmem:[#allocation5 + $0x3c0] sm:$0xff]
        %v1838 = vld [vmem:[#allocation5 + $0x3f4] sm:$0xff]
        %v1839 = vld [vmem:[#allocation5 + $0x428] sm:$0xff]
        %v1840 = vld [vmem:[#allocation5 + $0x45c] sm:$0xff]
        %v1841 = vld [vmem:[#allocation5 + $0x490] sm:$0xff]
        %v1842 = vld [vmem:[#allocation5 + $0x4c4] sm:$0xff]
        %v1843 = vld [vmem:[#allocation5 + $0x4f8] sm:$0xff]
        %v1844 = vld [vmem:[#allocation5 + $0x52c] sm:$0xff]
        %v1845 = vld [vmem:[#allocation5 + $0x560] sm:$0xff]
        %v1846 = vld [vmem:[#allocation5 + $0x594] sm:$0xff]
        %v1847 = vld [vmem:[#allocation5 + $0x5c8] sm:$0xff]
        %v1848 = vld [vmem:[#allocation5 + $0x5fc] sm:$0xff]
        %v1849 = vld [vmem:[#allocation5 + $0x630] sm:$0xff]
        %v1850 = vld [vmem:[#allocation5 + $0x664] sm:$0xff]
        %v1851 = vld [vmem:[#allocation5 + $0x20] sm:$0xff]
        %v1852 = vld [vmem:[#allocation5 + $0x28] sm:$0xff]
        %v1853 = vld [vmem:[#allocation5 + $0x54] sm:$0xff]
        %v1854 = vld [vmem:[#allocation5 + $0x5c] sm:$0xff]
        %v1855 = vld [vmem:[#allocation5 + $0x88] sm:$0xff]
        %v1856 = vld [vmem:[#allocation5 + $0x90] sm:$0xff]
        %v1857 = vld [vmem:[#allocation5 + $0xbc] sm:$0xff]
        %v1858 = vld [vmem:[#allocation5 + $0xc4] sm:$0xff]
        %v1859 = vld [vmem:[#allocation5 + $0xf0] sm:$0xff]
        %v1860 = vld [vmem:[#allocation5 + $0xf8] sm:$0xff]
        %v1861 = vld [vmem:[#allocation5 + $0x124] sm:$0xff]
        %v1862 = vld [vmem:[#allocation5 + $0x12c] sm:$0xff]
        %v1863 = vld [vmem:[#allocation5 + $0x158] sm:$0xff]
        %v1864 = vld [vmem:[#allocation5 + $0x160] sm:$0xff]
        %v1865 = vld [vmem:[#allocation5 + $0x18c] sm:$0xff]
        %v1866 = vld [vmem:[#allocation5 + $0x194] sm:$0xff]
        %v1867 = vld [vmem:[#allocation5 + $0x1c0] sm:$0xff]
        %v1868 = vld [vmem:[#allocation5 + $0x1c8] sm:$0xff]
        %v1869 = vld [vmem:[#allocation5 + $0x1f4] sm:$0xff]
        %v1870 = vld [vmem:[#allocation5 + $0x1fc] sm:$0xff]
        %v1871 = vld [vmem:[#allocation5 + $0x228] sm:$0xff]
        %v1872 = vld [vmem:[#allocation5 + $0x230] sm:$0xff]
        %v1873 = vld [vmem:[#allocation5 + $0x25c] sm:$0xff]
        %v1874 = vld [vmem:[#allocation5 + $0x264] sm:$0xff]
        %v1875 = vld [vmem:[#allocation5 + $0x290] sm:$0xff]
        %v1876 = vld [vmem:[#allocation5 + $0x298] sm:$0xff]
        %v1877 = vld [vmem:[#allocation5 + $0x2c4] sm:$0xff]
        %v1878 = vld [vmem:[#allocation5 + $0x2cc] sm:$0xff]
        %v1879 = vld [vmem:[#allocation5 + $0x2f8] sm:$0xff]
        %v1880 = vld [vmem:[#allocation5 + $0x300] sm:$0xff]
        %v1881 = vld [vmem:[#allocation5 + $0x32c] sm:$0xff]
        %v1882 = vld [vmem:[#allocation5 + $0x334] sm:$0xff]
        %v1883 = vld [vmem:[#allocation5 + $0x360] sm:$0xff]
        %v1884 = vld [vmem:[#allocation5 + $0x368] sm:$0xff]
        %v1885 = vld [vmem:[#allocation5 + $0x394] sm:$0xff]
        %v1886 = vld [vmem:[#allocation5 + $0x39c] sm:$0xff]
        %v1887 = vld [vmem:[#allocation5 + $0x3c8] sm:$0xff]
        %v1888 = vld [vmem:[#allocation5 + $0x3d0] sm:$0xff]
        %v1889 = vld [vmem:[#allocation5 + $0x3fc] sm:$0xff]
        %v1890 = vld [vmem:[#allocation5 + $0x404] sm:$0xff]
        %v1891 = vld [vmem:[#allocation5 + $0x430] sm:$0xff]
        %v1892 = vld [vmem:[#allocation5 + $0x438] sm:$0xff]
        %v1893 = vld [vmem:[#allocation5 + $0x464] sm:$0xff]
        %v1894 = vld [vmem:[#allocation5 + $0x46c] sm:$0xff]
        %v1895 = vld [vmem:[#allocation5 + $0x498] sm:$0xff]
        %v1896 = vld [vmem:[#allocation5 + $0x4a0] sm:$0xff]
        %v1897 = vld [vmem:[#allocation5 + $0x4cc] sm:$0xff]
        %v1898 = vld [vmem:[#allocation5 + $0x4d4] sm:$0xff]
        %v1899 = vld [vmem:[#allocation5 + $0x500] sm:$0xff]
        %v1900 = vld [vmem:[#allocation5 + $0x508] sm:$0xff]
        %v1901 = vld [vmem:[#allocation5 + $0x534] sm:$0xff]
        %v1902 = vld [vmem:[#allocation5 + $0x53c] sm:$0xff]
        %v1903 = vld [vmem:[#allocation5 + $0x568] sm:$0xff]
        %v1904 = vld [vmem:[#allocation5 + $0x570] sm:$0xff]
        %v1905 = vld [vmem:[#allocation5 + $0x59c] sm:$0xff]
        %v1906 = vld [vmem:[#allocation5 + $0x5a4] sm:$0xff]
        %v1907 = vld [vmem:[#allocation5 + $0x5d0] sm:$0xff]
        %v1908 = vld [vmem:[#allocation5 + $0x5d8] sm:$0xff]
        %v1909 = vld [vmem:[#allocation5 + $0x604] sm:$0xff]
        %v1910 = vld [vmem:[#allocation5 + $0x60c] sm:$0xff]
        %v1911 = vld [vmem:[#allocation5 + $0x638] sm:$0xff]
        %v1912 = vld [vmem:[#allocation5 + $0x640] sm:$0xff]
        %v1913 = vld [vmem:[#allocation5 + $0x66c] sm:$0xff]
        %v1914 = vld [vmem:[#allocation5 + $0x674] sm:$0xff]
        %v1915 = vld [vmem:[#allocation7 + $0x8] sm:$0xff]
        %v1916 = vld [vmem:[#allocation7 + $0x18] sm:$0xff]
        %v1917 = vld [vmem:[#allocation7 + $0x28] sm:$0xff]
        %v1918 = vld [vmem:[#allocation7 + $0x38] sm:$0xff]
        %v1919 = vld [vmem:[#allocation7 + $0x48] sm:$0xff]
        %v1920 = vld [vmem:[#allocation7 + $0x58] sm:$0xff]
        %v1921 = vld [vmem:[#allocation7 + $0x68] sm:$0xff]
        %v1922 = vld [vmem:[#allocation7 + $0x78] sm:$0xff]
        %v1923 = vld [vmem:[#allocation7 + $0x88] sm:$0xff]
        %v1924 = vld [vmem:[#allocation7 + $0x98] sm:$0xff]
        %v1925 = vld [vmem:[#allocation7 + $0xa8] sm:$0xff]
        %v1926 = vld [vmem:[#allocation7 + $0xb8] sm:$0xff]
        %v1927 = vld [vmem:[#allocation7 + $0xc8] sm:$0xff]
        %v1928 = vld [vmem:[#allocation7 + $0xd8] sm:$0xff]
        %v1929 = vld [vmem:[#allocation7 + $0xe8] sm:$0xff]
        %v1930 = vld [vmem:[#allocation7 + $0xf8] sm:$0xff]
        %v1931 = vld [vmem:[#allocation7 + $0x108] sm:$0xff]
        %v1932 = vld [vmem:[#allocation7 + $0x118] sm:$0xff]
        %v1933 = vld [vmem:[#allocation7 + $0x128] sm:$0xff]
        %v1934 = vld [vmem:[#allocation7 + $0x138] sm:$0xff]
        %v1935 = vld [vmem:[#allocation7 + $0x148] sm:$0xff]
        %v1936 = vld [vmem:[#allocation7 + $0x158] sm:$0xff]
        %v1937 = vld [vmem:[#allocation7 + $0x168] sm:$0xff]
        %v1938 = vld [vmem:[#allocation7 + $0x178] sm:$0xff]
        %v1939 = vld [vmem:[#allocation7 + $0x188] sm:$0xff]
        %v1940 = vld [vmem:[#allocation7 + $0x198] sm:$0xff]
        %v1941 = vld [vmem:[#allocation7 + $0x1a8] sm:$0xff]
        %v1942 = vld [vmem:[#allocation7 + $0x1b8] sm:$0xff]
        %v1943 = vld [vmem:[#allocation7 + $0x1c8] sm:$0xff]
        %v1944 = vld [vmem:[#allocation7 + $0x1d8] sm:$0xff]
        %v1945 = vld [vmem:[#allocation7 + $0x1e8] sm:$0xff]
        %v1946 = vld [vmem:[#allocation7 + $0x1f8] sm:$0xff]
        %v1947 = vld [vmem:[#allocation7 + $0x208] sm:$0xff]
        %v1948 = vld [vmem:[#allocation7 + $0x218] sm:$0xff]
        %v1949 = vld [vmem:[#allocation7 + $0x228] sm:$0xff]
        %v1950 = vld [vmem:[#allocation7 + $0x238] sm:$0xff]
        %v1951 = vld [vmem:[#allocation7 + $0x248] sm:$0xff]
        %v1952 = vld [vmem:[#allocation7 + $0x258] sm:$0xff]
        %v1953 = vld [vmem:[#allocation7 + $0x268] sm:$0xff]
        %v1954 = vld [vmem:[#allocation7 + $0x278] sm:$0xff]
        %v1955 = vld [vmem:[#allocation7 + $0x288] sm:$0xff]
        %v1956 = vld [vmem:[#allocation7 + $0x298] sm:$0xff]
        %v1957 = vld [vmem:[#allocation7 + $0x2a8] sm:$0xff]
        %v1958 = vld [vmem:[#allocation7 + $0x2b8] sm:$0xff]
        %v1959 = vld [vmem:[#allocation7 + $0x2c8] sm:$0xff]
        %v1960 = vld [vmem:[#allocation7 + $0x2d8] sm:$0xff]
        %v1961 = vld [vmem:[#allocation7 + $0x2e8] sm:$0xff]
        %v1962 = vld [vmem:[#allocation7 + $0x2f8] sm:$0xff]
        %v1963 = vld [vmem:[#allocation7 + $0x308] sm:$0xff]
        %v1964 = vld [vmem:[#allocation7 + $0x318] sm:$0xff]
        %v1965 = vld [vmem:[#allocation7 + $0x328] sm:$0xff]
        %v1966 = vld [vmem:[#allocation7 + $0x338] sm:$0xff]
        %v1967 = vld [vmem:[#allocation7 + $0x348] sm:$0xff]
        %v1968 = vld [vmem:[#allocation7 + $0x358] sm:$0xff]
        %v1969 = vld [vmem:[#allocation7 + $0x368] sm:$0xff]
        %v1970 = vld [vmem:[#allocation7 + $0x378] sm:$0xff]
        %v1971 = vld [vmem:[#allocation7 + $0x388] sm:$0xff]
        %v1972 = vld [vmem:[#allocation7 + $0x398] sm:$0xff]
        %v1973 = vld [vmem:[#allocation7 + $0x3a8] sm:$0xff]
        %v1974 = vld [vmem:[#allocation7 + $0x3b8] sm:$0xff]
        %v1975 = vld [vmem:[#allocation7 + $0x3c8] sm:$0xff]
        %v1976 = vld [vmem:[#allocation7 + $0x3d8] sm:$0xff]
        %v1977 = vld [vmem:[#allocation7 + $0x3e8] sm:$0xff]
        %v1978 = vld [vmem:[#allocation7 + $0x3f8] sm:$0xff]
        %v1979 = vpack.c.bf16 %v1817, %v1817
        %v1980 = vpack.c.bf16 %v1818, %v1818
        %s1981 = scalar_lea.vmem [#allocation11], 32
        %v1982 = vld [vmem:[%s1981] ss:$8 sm:$0x3]
        %v1984 = vlaneseq
        %v1985 = vshrl.u32 %v1984, 7
        %v1986 = vsub.s32 0, %v1985
        %v1987 = vrot.slane %v1982, %v1986
        %v1988 = vlaneseq
        %v1989 = vshrl.u32 %v1988, 7
        %v1990 = vsub.s32 1, %v1989
        %v1991 = vrot.slane %v1982, %v1990
        %v2026 = vunpack.c.l.b16 %v1819
        %v2027 = vunpack.c.h.b16 %v1819
        %v2028 = vunpack.c.l.b16 %v1820
        %v2029 = vunpack.c.h.b16 %v1820
        %v2030 = vunpack.c.l.b16 %v1821
        %v2031 = vunpack.c.h.b16 %v1821
        %v2032 = vunpack.c.l.b16 %v1822
        %v2033 = vunpack.c.h.b16 %v1822
        %v2034 = vunpack.c.l.b16 %v1823
        %v2035 = vunpack.c.h.b16 %v1823
        %v2036 = vunpack.c.l.b16 %v1824
        %v2037 = vunpack.c.h.b16 %v1824
        %v2038 = vunpack.c.l.b16 %v1825
        %v2039 = vunpack.c.h.b16 %v1825
        %v2040 = vunpack.c.l.b16 %v1826
        %v2041 = vunpack.c.h.b16 %v1826
        %v2042 = vunpack.c.l.b16 %v1827
        %v2043 = vunpack.c.h.b16 %v1827
        %v2044 = vunpack.c.l.b16 %v1828
        %v2045 = vunpack.c.h.b16 %v1828
        %v2046 = vunpack.c.l.b16 %v1829
        %v2047 = vunpack.c.h.b16 %v1829
        %v2048 = vunpack.c.l.b16 %v1830
        %v2049 = vunpack.c.h.b16 %v1830
        %v2050 = vunpack.c.l.b16 %v1831
        %v2051 = vunpack.c.h.b16 %v1831
        %v2052 = vunpack.c.l.b16 %v1832
        %v2053 = vunpack.c.h.b16 %v1832
        %v2054 = vunpack.c.l.b16 %v1833
        %v2055 = vunpack.c.h.b16 %v1833
        %v2056 = vunpack.c.l.b16 %v1834
        %v2057 = vunpack.c.h.b16 %v1834
        %v2058 = vunpack.c.l.b16 %v1835
        %v2059 = vunpack.c.h.b16 %v1835
        %v2060 = vunpack.c.l.b16 %v1836
        %v2061 = vunpack.c.h.b16 %v1836
        %v2062 = vunpack.c.l.b16 %v1837
        %v2063 = vunpack.c.h.b16 %v1837
        %v2064 = vunpack.c.l.b16 %v1838
        %v2065 = vunpack.c.h.b16 %v1838
        %v2066 = vunpack.c.l.b16 %v1839
        %v2067 = vunpack.c.h.b16 %v1839
        %v2068 = vunpack.c.l.b16 %v1840
        %v2069 = vunpack.c.h.b16 %v1840
        %v2070 = vunpack.c.l.b16 %v1841
        %v2071 = vunpack.c.h.b16 %v1841
        %v2072 = vunpack.c.l.b16 %v1842
        %v2073 = vunpack.c.h.b16 %v1842
        %v2074 = vunpack.c.l.b16 %v1843
        %v2075 = vunpack.c.h.b16 %v1843
        %v2076 = vunpack.c.l.b16 %v1844
        %v2077 = vunpack.c.h.b16 %v1844
        %v2078 = vunpack.c.l.b16 %v1845
        %v2079 = vunpack.c.h.b16 %v1845
        %v2080 = vunpack.c.l.b16 %v1846
        %v2081 = vunpack.c.h.b16 %v1846
        %v2082 = vunpack.c.l.b16 %v1847
        %v2083 = vunpack.c.h.b16 %v1847
        %v2084 = vunpack.c.l.b16 %v1848
        %v2085 = vunpack.c.h.b16 %v1848
        %v2086 = vunpack.c.l.b16 %v1849
        %v2087 = vunpack.c.h.b16 %v1849
        %v2088 = vunpack.c.l.b16 %v1850
        %v2089 = vunpack.c.h.b16 %v1850
        %v2090 = vpack.c.b16 %v2028, %v2026
        %v2091 = vpack.c.b16 %v2029, %v2027
        %v2092 = vpack.c.b16 %v2032, %v2030
        %v2093 = vpack.c.b16 %v2033, %v2031
        %v2094 = vpack.c.b16 %v2036, %v2034
        %v2095 = vpack.c.b16 %v2037, %v2035
        %v2096 = vpack.c.b16 %v2040, %v2038
        %v2097 = vpack.c.b16 %v2041, %v2039
        %v2098 = vpack.c.b16 %v2044, %v2042
        %v2099 = vpack.c.b16 %v2045, %v2043
        %v2100 = vpack.c.b16 %v2048, %v2046
        %v2101 = vpack.c.b16 %v2049, %v2047
        %v2102 = vpack.c.b16 %v2052, %v2050
        %v2103 = vpack.c.b16 %v2053, %v2051
        %v2104 = vpack.c.b16 %v2056, %v2054
        %v2105 = vpack.c.b16 %v2057, %v2055
        %v2106 = vpack.c.b16 %v2060, %v2058
        %v2107 = vpack.c.b16 %v2061, %v2059
        %v2108 = vpack.c.b16 %v2064, %v2062
        %v2109 = vpack.c.b16 %v2065, %v2063
        %v2110 = vpack.c.b16 %v2068, %v2066
        %v2111 = vpack.c.b16 %v2069, %v2067
        %v2112 = vpack.c.b16 %v2072, %v2070
        %v2113 = vpack.c.b16 %v2073, %v2071
        %v2114 = vpack.c.b16 %v2076, %v2074
        %v2115 = vpack.c.b16 %v2077, %v2075
        %v2116 = vpack.c.b16 %v2080, %v2078
        %v2117 = vpack.c.b16 %v2081, %v2079
        %v2118 = vpack.c.b16 %v2084, %v2082
        %v2119 = vpack.c.b16 %v2085, %v2083
        %v2120 = vpack.c.b16 %v2088, %v2086
        %v2121 = vpack.c.b16 %v2089, %v2087
        %2154 = vmatprep.subr.bf16.mxu0 %v2091
        %2155 = vmatpush1.bf16.msra.mxu0 %v2090
        %2156 = vmatprep.subr.bf16.mxu0 %v2093
        %2157 = vmatpush1.bf16.msra.mxu0 %v2092
        %2158 = vmatprep.subr.bf16.mxu0 %v2095
        %2159 = vmatpush1.bf16.msra.mxu0 %v2094
        %2160 = vmatprep.subr.bf16.mxu0 %v2097
        %2161 = vmatpush1.bf16.msra.mxu0 %v2096
        %2162 = vmatprep.subr.bf16.mxu0 %v2099
        %2163 = vmatpush1.bf16.msra.mxu0 %v2098
        %2164 = vmatprep.subr.bf16.mxu0 %v2101
        %2165 = vmatpush1.bf16.msra.mxu0 %v2100
        %2166 = vmatprep.subr.bf16.mxu0 %v2103
        %2167 = vmatpush1.bf16.msra.mxu0 %v2102
        %2168 = vmatprep.subr.bf16.mxu0 %v2105
        %2169 = vmatpush1.bf16.msra.mxu0 %v2104
        %2170 = vmatprep.subr.bf16.mxu0 %v2107
        %2171 = vmatpush1.bf16.msra.mxu0 %v2106
        %2172 = vmatprep.subr.bf16.mxu0 %v2109
        %2173 = vmatpush1.bf16.msra.mxu0 %v2108
        %2174 = vmatprep.subr.bf16.mxu0 %v2111
        %2175 = vmatpush1.bf16.msra.mxu0 %v2110
        %2176 = vmatprep.subr.bf16.mxu0 %v2113
        %2177 = vmatpush1.bf16.msra.mxu0 %v2112
        %2178 = vmatprep.subr.bf16.mxu0 %v2115
        %2179 = vmatpush1.bf16.msra.mxu0 %v2114
        %2180 = vmatprep.subr.bf16.mxu0 %v2117
        %2181 = vmatpush1.bf16.msra.mxu0 %v2116
        %2182 = vmatprep.subr.bf16.mxu0 %v2119
        %2183 = vmatpush1.bf16.msra.mxu0 %v2118
        %2184 = vmatprep.subr.bf16.mxu0 %v2121
        %2185 = vmatpush1.bf16.msra.mxu0 %v2120
        %2186 = vmatprep.mubr.bf16.mxu0 %v1980
        %2187 = vmatmul.mubr.bf16.gmra.mrb[0].mxu0 %v1979
        %v2188 = vpop.f32.mrb[0].mxu0
        %v2189 = vadd.f32 %v1987, %v2188
        %v2190 = vpop.f32.mrb[0].mxu0
        %v2191 = vadd.f32 %v1991, %v2190
        %v2192 = vpop.f32.mrb[0].mxu0
        %v2193 = vpop.f32.mrb[0].mxu0
        %2194 = vdwg.mxu0
        %v2195 = vadd.f32 %v1817, %v2189
        %v2196 = vadd.f32 %v1818, %v2191
        %s2197 = scalar_lea.vmem [#allocation11], 35
        %v2198 = vld [vmem:[%s2197] ss:$8 sm:$0x3]
        %s2199 = scalar_lea.vmem [#allocation11], 36
        %v2200 = vld [vmem:[%s2199] ss:$8 sm:$0x3]
        %v2201 = vadd.f32 %v2195, %v2196
        %2202 = vadd.xlane.f32.xlu0 %v2201
        %v2203 = vpop.xlane.xlu0 %2202
        %v2204 = vmul.f32 %v2203, %v877
        %v2205 = vmul.f32 %v2195, %v2195
        %v2206 = vmul.f32 %v2196, %v2196
        %v2207 = vadd.f32 %v2205, %v2206
        %2208 = vadd.xlane.f32.xlu0 %v2207
        %v2209 = vpop.xlane.xlu0 %2208
        %v2210 = vmul.f32 %v2209, %v877
        %v2211 = vmul.f32 %v2204, %v2204
        %v2212 = vsub.f32 %v2210, %v2211
        %v2213 = vsub.f32 %v2195, %v2204
        %v2214 = vsub.f32 %v2196, %v2204
        %v2215 = vadd.f32 %v2212, 1e-05
        %v2216 = vrsqrt.pop %v2215
        %v2217 = vmul.f32 %v2213, %v2216
        %v2218 = vmul.f32 %v2214, %v2216
        %v2220 = vlaneseq
        %v2221 = vshrl.u32 %v2220, 7
        %v2222 = vsub.s32 0, %v2221
        %v2223 = vrot.slane %v2198, %v2222
        %v2224 = vlaneseq
        %v2225 = vshrl.u32 %v2224, 7
        %v2226 = vsub.s32 1, %v2225
        %v2227 = vrot.slane %v2198, %v2226
        %v2230 = vmul.f32 %v2217, %v2223
        %v2231 = vmul.f32 %v2218, %v2227
        %v2233 = vlaneseq
        %v2234 = vshrl.u32 %v2233, 7
        %v2235 = vsub.s32 0, %v2234
        %v2236 = vrot.slane %v2200, %v2235
        %v2237 = vlaneseq
        %v2238 = vshrl.u32 %v2237, 7
        %v2239 = vsub.s32 1, %v2238
        %v2240 = vrot.slane %v2200, %v2239
        %v2243 = vadd.f32 %v2230, %v2236
        %v2244 = vadd.f32 %v2231, %v2240
        %v2245 = vpack.c.bf16 %v2243, %v2243
        %v2246 = vpack.c.bf16 %v2244, %v2244
        %s2247 = scalar_lea.vmem [#allocation11], 33
        %v2248 = vld [vmem:[%s2247] ss:$8 sm:$0xf]
        %v2250 = vlaneseq
        %v2251 = vshrl.u32 %v2250, 7
        %v2252 = vsub.s32 0, %v2251
        %v2253 = vrot.slane %v2248, %v2252
        %v2254 = vlaneseq
        %v2255 = vshrl.u32 %v2254, 7
        %v2256 = vsub.s32 1, %v2255
        %v2257 = vrot.slane %v2248, %v2256
        %v2258 = vlaneseq
        %v2259 = vshrl.u32 %v2258, 7
        %v2260 = vsub.s32 2, %v2259
        %v2261 = vrot.slane %v2248, %v2260
        %v2262 = vlaneseq
        %v2263 = vshrl.u32 %v2262, 7
        %v2264 = vsub.s32 3, %v2263
        %v2265 = vrot.slane %v2248, %v2264
        %v2334 = vunpack.c.l.b16 %v1851
        %v2335 = vunpack.c.h.b16 %v1851
        %v2336 = vunpack.c.l.b16 %v1852
        %v2337 = vunpack.c.h.b16 %v1852
        %v2338 = vunpack.c.l.b16 %v1853
        %v2339 = vunpack.c.h.b16 %v1853
        %v2340 = vunpack.c.l.b16 %v1854
        %v2341 = vunpack.c.h.b16 %v1854
        %v2342 = vunpack.c.l.b16 %v1855
        %v2343 = vunpack.c.h.b16 %v1855
        %v2344 = vunpack.c.l.b16 %v1856
        %v2345 = vunpack.c.h.b16 %v1856
        %v2346 = vunpack.c.l.b16 %v1857
        %v2347 = vunpack.c.h.b16 %v1857
        %v2348 = vunpack.c.l.b16 %v1858
        %v2349 = vunpack.c.h.b16 %v1858
        %v2350 = vunpack.c.l.b16 %v1859
        %v2351 = vunpack.c.h.b16 %v1859
        %v2352 = vunpack.c.l.b16 %v1860
        %v2353 = vunpack.c.h.b16 %v1860
        %v2354 = vunpack.c.l.b16 %v1861
        %v2355 = vunpack.c.h.b16 %v1861
        %v2356 = vunpack.c.l.b16 %v1862
        %v2357 = vunpack.c.h.b16 %v1862
        %v2358 = vunpack.c.l.b16 %v1863
        %v2359 = vunpack.c.h.b16 %v1863
        %v2360 = vunpack.c.l.b16 %v1864
        %v2361 = vunpack.c.h.b16 %v1864
        %v2362 = vunpack.c.l.b16 %v1865
        %v2363 = vunpack.c.h.b16 %v1865
        %v2364 = vunpack.c.l.b16 %v1866
        %v2365 = vunpack.c.h.b16 %v1866
        %v2366 = vunpack.c.l.b16 %v1867
        %v2367 = vunpack.c.h.b16 %v1867
        %v2368 = vunpack.c.l.b16 %v1868
        %v2369 = vunpack.c.h.b16 %v1868
        %v2370 = vunpack.c.l.b16 %v1869
        %v2371 = vunpack.c.h.b16 %v1869
        %v2372 = vunpack.c.l.b16 %v1870
        %v2373 = vunpack.c.h.b16 %v1870
        %v2374 = vunpack.c.l.b16 %v1871
        %v2375 = vunpack.c.h.b16 %v1871
        %v2376 = vunpack.c.l.b16 %v1872
        %v2377 = vunpack.c.h.b16 %v1872
        %v2378 = vunpack.c.l.b16 %v1873
        %v2379 = vunpack.c.h.b16 %v1873
        %v2380 = vunpack.c.l.b16 %v1874
        %v2381 = vunpack.c.h.b16 %v1874
        %v2382 = vunpack.c.l.b16 %v1875
        %v2383 = vunpack.c.h.b16 %v1875
        %v2384 = vunpack.c.l.b16 %v1876
        %v2385 = vunpack.c.h.b16 %v1876
        %v2386 = vunpack.c.l.b16 %v1877
        %v2387 = vunpack.c.h.b16 %v1877
        %v2388 = vunpack.c.l.b16 %v1878
        %v2389 = vunpack.c.h.b16 %v1878
        %v2390 = vunpack.c.l.b16 %v1879
        %v2391 = vunpack.c.h.b16 %v1879
        %v2392 = vunpack.c.l.b16 %v1880
        %v2393 = vunpack.c.h.b16 %v1880
        %v2394 = vunpack.c.l.b16 %v1881
        %v2395 = vunpack.c.h.b16 %v1881
        %v2396 = vunpack.c.l.b16 %v1882
        %v2397 = vunpack.c.h.b16 %v1882
        %v2398 = vunpack.c.l.b16 %v1883
        %v2399 = vunpack.c.h.b16 %v1883
        %v2400 = vunpack.c.l.b16 %v1884
        %v2401 = vunpack.c.h.b16 %v1884
        %v2402 = vunpack.c.l.b16 %v1885
        %v2403 = vunpack.c.h.b16 %v1885
        %v2404 = vunpack.c.l.b16 %v1886
        %v2405 = vunpack.c.h.b16 %v1886
        %v2406 = vunpack.c.l.b16 %v1887
        %v2407 = vunpack.c.h.b16 %v1887
        %v2408 = vunpack.c.l.b16 %v1888
        %v2409 = vunpack.c.h.b16 %v1888
        %v2410 = vunpack.c.l.b16 %v1889
        %v2411 = vunpack.c.h.b16 %v1889
        %v2412 = vunpack.c.l.b16 %v1890
        %v2413 = vunpack.c.h.b16 %v1890
        %v2414 = vunpack.c.l.b16 %v1891
        %v2415 = vunpack.c.h.b16 %v1891
        %v2416 = vunpack.c.l.b16 %v1892
        %v2417 = vunpack.c.h.b16 %v1892
        %v2418 = vunpack.c.l.b16 %v1893
        %v2419 = vunpack.c.h.b16 %v1893
        %v2420 = vunpack.c.l.b16 %v1894
        %v2421 = vunpack.c.h.b16 %v1894
        %v2422 = vunpack.c.l.b16 %v1895
        %v2423 = vunpack.c.h.b16 %v1895
        %v2424 = vunpack.c.l.b16 %v1896
        %v2425 = vunpack.c.h.b16 %v1896
        %v2426 = vunpack.c.l.b16 %v1897
        %v2427 = vunpack.c.h.b16 %v1897
        %v2428 = vunpack.c.l.b16 %v1898
        %v2429 = vunpack.c.h.b16 %v1898
        %v2430 = vunpack.c.l.b16 %v1899
        %v2431 = vunpack.c.h.b16 %v1899
        %v2432 = vunpack.c.l.b16 %v1900
        %v2433 = vunpack.c.h.b16 %v1900
        %v2434 = vunpack.c.l.b16 %v1901
        %v2435 = vunpack.c.h.b16 %v1901
        %v2436 = vunpack.c.l.b16 %v1902
        %v2437 = vunpack.c.h.b16 %v1902
        %v2438 = vunpack.c.l.b16 %v1903
        %v2439 = vunpack.c.h.b16 %v1903
        %v2440 = vunpack.c.l.b16 %v1904
        %v2441 = vunpack.c.h.b16 %v1904
        %v2442 = vunpack.c.l.b16 %v1905
        %v2443 = vunpack.c.h.b16 %v1905
        %v2444 = vunpack.c.l.b16 %v1906
        %v2445 = vunpack.c.h.b16 %v1906
        %v2446 = vunpack.c.l.b16 %v1907
        %v2447 = vunpack.c.h.b16 %v1907
        %v2448 = vunpack.c.l.b16 %v1908
        %v2449 = vunpack.c.h.b16 %v1908
        %v2450 = vunpack.c.l.b16 %v1909
        %v2451 = vunpack.c.h.b16 %v1909
        %v2452 = vunpack.c.l.b16 %v1910
        %v2453 = vunpack.c.h.b16 %v1910
        %v2454 = vunpack.c.l.b16 %v1911
        %v2455 = vunpack.c.h.b16 %v1911
        %v2456 = vunpack.c.l.b16 %v1912
        %v2457 = vunpack.c.h.b16 %v1912
        %v2458 = vunpack.c.l.b16 %v1913
        %v2459 = vunpack.c.h.b16 %v1913
        %v2460 = vunpack.c.l.b16 %v1914
        %v2461 = vunpack.c.h.b16 %v1914
        %v2462 = vpack.c.b16 %v2338, %v2334
        %v2463 = vpack.c.b16 %v2339, %v2335
        %v2464 = vpack.c.b16 %v2340, %v2336
        %v2465 = vpack.c.b16 %v2341, %v2337
        %v2466 = vpack.c.b16 %v2346, %v2342
        %v2467 = vpack.c.b16 %v2347, %v2343
        %v2468 = vpack.c.b16 %v2348, %v2344
        %v2469 = vpack.c.b16 %v2349, %v2345
        %v2470 = vpack.c.b16 %v2354, %v2350
        %v2471 = vpack.c.b16 %v2355, %v2351
        %v2472 = vpack.c.b16 %v2356, %v2352
        %v2473 = vpack.c.b16 %v2357, %v2353
        %v2474 = vpack.c.b16 %v2362, %v2358
        %v2475 = vpack.c.b16 %v2363, %v2359
        %v2476 = vpack.c.b16 %v2364, %v2360
        %v2477 = vpack.c.b16 %v2365, %v2361
        %v2478 = vpack.c.b16 %v2370, %v2366
        %v2479 = vpack.c.b16 %v2371, %v2367
        %v2480 = vpack.c.b16 %v2372, %v2368
        %v2481 = vpack.c.b16 %v2373, %v2369
        %v2482 = vpack.c.b16 %v2378, %v2374
        %v2483 = vpack.c.b16 %v2379, %v2375
        %v2484 = vpack.c.b16 %v2380, %v2376
        %v2485 = vpack.c.b16 %v2381, %v2377
        %v2486 = vpack.c.b16 %v2386, %v2382
        %v2487 = vpack.c.b16 %v2387, %v2383
        %v2488 = vpack.c.b16 %v2388, %v2384
        %v2489 = vpack.c.b16 %v2389, %v2385
        %v2490 = vpack.c.b16 %v2394, %v2390
        %v2491 = vpack.c.b16 %v2395, %v2391
        %v2492 = vpack.c.b16 %v2396, %v2392
        %v2493 = vpack.c.b16 %v2397, %v2393
        %v2494 = vpack.c.b16 %v2402, %v2398
        %v2495 = vpack.c.b16 %v2403, %v2399
        %v2496 = vpack.c.b16 %v2404, %v2400
        %v2497 = vpack.c.b16 %v2405, %v2401
        %v2498 = vpack.c.b16 %v2410, %v2406
        %v2499 = vpack.c.b16 %v2411, %v2407
        %v2500 = vpack.c.b16 %v2412, %v2408
        %v2501 = vpack.c.b16 %v2413, %v2409
        %v2502 = vpack.c.b16 %v2418, %v2414
        %v2503 = vpack.c.b16 %v2419, %v2415
        %v2504 = vpack.c.b16 %v2420, %v2416
        %v2505 = vpack.c.b16 %v2421, %v2417
        %v2506 = vpack.c.b16 %v2426, %v2422
        %v2507 = vpack.c.b16 %v2427, %v2423
        %v2508 = vpack.c.b16 %v2428, %v2424
        %v2509 = vpack.c.b16 %v2429, %v2425
        %v2510 = vpack.c.b16 %v2434, %v2430
        %v2511 = vpack.c.b16 %v2435, %v2431
        %v2512 = vpack.c.b16 %v2436, %v2432
        %v2513 = vpack.c.b16 %v2437, %v2433
        %v2514 = vpack.c.b16 %v2442, %v2438
        %v2515 = vpack.c.b16 %v2443, %v2439
        %v2516 = vpack.c.b16 %v2444, %v2440
        %v2517 = vpack.c.b16 %v2445, %v2441
        %v2518 = vpack.c.b16 %v2450, %v2446
        %v2519 = vpack.c.b16 %v2451, %v2447
        %v2520 = vpack.c.b16 %v2452, %v2448
        %v2521 = vpack.c.b16 %v2453, %v2449
        %v2522 = vpack.c.b16 %v2458, %v2454
        %v2523 = vpack.c.b16 %v2459, %v2455
        %v2524 = vpack.c.b16 %v2460, %v2456
        %v2525 = vpack.c.b16 %v2461, %v2457
        %2590 = vmatprep.subr.bf16.mxu0 %v2463
        %2591 = vmatpush1.bf16.msra.mxu0 %v2462
        %2592 = vmatprep.subr.bf16.mxu0 %v2467
        %2593 = vmatpush1.bf16.msra.mxu0 %v2466
        %2594 = vmatprep.subr.bf16.mxu0 %v2471
        %2595 = vmatpush1.bf16.msra.mxu0 %v2470
        %2596 = vmatprep.subr.bf16.mxu0 %v2475
        %2597 = vmatpush1.bf16.msra.mxu0 %v2474
        %2598 = vmatprep.subr.bf16.mxu0 %v2479
        %2599 = vmatpush1.bf16.msra.mxu0 %v2478
        %2600 = vmatprep.subr.bf16.mxu0 %v2483
        %2601 = vmatpush1.bf16.msra.mxu0 %v2482
        %2602 = vmatprep.subr.bf16.mxu0 %v2487
        %2603 = vmatpush1.bf16.msra.mxu0 %v2486
        %2604 = vmatprep.subr.bf16.mxu0 %v2491
        %2605 = vmatpush1.bf16.msra.mxu0 %v2490
        %2606 = vmatprep.subr.bf16.mxu0 %v2495
        %2607 = vmatpush1.bf16.msra.mxu0 %v2494
        %2608 = vmatprep.subr.bf16.mxu0 %v2499
        %2609 = vmatpush1.bf16.msra.mxu0 %v2498
        %2610 = vmatprep.subr.bf16.mxu0 %v2503
        %2611 = vmatpush1.bf16.msra.mxu0 %v2502
        %2612 = vmatprep.subr.bf16.mxu0 %v2507
        %2613 = vmatpush1.bf16.msra.mxu0 %v2506
        %2614 = vmatprep.subr.bf16.mxu0 %v2511
        %2615 = vmatpush1.bf16.msra.mxu0 %v2510
        %2616 = vmatprep.subr.bf16.mxu0 %v2515
        %2617 = vmatpush1.bf16.msra.mxu0 %v2514
        %2618 = vmatprep.subr.bf16.mxu0 %v2519
        %2619 = vmatpush1.bf16.msra.mxu0 %v2518
        %2620 = vmatprep.subr.bf16.mxu0 %v2523
        %2621 = vmatpush1.bf16.msra.mxu0 %v2522
        %2622 = vmatprep.mubr.bf16.mxu0 %v2246
        %2623 = vmatmul.mubr.bf16.gmra.mrb[0].mxu0 %v2245
        %v2624 = vpop.f32.mrb[0].mxu0
        %v2625 = vadd.f32 %v2253, %v2624
        %v2626 = vpop.f32.mrb[0].mxu0
        %v2627 = vadd.f32 %v2257, %v2626
        %v2628 = vpop.f32.mrb[0].mxu0
        %v2629 = vpop.f32.mrb[0].mxu0
        %2630 = vdwg.mxu0
        %2631 = vmatprep.subr.bf16.mxu0 %v2465
        %2632 = vmatpush1.bf16.msra.mxu0 %v2464
        %2633 = vmatprep.subr.bf16.mxu0 %v2469
        %2634 = vmatpush1.bf16.msra.mxu0 %v2468
        %2635 = vmatprep.subr.bf16.mxu0 %v2473
        %2636 = vmatpush1.bf16.msra.mxu0 %v2472
        %2637 = vmatprep.subr.bf16.mxu0 %v2477
        %2638 = vmatpush1.bf16.msra.mxu0 %v2476
        %2639 = vmatprep.subr.bf16.mxu0 %v2481
        %2640 = vmatpush1.bf16.msra.mxu0 %v2480
        %2641 = vmatprep.subr.bf16.mxu0 %v2485
        %2642 = vmatpush1.bf16.msra.mxu0 %v2484
        %2643 = vmatprep.subr.bf16.mxu0 %v2489
        %2644 = vmatpush1.bf16.msra.mxu0 %v2488
        %2645 = vmatprep.subr.bf16.mxu0 %v2493
        %2646 = vmatpush1.bf16.msra.mxu0 %v2492
        %2647 = vmatprep.subr.bf16.mxu0 %v2497
        %2648 = vmatpush1.bf16.msra.mxu0 %v2496
        %2649 = vmatprep.subr.bf16.mxu0 %v2501
        %2650 = vmatpush1.bf16.msra.mxu0 %v2500
        %2651 = vmatprep.subr.bf16.mxu0 %v2505
        %2652 = vmatpush1.bf16.msra.mxu0 %v2504
        %2653 = vmatprep.subr.bf16.mxu0 %v2509
        %2654 = vmatpush1.bf16.msra.mxu0 %v2508
        %2655 = vmatprep.subr.bf16.mxu0 %v2513
        %2656 = vmatpush1.bf16.msra.mxu0 %v2512
        %2657 = vmatprep.subr.bf16.mxu0 %v2517
        %2658 = vmatpush1.bf16.msra.mxu0 %v2516
        %2659 = vmatprep.subr.bf16.mxu0 %v2521
        %2660 = vmatpush1.bf16.msra.mxu0 %v2520
        %2661 = vmatprep.subr.bf16.mxu0 %v2525
        %2662 = vmatpush1.bf16.msra.mxu0 %v2524
        %2663 = vmatprep.mubr.bf16.mxu0 %v2246
        %2664 = vmatmul.mubr.bf16.gmra.mrb[0].mxu0 %v2245
        %v2665 = vpop.f32.mrb[0].mxu0
        %v2666 = vadd.f32 %v2261, %v2665
        %v2667 = vpop.f32.mrb[0].mxu0
        %v2668 = vadd.f32 %v2265, %v2667
        %v2669 = vpop.f32.mrb[0].mxu0
        %v2670 = vpop.f32.mrb[0].mxu0
        %2671 = vdwg.mxu0
        %v2672 = vmax.f32 %v2625, 0.0
        %v2673 = vmax.f32 %v2627, 0.0
        %v2674 = vmax.f32 %v2666, 0.0
        %v2675 = vmax.f32 %v2668, 0.0
        %v2676 = vpack.c.bf16 %v2672, %v2672
        %v2677 = vpack.c.bf16 %v2673, %v2673
        %v2678 = vpack.c.bf16 %v2674, %v2674
        %v2679 = vpack.c.bf16 %v2675, %v2675
        %s2680 = scalar_lea.vmem [#allocation11], 34
        %v2681 = vld [vmem:[%s2680] ss:$8 sm:$0x3]
        %v2683 = vlaneseq
        %v2684 = vshrl.u32 %v2683, 7
        %v2685 = vsub.s32 0, %v2684
        %v2686 = vrot.slane %v2681, %v2685
        %v2687 = vlaneseq
        %v2688 = vshrl.u32 %v2687, 7
        %v2689 = vsub.s32 1, %v2688
        %v2690 = vrot.slane %v2681, %v2689
        %v2757 = vunpack.c.l.b16 %v1915
        %v2758 = vunpack.c.h.b16 %v1915
        %v2759 = vunpack.c.l.b16 %v1916
        %v2760 = vunpack.c.h.b16 %v1916
        %v2761 = vunpack.c.l.b16 %v1917
        %v2762 = vunpack.c.h.b16 %v1917
        %v2763 = vunpack.c.l.b16 %v1918
        %v2764 = vunpack.c.h.b16 %v1918
        %v2765 = vunpack.c.l.b16 %v1919
        %v2766 = vunpack.c.h.b16 %v1919
        %v2767 = vunpack.c.l.b16 %v1920
        %v2768 = vunpack.c.h.b16 %v1920
        %v2769 = vunpack.c.l.b16 %v1921
        %v2770 = vunpack.c.h.b16 %v1921
        %v2771 = vunpack.c.l.b16 %v1922
        %v2772 = vunpack.c.h.b16 %v1922
        %v2773 = vunpack.c.l.b16 %v1923
        %v2774 = vunpack.c.h.b16 %v1923
        %v2775 = vunpack.c.l.b16 %v1924
        %v2776 = vunpack.c.h.b16 %v1924
        %v2777 = vunpack.c.l.b16 %v1925
        %v2778 = vunpack.c.h.b16 %v1925
        %v2779 = vunpack.c.l.b16 %v1926
        %v2780 = vunpack.c.h.b16 %v1926
        %v2781 = vunpack.c.l.b16 %v1927
        %v2782 = vunpack.c.h.b16 %v1927
        %v2783 = vunpack.c.l.b16 %v1928
        %v2784 = vunpack.c.h.b16 %v1928
        %v2785 = vunpack.c.l.b16 %v1929
        %v2786 = vunpack.c.h.b16 %v1929
        %v2787 = vunpack.c.l.b16 %v1930
        %v2788 = vunpack.c.h.b16 %v1930
        %v2789 = vunpack.c.l.b16 %v1931
        %v2790 = vunpack.c.h.b16 %v1931
        %v2791 = vunpack.c.l.b16 %v1932
        %v2792 = vunpack.c.h.b16 %v1932
        %v2793 = vunpack.c.l.b16 %v1933
        %v2794 = vunpack.c.h.b16 %v1933
        %v2795 = vunpack.c.l.b16 %v1934
        %v2796 = vunpack.c.h.b16 %v1934
        %v2797 = vunpack.c.l.b16 %v1935
        %v2798 = vunpack.c.h.b16 %v1935
        %v2799 = vunpack.c.l.b16 %v1936
        %v2800 = vunpack.c.h.b16 %v1936
        %v2801 = vunpack.c.l.b16 %v1937
        %v2802 = vunpack.c.h.b16 %v1937
        %v2803 = vunpack.c.l.b16 %v1938
        %v2804 = vunpack.c.h.b16 %v1938
        %v2805 = vunpack.c.l.b16 %v1939
        %v2806 = vunpack.c.h.b16 %v1939
        %v2807 = vunpack.c.l.b16 %v1940
        %v2808 = vunpack.c.h.b16 %v1940
        %v2809 = vunpack.c.l.b16 %v1941
        %v2810 = vunpack.c.h.b16 %v1941
        %v2811 = vunpack.c.l.b16 %v1942
        %v2812 = vunpack.c.h.b16 %v1942
        %v2813 = vunpack.c.l.b16 %v1943
        %v2814 = vunpack.c.h.b16 %v1943
        %v2815 = vunpack.c.l.b16 %v1944
        %v2816 = vunpack.c.h.b16 %v1944
        %v2817 = vunpack.c.l.b16 %v1945
        %v2818 = vunpack.c.h.b16 %v1945
        %v2819 = vunpack.c.l.b16 %v1946
        %v2820 = vunpack.c.h.b16 %v1946
        %v2821 = vunpack.c.l.b16 %v1947
        %v2822 = vunpack.c.h.b16 %v1947
        %v2823 = vunpack.c.l.b16 %v1948
        %v2824 = vunpack.c.h.b16 %v1948
        %v2825 = vunpack.c.l.b16 %v1949
        %v2826 = vunpack.c.h.b16 %v1949
        %v2827 = vunpack.c.l.b16 %v1950
        %v2828 = vunpack.c.h.b16 %v1950
        %v2829 = vunpack.c.l.b16 %v1951
        %v2830 = vunpack.c.h.b16 %v1951
        %v2831 = vunpack.c.l.b16 %v1952
        %v2832 = vunpack.c.h.b16 %v1952
        %v2833 = vunpack.c.l.b16 %v1953
        %v2834 = vunpack.c.h.b16 %v1953
        %v2835 = vunpack.c.l.b16 %v1954
        %v2836 = vunpack.c.h.b16 %v1954
        %v2837 = vunpack.c.l.b16 %v1955
        %v2838 = vunpack.c.h.b16 %v1955
        %v2839 = vunpack.c.l.b16 %v1956
        %v2840 = vunpack.c.h.b16 %v1956
        %v2841 = vunpack.c.l.b16 %v1957
        %v2842 = vunpack.c.h.b16 %v1957
        %v2843 = vunpack.c.l.b16 %v1958
        %v2844 = vunpack.c.h.b16 %v1958
        %v2845 = vunpack.c.l.b16 %v1959
        %v2846 = vunpack.c.h.b16 %v1959
        %v2847 = vunpack.c.l.b16 %v1960
        %v2848 = vunpack.c.h.b16 %v1960
        %v2849 = vunpack.c.l.b16 %v1961
        %v2850 = vunpack.c.h.b16 %v1961
        %v2851 = vunpack.c.l.b16 %v1962
        %v2852 = vunpack.c.h.b16 %v1962
        %v2853 = vunpack.c.l.b16 %v1963
        %v2854 = vunpack.c.h.b16 %v1963
        %v2855 = vunpack.c.l.b16 %v1964
        %v2856 = vunpack.c.h.b16 %v1964
        %v2857 = vunpack.c.l.b16 %v1965
        %v2858 = vunpack.c.h.b16 %v1965
        %v2859 = vunpack.c.l.b16 %v1966
        %v2860 = vunpack.c.h.b16 %v1966
        %v2861 = vunpack.c.l.b16 %v1967
        %v2862 = vunpack.c.h.b16 %v1967
        %v2863 = vunpack.c.l.b16 %v1968
        %v2864 = vunpack.c.h.b16 %v1968
        %v2865 = vunpack.c.l.b16 %v1969
        %v2866 = vunpack.c.h.b16 %v1969
        %v2867 = vunpack.c.l.b16 %v1970
        %v2868 = vunpack.c.h.b16 %v1970
        %v2869 = vunpack.c.l.b16 %v1971
        %v2870 = vunpack.c.h.b16 %v1971
        %v2871 = vunpack.c.l.b16 %v1972
        %v2872 = vunpack.c.h.b16 %v1972
        %v2873 = vunpack.c.l.b16 %v1973
        %v2874 = vunpack.c.h.b16 %v1973
        %v2875 = vunpack.c.l.b16 %v1974
        %v2876 = vunpack.c.h.b16 %v1974
        %v2877 = vunpack.c.l.b16 %v1975
        %v2878 = vunpack.c.h.b16 %v1975
        %v2879 = vunpack.c.l.b16 %v1976
        %v2880 = vunpack.c.h.b16 %v1976
        %v2881 = vunpack.c.l.b16 %v1977
        %v2882 = vunpack.c.h.b16 %v1977
        %v2883 = vunpack.c.l.b16 %v1978
        %v2884 = vunpack.c.h.b16 %v1978
        %v2885 = vpack.c.b16 %v2759, %v2757
        %v2886 = vpack.c.b16 %v2760, %v2758
        %v2887 = vpack.c.b16 %v2763, %v2761
        %v2888 = vpack.c.b16 %v2764, %v2762
        %v2889 = vpack.c.b16 %v2767, %v2765
        %v2890 = vpack.c.b16 %v2768, %v2766
        %v2891 = vpack.c.b16 %v2771, %v2769
        %v2892 = vpack.c.b16 %v2772, %v2770
        %v2893 = vpack.c.b16 %v2775, %v2773
        %v2894 = vpack.c.b16 %v2776, %v2774
        %v2895 = vpack.c.b16 %v2779, %v2777
        %v2896 = vpack.c.b16 %v2780, %v2778
        %v2897 = vpack.c.b16 %v2783, %v2781
        %v2898 = vpack.c.b16 %v2784, %v2782
        %v2899 = vpack.c.b16 %v2787, %v2785
        %v2900 = vpack.c.b16 %v2788, %v2786
        %v2901 = vpack.c.b16 %v2791, %v2789
        %v2902 = vpack.c.b16 %v2792, %v2790
        %v2903 = vpack.c.b16 %v2795, %v2793
        %v2904 = vpack.c.b16 %v2796, %v2794
        %v2905 = vpack.c.b16 %v2799, %v2797
        %v2906 = vpack.c.b16 %v2800, %v2798
        %v2907 = vpack.c.b16 %v2803, %v2801
        %v2908 = vpack.c.b16 %v2804, %v2802
        %v2909 = vpack.c.b16 %v2807, %v2805
        %v2910 = vpack.c.b16 %v2808, %v2806
        %v2911 = vpack.c.b16 %v2811, %v2809
        %v2912 = vpack.c.b16 %v2812, %v2810
        %v2913 = vpack.c.b16 %v2815, %v2813
        %v2914 = vpack.c.b16 %v2816, %v2814
        %v2915 = vpack.c.b16 %v2819, %v2817
        %v2916 = vpack.c.b16 %v2820, %v2818
        %v2917 = vpack.c.b16 %v2823, %v2821
        %v2918 = vpack.c.b16 %v2824, %v2822
        %v2919 = vpack.c.b16 %v2827, %v2825
        %v2920 = vpack.c.b16 %v2828, %v2826
        %v2921 = vpack.c.b16 %v2831, %v2829
        %v2922 = vpack.c.b16 %v2832, %v2830
        %v2923 = vpack.c.b16 %v2835, %v2833
        %v2924 = vpack.c.b16 %v2836, %v2834
        %v2925 = vpack.c.b16 %v2839, %v2837
        %v2926 = vpack.c.b16 %v2840, %v2838
        %v2927 = vpack.c.b16 %v2843, %v2841
        %v2928 = vpack.c.b16 %v2844, %v2842
        %v2929 = vpack.c.b16 %v2847, %v2845
        %v2930 = vpack.c.b16 %v2848, %v2846
        %v2931 = vpack.c.b16 %v2851, %v2849
        %v2932 = vpack.c.b16 %v2852, %v2850
        %v2933 = vpack.c.b16 %v2855, %v2853
        %v2934 = vpack.c.b16 %v2856, %v2854
        %v2935 = vpack.c.b16 %v2859, %v2857
        %v2936 = vpack.c.b16 %v2860, %v2858
        %v2937 = vpack.c.b16 %v2863, %v2861
        %v2938 = vpack.c.b16 %v2864, %v2862
        %v2939 = vpack.c.b16 %v2867, %v2865
        %v2940 = vpack.c.b16 %v2868, %v2866
        %v2941 = vpack.c.b16 %v2871, %v2869
        %v2942 = vpack.c.b16 %v2872, %v2870
        %v2943 = vpack.c.b16 %v2875, %v2873
        %v2944 = vpack.c.b16 %v2876, %v2874
        %v2945 = vpack.c.b16 %v2879, %v2877
        %v2946 = vpack.c.b16 %v2880, %v2878
        %v2947 = vpack.c.b16 %v2883, %v2881
        %v2948 = vpack.c.b16 %v2884, %v2882
        %3013 = vmatprep.subr.bf16.mxu0 %v2886
        %3014 = vmatpush1.bf16.msra.mxu0 %v2885
        %3015 = vmatprep.subr.bf16.mxu0 %v2888
        %3016 = vmatpush1.bf16.msra.mxu0 %v2887
        %3017 = vmatprep.subr.bf16.mxu0 %v2890
        %3018 = vmatpush1.bf16.msra.mxu0 %v2889
        %3019 = vmatprep.subr.bf16.mxu0 %v2892
        %3020 = vmatpush1.bf16.msra.mxu0 %v2891
        %3021 = vmatprep.subr.bf16.mxu0 %v2894
        %3022 = vmatpush1.bf16.msra.mxu0 %v2893
        %3023 = vmatprep.subr.bf16.mxu0 %v2896
        %3024 = vmatpush1.bf16.msra.mxu0 %v2895
        %3025 = vmatprep.subr.bf16.mxu0 %v2898
        %3026 = vmatpush1.bf16.msra.mxu0 %v2897
        %3027 = vmatprep.subr.bf16.mxu0 %v2900
        %3028 = vmatpush1.bf16.msra.mxu0 %v2899
        %3029 = vmatprep.subr.bf16.mxu0 %v2902
        %3030 = vmatpush1.bf16.msra.mxu0 %v2901
        %3031 = vmatprep.subr.bf16.mxu0 %v2904
        %3032 = vmatpush1.bf16.msra.mxu0 %v2903
        %3033 = vmatprep.subr.bf16.mxu0 %v2906
        %3034 = vmatpush1.bf16.msra.mxu0 %v2905
        %3035 = vmatprep.subr.bf16.mxu0 %v2908
        %3036 = vmatpush1.bf16.msra.mxu0 %v2907
        %3037 = vmatprep.subr.bf16.mxu0 %v2910
        %3038 = vmatpush1.bf16.msra.mxu0 %v2909
        %3039 = vmatprep.subr.bf16.mxu0 %v2912
        %3040 = vmatpush1.bf16.msra.mxu0 %v2911
        %3041 = vmatprep.subr.bf16.mxu0 %v2914
        %3042 = vmatpush1.bf16.msra.mxu0 %v2913
        %3043 = vmatprep.subr.bf16.mxu0 %v2916
        %3044 = vmatpush1.bf16.msra.mxu0 %v2915
        %3045 = vmatprep.mubr.bf16.mxu0 %v2677
        %3046 = vmatmul.mubr.bf16.gmra.mrb[0].mxu0 %v2676
        %v3047 = vpop.f32.mrb[0].mxu0
        %v3048 = vadd.f32 %v2686, %v3047
        %v3049 = vpop.f32.mrb[0].mxu0
        %v3050 = vadd.f32 %v2690, %v3049
        %v3051 = vpop.f32.mrb[0].mxu0
        %v3052 = vpop.f32.mrb[0].mxu0
        %3053 = vdwg.mxu0
        %3054 = vmatprep.subr.bf16.mxu0 %v2918
        %3055 = vmatpush1.bf16.msra.mxu0 %v2917
        %3056 = vmatprep.subr.bf16.mxu0 %v2920
        %3057 = vmatpush1.bf16.msra.mxu0 %v2919
        %3058 = vmatprep.subr.bf16.mxu0 %v2922
        %3059 = vmatpush1.bf16.msra.mxu0 %v2921
        %3060 = vmatprep.subr.bf16.mxu0 %v2924
        %3061 = vmatpush1.bf16.msra.mxu0 %v2923
        %3062 = vmatprep.subr.bf16.mxu0 %v2926
        %3063 = vmatpush1.bf16.msra.mxu0 %v2925
        %3064 = vmatprep.subr.bf16.mxu0 %v2928
        %3065 = vmatpush1.bf16.msra.mxu0 %v2927
        %3066 = vmatprep.subr.bf16.mxu0 %v2930
        %3067 = vmatpush1.bf16.msra.mxu0 %v2929
        %3068 = vmatprep.subr.bf16.mxu0 %v2932
        %3069 = vmatpush1.bf16.msra.mxu0 %v2931
        %3070 = vmatprep.subr.bf16.mxu0 %v2934
        %3071 = vmatpush1.bf16.msra.mxu0 %v2933
        %3072 = vmatprep.subr.bf16.mxu0 %v2936
        %3073 = vmatpush1.bf16.msra.mxu0 %v2935
        %3074 = vmatprep.subr.bf16.mxu0 %v2938
        %3075 = vmatpush1.bf16.msra.mxu0 %v2937
        %3076 = vmatprep.subr.bf16.mxu0 %v2940
        %3077 = vmatpush1.bf16.msra.mxu0 %v2939
        %3078 = vmatprep.subr.bf16.mxu0 %v2942
        %3079 = vmatpush1.bf16.msra.mxu0 %v2941
        %3080 = vmatprep.subr.bf16.mxu0 %v2944
        %3081 = vmatpush1.bf16.msra.mxu0 %v2943
        %3082 = vmatprep.subr.bf16.mxu0 %v2946
        %3083 = vmatpush1.bf16.msra.mxu0 %v2945
        %3084 = vmatprep.subr.bf16.mxu0 %v2948
        %3085 = vmatpush1.bf16.msra.mxu0 %v2947
        %3086 = vmatprep.mubr.bf16.mxu0 %v2679
        %3087 = vmatmul.mubr.bf16.gmra.mrb[0].mxu0 %v2678
        %v3088 = vpop.f32.mrb[0].mxu0
        %v3089 = vadd.f32 %v3048, %v3088
        %v3090 = vpop.f32.mrb[0].mxu0
        %v3091 = vadd.f32 %v3050, %v3090
        %v3092 = vpop.f32.mrb[0].mxu0
        %v3093 = vpop.f32.mrb[0].mxu0
        %3094 = vdwg.mxu0
        %v3095 = vadd.f32 %v2243, %v3089
        %v3096 = vadd.f32 %v2244, %v3091
        %s3097 = scalar_lea.vmem [#allocation11], 37
        %v3098 = vld [vmem:[%s3097] ss:$8 sm:$0x3]
        %s3099 = scalar_lea.vmem [#allocation11], 38
        %v3100 = vld [vmem:[%s3099] ss:$8 sm:$0x3]
        %v3101 = vadd.f32 %v3095, %v3096
        %3102 = vadd.xlane.f32.xlu0 %v3101
        %v3103 = vpop.xlane.xlu0 %3102
        %v3104 = vmul.f32 %v3103, %v877
        %v3105 = vmul.f32 %v3095, %v3095
        %v3106 = vmul.f32 %v3096, %v3096
        %v3107 = vadd.f32 %v3105, %v3106
        %3108 = vadd.xlane.f32.xlu0 %v3107
        %v3109 = vpop.xlane.xlu0 %3108
        %v3110 = vmul.f32 %v3109, %v877
        %v3111 = vmul.f32 %v3104, %v3104
        %v3112 = vsub.f32 %v3110, %v3111
        %v3113 = vsub.f32 %v3095, %v3104
        %v3114 = vsub.f32 %v3096, %v3104
        %v3115 = vadd.f32 %v3112, 1e-05
        %v3116 = vrsqrt.pop %v3115
        %v3117 = vmul.f32 %v3113, %v3116
        %v3118 = vmul.f32 %v3114, %v3116
        %v3120 = vlaneseq
        %v3121 = vshrl.u32 %v3120, 7
        %v3122 = vsub.s32 0, %v3121
        %v3123 = vrot.slane %v3098, %v3122
        %v3124 = vlaneseq
        %v3125 = vshrl.u32 %v3124, 7
        %v3126 = vsub.s32 1, %v3125
        %v3127 = vrot.slane %v3098, %v3126
        %v3130 = vmul.f32 %v3117, %v3123
        %v3131 = vmul.f32 %v3118, %v3127
        %v3133 = vlaneseq
        %v3134 = vshrl.u32 %v3133, 7
        %v3135 = vsub.s32 0, %v3134
        %v3136 = vrot.slane %v3100, %v3135
        %v3137 = vlaneseq
        %v3138 = vshrl.u32 %v3137, 7
        %v3139 = vsub.s32 1, %v3138
        %v3140 = vrot.slane %v3100, %v3139
        %v3143 = vadd.f32 %v3130, %v3136
        %v3144 = vadd.f32 %v3131, %v3140
        %v3145 = vld [vmem:[#allocation5 + $0x30] sm:$0xf]
        %v3146 = vld [vmem:[#allocation5 + $0x64] sm:$0xf]
        %v3147 = vld [vmem:[#allocation5 + $0x98] sm:$0xf]
        %v3148 = vld [vmem:[#allocation5 + $0xcc] sm:$0xf]
        %v3149 = vld [vmem:[#allocation5 + $0x100] sm:$0xf]
        %v3150 = vld [vmem:[#allocation5 + $0x134] sm:$0xf]
        %v3151 = vld [vmem:[#allocation5 + $0x168] sm:$0xf]
        %v3152 = vld [vmem:[#allocation5 + $0x19c] sm:$0xf]
        %v3153 = vld [vmem:[#allocation5 + $0x1d0] sm:$0xf]
        %v3154 = vld [vmem:[#allocation5 + $0x204] sm:$0xf]
        %v3155 = vld [vmem:[#allocation5 + $0x238] sm:$0xf]
        %v3156 = vld [vmem:[#allocation5 + $0x26c] sm:$0xf]
        %v3157 = vld [vmem:[#allocation5 + $0x2a0] sm:$0xf]
        %v3158 = vld [vmem:[#allocation5 + $0x2d4] sm:$0xf]
        %v3159 = vld [vmem:[#allocation5 + $0x308] sm:$0xf]
        %v3160 = vld [vmem:[#allocation5 + $0x33c] sm:$0xf]
        %v3161 = vld [vmem:[#allocation5 + $0x370] sm:$0xf]
        %v3162 = vld [vmem:[#allocation5 + $0x3a4] sm:$0xf]
        %v3163 = vld [vmem:[#allocation5 + $0x3d8] sm:$0xf]
        %v3164 = vld [vmem:[#allocation5 + $0x40c] sm:$0xf]
        %v3165 = vld [vmem:[#allocation5 + $0x440] sm:$0xf]
        %v3166 = vld [vmem:[#allocation5 + $0x474] sm:$0xf]
        %v3167 = vld [vmem:[#allocation5 + $0x4a8] sm:$0xf]
        %v3168 = vld [vmem:[#allocation5 + $0x4dc] sm:$0xf]
        %v3169 = vld [vmem:[#allocation5 + $0x510] sm:$0xf]
        %v3170 = vld [vmem:[#allocation5 + $0x544] sm:$0xf]
        %v3171 = vld [vmem:[#allocation5 + $0x578] sm:$0xf]
        %v3172 = vld [vmem:[#allocation5 + $0x5ac] sm:$0xf]
        %v3173 = vld [vmem:[#allocation5 + $0x5e0] sm:$0xf]
        %v3174 = vld [vmem:[#allocation5 + $0x614] sm:$0xf]
        %v3175 = vld [vmem:[#allocation5 + $0x648] sm:$0xf]
        %v3176 = vld [vmem:[#allocation5 + $0x67c] sm:$0xf]
        %v3177 = vpack.c.bf16 %v3143, %v3143
        %v3178 = vpack.c.bf16 %v3144, %v3144
        %v3179 = vld [vmem:[#allocation11 + $0x27] ss:$0 sm:$0xff]
        %v3212 = vunpack.c.l.b16 %v3145
        %v3213 = vunpack.c.l.b16 %v3146
        %v3214 = vunpack.c.l.b16 %v3147
        %v3215 = vunpack.c.l.b16 %v3148
        %v3216 = vunpack.c.l.b16 %v3149
        %v3217 = vunpack.c.l.b16 %v3150
        %v3218 = vunpack.c.l.b16 %v3151
        %v3219 = vunpack.c.l.b16 %v3152
        %v3220 = vunpack.c.l.b16 %v3153
        %v3221 = vunpack.c.l.b16 %v3154
        %v3222 = vunpack.c.l.b16 %v3155
        %v3223 = vunpack.c.l.b16 %v3156
        %v3224 = vunpack.c.l.b16 %v3157
        %v3225 = vunpack.c.l.b16 %v3158
        %v3226 = vunpack.c.l.b16 %v3159
        %v3227 = vunpack.c.l.b16 %v3160
        %v3228 = vunpack.c.l.b16 %v3161
        %v3229 = vunpack.c.l.b16 %v3162
        %v3230 = vunpack.c.l.b16 %v3163
        %v3231 = vunpack.c.l.b16 %v3164
        %v3232 = vunpack.c.l.b16 %v3165
        %v3233 = vunpack.c.l.b16 %v3166
        %v3234 = vunpack.c.l.b16 %v3167
        %v3235 = vunpack.c.l.b16 %v3168
        %v3236 = vunpack.c.l.b16 %v3169
        %v3237 = vunpack.c.l.b16 %v3170
        %v3238 = vunpack.c.l.b16 %v3171
        %v3239 = vunpack.c.l.b16 %v3172
        %v3240 = vunpack.c.l.b16 %v3173
        %v3241 = vunpack.c.l.b16 %v3174
        %v3242 = vunpack.c.l.b16 %v3175
        %v3243 = vunpack.c.l.b16 %v3176
        %v3244 = vpack.c.b16 %v3213, %v3212
        %v3245 = vpack.c.b16 %v3215, %v3214
        %v3246 = vpack.c.b16 %v3217, %v3216
        %v3247 = vpack.c.b16 %v3219, %v3218
        %v3248 = vpack.c.b16 %v3221, %v3220
        %v3249 = vpack.c.b16 %v3223, %v3222
        %v3250 = vpack.c.b16 %v3225, %v3224
        %v3251 = vpack.c.b16 %v3227, %v3226
        %v3252 = vpack.c.b16 %v3229, %v3228
        %v3253 = vpack.c.b16 %v3231, %v3230
        %v3254 = vpack.c.b16 %v3233, %v3232
        %v3255 = vpack.c.b16 %v3235, %v3234
        %v3256 = vpack.c.b16 %v3237, %v3236
        %v3257 = vpack.c.b16 %v3239, %v3238
        %v3258 = vpack.c.b16 %v3241, %v3240
        %v3259 = vpack.c.b16 %v3243, %v3242
        %3276 = vmatprep.subr.bf16.mxu0 0
        %3277 = vmatpush1.bf16.msra.mxu0 %v3244
        %3278 = vmatprep.subr.bf16.mxu0 0
        %3279 = vmatpush1.bf16.msra.mxu0 %v3245
        %3280 = vmatprep.subr.bf16.mxu0 0
        %3281 = vmatpush1.bf16.msra.mxu0 %v3246
        %3282 = vmatprep.subr.bf16.mxu0 0
        %3283 = vmatpush1.bf16.msra.mxu0 %v3247
        %3284 = vmatprep.subr.bf16.mxu0 0
        %3285 = vmatpush1.bf16.msra.mxu0 %v3248
        %3286 = vmatprep.subr.bf16.mxu0 0
        %3287 = vmatpush1.bf16.msra.mxu0 %v3249
        %3288 = vmatprep.subr.bf16.mxu0 0
        %3289 = vmatpush1.bf16.msra.mxu0 %v3250
        %3290 = vmatprep.subr.bf16.mxu0 0
        %3291 = vmatpush1.bf16.msra.mxu0 %v3251
        %3292 = vmatprep.subr.bf16.mxu0 0
        %3293 = vmatpush1.bf16.msra.mxu0 %v3252
        %3294 = vmatprep.subr.bf16.mxu0 0
        %3295 = vmatpush1.bf16.msra.mxu0 %v3253
        %3296 = vmatprep.subr.bf16.mxu0 0
        %3297 = vmatpush1.bf16.msra.mxu0 %v3254
        %3298 = vmatprep.subr.bf16.mxu0 0
        %3299 = vmatpush1.bf16.msra.mxu0 %v3255
        %3300 = vmatprep.subr.bf16.mxu0 0
        %3301 = vmatpush1.bf16.msra.mxu0 %v3256
        %3302 = vmatprep.subr.bf16.mxu0 0
        %3303 = vmatpush1.bf16.msra.mxu0 %v3257
        %3304 = vmatprep.subr.bf16.mxu0 0
        %3305 = vmatpush1.bf16.msra.mxu0 %v3258
        %3306 = vmatprep.subr.bf16.mxu0 0
        %3307 = vmatpush1.bf16.msra.mxu0 %v3259
        %3308 = vmatprep.mubr.bf16.mxu0 %v3178
        %3309 = vmatmul.mubr.bf16.gmra.mrb[0].mxu0 %v3177
        %v3310 = vpop.f32.mrb[0].mxu0
        %v3311 = vadd.f32 %v3179, %v3310
        %v3312 = vpop.f32.mrb[0].mxu0
        %v3313 = vpop.f32.mrb[0].mxu0
        %v3314 = vpop.f32.mrb[0].mxu0
        %3315 = vdwg.mxu0
        %v3316 = vmax.f32 %v3311, 0.0
        %v3317 = vpack.c.bf16 %v3316, %v3316
        %v3318 = vld [vmem:[#allocation10] sm:$0xf]
        %v3319 = vld [vmem:[#allocation10 + $0x4] sm:$0xf]
        %v3320 = vld [vmem:[#allocation10 + $0x8] sm:$0xf]
        %v3321 = vld [vmem:[#allocation10 + $0xc] sm:$0xf]
        %v3322 = vld [vmem:[#allocation10 + $0x10] sm:$0xf]
        %v3323 = vld [vmem:[#allocation10 + $0x14] sm:$0xf]
        %v3324 = vld [vmem:[#allocation10 + $0x18] sm:$0xf]
        %v3325 = vld [vmem:[#allocation10 + $0x1c] sm:$0xf]
        %v3326 = vld [vmem:[#allocation10 + $0x20] sm:$0xf]
        %v3327 = vld [vmem:[#allocation10 + $0x24] sm:$0xf]
        %v3328 = vld [vmem:[#allocation10 + $0x28] sm:$0xf]
        %v3329 = vld [vmem:[#allocation10 + $0x2c] sm:$0xf]
        %v3330 = vld [vmem:[#allocation10 + $0x30] sm:$0xf]
        %v3331 = vld [vmem:[#allocation10 + $0x34] sm:$0xf]
        %v3332 = vld [vmem:[#allocation10 + $0x38] sm:$0xf]
        %v3333 = vld [vmem:[#allocation10 + $0x3c] sm:$0xf]
        %v3334 = vld [vmem:[#allocation11 + $0x40] ss:$0 sm:$0xff]
        %v3351 = vunpack.c.l.b16 %v3318
        %v3352 = vunpack.c.l.b16 %v3319
        %v3353 = vunpack.c.l.b16 %v3320
        %v3354 = vunpack.c.l.b16 %v3321
        %v3355 = vunpack.c.l.b16 %v3322
        %v3356 = vunpack.c.l.b16 %v3323
        %v3357 = vunpack.c.l.b16 %v3324
        %v3358 = vunpack.c.l.b16 %v3325
        %v3359 = vunpack.c.l.b16 %v3326
        %v3360 = vunpack.c.l.b16 %v3327
        %v3361 = vunpack.c.l.b16 %v3328
        %v3362 = vunpack.c.l.b16 %v3329
        %v3363 = vunpack.c.l.b16 %v3330
        %v3364 = vunpack.c.l.b16 %v3331
        %v3365 = vunpack.c.l.b16 %v3332
        %v3366 = vunpack.c.l.b16 %v3333
        %v3367 = vpack.c.b16 %v3352, %v3351
        %v3368 = vpack.c.b16 %v3354, %v3353
        %v3369 = vpack.c.b16 %v3356, %v3355
        %v3370 = vpack.c.b16 %v3358, %v3357
        %v3371 = vpack.c.b16 %v3360, %v3359
        %v3372 = vpack.c.b16 %v3362, %v3361
        %v3373 = vpack.c.b16 %v3364, %v3363
        %v3374 = vpack.c.b16 %v3366, %v3365
        %3383 = vmatprep.subr.bf16.mxu0 0
        %3384 = vmatpush1.bf16.msra.mxu0 %v3367
        %3385 = vmatprep.subr.bf16.mxu0 0
        %3386 = vmatpush1.bf16.msra.mxu0 %v3368
        %3387 = vmatprep.subr.bf16.mxu0 0
        %3388 = vmatpush1.bf16.msra.mxu0 %v3369
        %3389 = vmatprep.subr.bf16.mxu0 0
        %3390 = vmatpush1.bf16.msra.mxu0 %v3370
        %3391 = vmatprep.subr.bf16.mxu0 0
        %3392 = vmatpush1.bf16.msra.mxu0 %v3371
        %3393 = vmatprep.subr.bf16.mxu0 0
        %3394 = vmatpush1.bf16.msra.mxu0 %v3372
        %3395 = vmatprep.subr.bf16.mxu0 0
        %3396 = vmatpush1.bf16.msra.mxu0 %v3373
        %3397 = vmatprep.subr.bf16.mxu0 0
        %3398 = vmatpush1.bf16.msra.mxu0 %v3374
        %3399 = vmatprep.subr.bf16.mxu0 0
        %3400 = vmatpush1.bf16.msra.mxu0 0
        %3401 = vmatprep.subr.bf16.mxu0 0
        %3402 = vmatpush1.bf16.msra.mxu0 0
        %3403 = vmatprep.subr.bf16.mxu0 0
        %3404 = vmatpush1.bf16.msra.mxu0 0
        %3405 = vmatprep.subr.bf16.mxu0 0
        %3406 = vmatpush1.bf16.msra.mxu0 0
        %3407 = vmatprep.subr.bf16.mxu0 0
        %3408 = vmatpush1.bf16.msra.mxu0 0
        %3409 = vmatprep.subr.bf16.mxu0 0
        %3410 = vmatpush1.bf16.msra.mxu0 0
        %3411 = vmatprep.subr.bf16.mxu0 0
        %3412 = vmatpush1.bf16.msra.mxu0 0
        %3413 = vmatprep.subr.bf16.mxu0 0
        %3414 = vmatpush1.bf16.msra.mxu0 0
        %3415 = vmatprep.mubr.bf16.mxu0 0
        %3416 = vmatmul.mubr.bf16.gmra.mrb[0].mxu0 %v3317
        %v3417 = vpop.f32.mrb[0].mxu0
        %v3418 = vadd.f32 %v3334, %v3417
        %v3419 = vpop.f32.mrb[0].mxu0
        %v3420 = vpop.f32.mrb[0].mxu0
        %v3421 = vpop.f32.mrb[0].mxu0
        %3422 = vdwg.mxu0
        %3423 = vst [vmem:[%s339] sm:$0xff] %v3418
        %s3424 = sand.u32 %s165, 1
        %s3425 = scalar_lea.sflag [#allocation4], %s3424
        %s3426 = sand.u32 %s165, 1
        %s3427 = smul.addr %s3426, 8
        %s3428 = scalar_lea.vmem [#allocation13], %s3427
        // Predicated region
        $region69: #{tpu_custom_call.1} parent=43 // pred_check
          %p3429 = pneg %p175
        $region70: #{tpu_custom_call.1} parent=43 // pred_check_branch
          %3431 = sbr.rel (%p3429) target = $region72
        $region71: #{tpu_custom_call.1} parent=43 // pred_region
          %s3433 = ssub.s32 128, 128
          %3434 = vsyncadd %s3425, %s3433
          %s3435 = smul.addr %s26, 128
          %s3436 = scalar_lea.hbm %s6, %s3435
          %s3438 = sshll.u32 %s3428, 4
          %s3439 = int_to_ptr.vmem [resolvable:$true] %s3438
          %3441 = dma.vmem_to_hbm [thread:$0]  %s3439, 128, %s3436, %s3425
        $region72: #{tpu_custom_call.1} parent=43 // pred_fallthru
          _
      $region44: #{tpu_custom_call.1} parent=5 // pred_fallthru
        _
      %p3442 = scmp.le.s32.totalorder 2, %s21
      // Predicated region
      $region73: #{tpu_custom_call.1} parent=5 // pred_check
        %p3443 = pneg %p3442
      $region74: #{tpu_custom_call.1} parent=5 // pred_check_branch
        %3445 = sbr.rel (%p3443) target = $region76
      $region75: #{tpu_custom_call.1} parent=5 // pred_region
        %s3446 = ssub.s32 %s21, 2
        // Predicated region
        $region77: #{tpu_custom_call.1} parent=75 // pred_check
          %p3447 = pneg %p181
        $region78: #{tpu_custom_call.1} parent=75 // pred_check_branch
          %3449 = sbr.rel (%p3447) target = $region80
        $region79: #{tpu_custom_call.1} parent=75 // pred_region
          %s3450 = sand.u32 %s166, 1
          %s3451 = scalar_lea.sflag [#allocation4], %s3450
          %s3452 = sand.u32 %s166, 1
          %s3453 = smul.addr %s3452, 8
          %s3454 = scalar_lea.vmem [#allocation13], %s3453
          %3455 = dma.done %s3451, 128
        $region80: #{tpu_custom_call.1} parent=75 // pred_fallthru
          _
      $region76: #{tpu_custom_call.1} parent=5 // pred_fallthru
        _
    $region6: #{tpu_custom_call.1} parent=1 // loop_footer
      %s25 = sadd.s32 1, %s21
    $region7: #{tpu_custom_call.1} parent=1 // loop_footer_branch
      %20 = sbr.rel target = $region3
    $region8: #{tpu_custom_call.1} parent=1 // loop_exit
      _
    %3456 = vsyncpa [#allocation3], 1
    %s3457 = scalar_lea.sflag [#allocation3], 1
    %3458 = vsyncpa %s3457, 1
    %3459 = vsyncpa [#allocation6], 1
    %3460 = vsyncpa [#allocation9], 1
    %3461 = vsyncpa [#allocation12], 1
    %3462 = vsyncpa [#allocation4], 1
    %s3463 = scalar_lea.sflag [#allocation4], 1
    %3464 = vsyncpa %s3463, 1

</llo_original>
